<compile_context>
chip_gen: v6e
topology: v6e:2x2x1
jax: 0.10.0
libtpu: 0.0.40
codegen_flags: <defaults>
</compile_context>

<pallas_src>
import math

import jax
import jax.numpy as jnp
from jax.experimental import pallas as pl
from jax.experimental.pallas import tpu as pltpu

FREQ_DIM = 256          # frequency_embedding_size (fixed by the module)
MAX_PERIOD = 10000.0
LN_EPS = 1e-6           # nn.LayerNorm(..., eps=1e-6, elementwise_affine=False)


def _dit_premix_kernel(t_ref, freqs_ref, w1c_ref, w1s_ref, b1_ref, w2_ref, b2_ref,
                       wa_ref, ba_ref, x_ref, y_ref, c_ref, mod_ref, c_sc, mod_sc):
    hidden = c_sc.shape[-1]
    b = pl.program_id(0)      # batch element
    j = pl.program_id(1)      # token tile

    # Conditioning (timestep embedder + adaLN modulation): computed once per batch
    # element and kept resident in VMEM scratch across its token tiles.
    @pl.when(j == 0)
    def _():
        t = t_ref[b]                                       # scalar timestep from SMEM
        args = t * freqs_ref[...]                          # (1, FREQ_DIM // 2)
        # emb = [cos(args) | sin(args)]; fold the lane concat into a split matmul.
        h = (jnp.dot(jnp.cos(args), w1c_ref[...], preferred_element_type=jnp.float32)
             + jnp.dot(jnp.sin(args), w1s_ref[...], preferred_element_type=jnp.float32)
             + b1_ref[...])
        h = h * jax.nn.sigmoid(h)                          # SiLU
        c = jnp.dot(h, w2_ref[...], preferred_element_type=jnp.float32) + b2_ref[...]
        c_sc[...] = c                                      # (1, H)
        cs = c * jax.nn.sigmoid(c)                         # adaLN_modulation = Linear(SiLU(c))
        mod_sc[...] = (jnp.dot(cs, wa_ref[...], preferred_element_type=jnp.float32)
                       + ba_ref[...])                      # (1, 6H)
        c_ref[0] = c_sc[...]
        mod_ref[0] = mod_sc[...]

    # Per-token work: LayerNorm (no affine) + modulate with shift_msa / scale_msa.
    x = x_ref[...]                                         # (1, token_tile, H)
    mu = jnp.mean(x, axis=-1, keepdims=True)
    xc = x - mu
    var = jnp.mean(xc * xc, axis=-1, keepdims=True)
    xn = xc * jax.lax.rsqrt(var + LN_EPS)
    shift = mod_sc[:, 0:hidden]                            # (1, H), broadcast over tokens
    scale = mod_sc[:, hidden:2 * hidden]
    y_ref[...] = (xn * (1.0 + scale) + shift).astype(y_ref.dtype)


def dit_premix(t, x, w1, b1, w2, b2, w_ada, b_ada, *, token_tile=256):
    """Fused DiT_3D conditioning + pre-attention modulate.

    t:     (N,)        float timesteps
    x:     (N, S, H)   tokens (patch-embedded + pos-embedded), f32
    w1:    (FREQ, H)   t_embedder.mlp[0] weight, stored (in, out)
    b1:    (H,)
    w2:    (H, H)      t_embedder.mlp[2] weight, stored (in, out)
    b2:    (H,)
    w_ada: (H, 6H)     DiTBlock.adaLN_modulation[1] weight, stored (in, out)
    b_ada: (6H,)

    Returns:
      y   (N, S, H)  modulate(LayerNorm(x), shift_msa, scale_msa)  -> attention input
      c   (N, H)     TimestepEmbedder(t)                           -> reused by all blocks
      mod (N, 6H)    [shift_msa|scale_msa|gate_msa|shift_mlp|scale_mlp|gate_mlp]
    """
    n, s, hidden = x.shape
    half = FREQ_DIM // 2
    # Lane-dense hidden (review item); real DiT hidden sizes (384/768/1152) satisfy this.
    assert hidden % 128 == 0, "hidden_size must be a multiple of 128 (pad in caller otherwise)"
    assert w1.shape == (FREQ_DIM, hidden) and w2.shape == (hidden, hidden)
    assert w_ada.shape == (hidden, 6 * hidden)

    # Host-side constant frequency table (hoisted out of the kernel).
    freqs = jnp.exp(
        -math.log(MAX_PERIOD) * jnp.arange(half, dtype=jnp.float32) / half
    ).reshape(1, half)

    # Pad the token axis so every tile is full (sliced off afterwards).
    token_tile = int(min(token_tile, pl.cdiv(s, 8) * 8))
    assert token_tile % 8 == 0
    s_pad = pl.cdiv(s, token_tile) * token_tile
    if s_pad != s:
        x = jnp.pad(x, ((0, 0), (0, s_pad - s), (0, 0)))

    t_f32 = t.astype(jnp.float32).reshape(n)
    w1c, w1s = w1[:half, :], w1[half:, :]          # split matmul: cos half / sin half
    b1r = b1.reshape(1, hidden)
    b2r = b2.reshape(1, hidden)
    bar = b_ada.reshape(1, 6 * hidden)

    grid = (n, s_pad // token_tile)
    const = lambda shape: pl.BlockSpec(shape, lambda b, j: (0, 0))   # VMEM-resident weights

    grid_spec = pltpu.PrefetchScalarGridSpec(
        num_scalar_prefetch=0,
        grid=grid,
        in_specs=[
            pl.BlockSpec(memory_space=pltpu.MemorySpace.SMEM),               # t (N,)
            const((1, half)),                                                # freqs
            const((half, hidden)),                                           # w1 cos half
            const((half, hidden)),                                           # w1 sin half
            const((1, hidden)),                                              # b1
            const((hidden, hidden)),                                         # w2
            const((1, hidden)),                                              # b2
            const((hidden, 6 * hidden)),                                     # w_ada
            const((1, 6 * hidden)),                                          # b_ada
            pl.BlockSpec((1, token_tile, hidden), lambda b, j: (b, j, 0)),   # x
        ],
        out_specs=(
            pl.BlockSpec((1, token_tile, hidden), lambda b, j: (b, j, 0)),   # y
            pl.BlockSpec((1, 1, hidden), lambda b, j: (b, 0, 0)),            # c
            pl.BlockSpec((1, 1, 6 * hidden), lambda b, j: (b, 0, 0)),        # mod
        ),
        scratch_shapes=[
            pltpu.VMEM((1, hidden), jnp.float32),          # c, resident across token tiles
            pltpu.VMEM((1, 6 * hidden), jnp.float32),      # adaLN chunks, resident
        ],
    )

    y, c, mod = pl.pallas_call(
        _dit_premix_kernel,
        out_shape=(
            jax.ShapeDtypeStruct((n, s_pad, hidden), jnp.float32),
            jax.ShapeDtypeStruct((n, 1, hidden), jnp.float32),
            jax.ShapeDtypeStruct((n, 1, 6 * hidden), jnp.float32),
        ),
        grid_spec=grid_spec,
        compiler_params=pltpu.CompilerParams(
            dimension_semantics=("parallel", "arbitrary"),   # batch across TCs (v7x), tokens serial
            vmem_limit_bytes=32 * 1024 * 1024,
        ),
    )(t_f32, freqs, w1c, w1s, b1r, w2, b2r, w_ada, bar, x)

    return y[:, :s, :], c[:, 0, :], mod[:, 0, :]


def _reference(t, x, w1, b1, w2, b2, w_ada, b_ada):
    """Pure-JAX reference matching the PyTorch forward semantics."""
    half = FREQ_DIM // 2
    hidden = x.shape[-1]
    freqs = jnp.exp(-math.log(MAX_PERIOD) * jnp.arange(half, dtype=jnp.float32) / half)
    args = t.astype(jnp.float32)[:, None] * freqs[None]
    emb = jnp.concatenate([jnp.cos(args), jnp.sin(args)], axis=-1)
    h = emb @ w1 + b1
    h = h * jax.nn.sigmoid(h)
    c = h @ w2 + b2
    cs = c * jax.nn.sigmoid(c)
    mod = cs @ w_ada + b_ada
    shift, scale = mod[:, :hidden], mod[:, hidden:2 * hidden]
    mu = x.mean(axis=-1, keepdims=True)
    var = jnp.mean((x - mu) ** 2, axis=-1, keepdims=True)
    xn = (x - mu) * jax.lax.rsqrt(var + LN_EPS)
    y = xn * (1.0 + scale[:, None, :]) + shift[:, None, :]
    return y, c, mod


if __name__ == "__main__":
    key = jax.random.PRNGKey(0)
    kt, kx, kw1, kb1, kw2, kb2, kwa, kba = jax.random.split(key, 8)

    # Small stand-in shapes: batch 2, 512 tokens (e.g. patch grid 8x8x8), hidden 384
    # (lane-dense; real DiT hidden = 1152 = 9 * 128 works identically).
    N, S, HIDDEN = 2, 512, 384
    t = jax.random.uniform(kt, (N,), jnp.float32, 0.0, 1000.0)
    x = jax.random.normal(kx, (N, S, HIDDEN), jnp.float32)

    # Parameters stored as (in, out) for the kernel's x @ W convention.
    w1 = jax.random.normal(kw1, (FREQ_DIM, HIDDEN), jnp.float32) * 0.02
    b1 = jax.random.normal(kb1, (HIDDEN,), jnp.float32) * 0.02
    w2 = jax.random.normal(kw2, (HIDDEN, HIDDEN), jnp.float32) * 0.02
    b2 = jax.random.normal(kb2, (HIDDEN,), jnp.float32) * 0.02
    # DiT initializes adaLN weights to zero (adaLN-Zero); use random values here so the
    # numerical check is non-trivial.
    w_ada = jax.random.normal(kwa, (HIDDEN, 6 * HIDDEN), jnp.float32) * 0.02
    b_ada = jax.random.normal(kba, (6 * HIDDEN,), jnp.float32) * 0.02

    y, c, mod = dit_premix(t, x, w1, b1, w2, b2, w_ada, b_ada, token_tile=256)
    jax.block_until_ready((y, c, mod))

    y_exp, c_exp, mod_exp = _reference(t, x, w1, b1, w2, b2, w_ada, b_ada)
    assert y.shape == (N, S, HIDDEN)
    assert c.shape == (N, HIDDEN)
    assert mod.shape == (N, 6 * HIDDEN)
    assert jnp.allclose(c, c_exp, atol=2e-3, rtol=2e-3), "c mismatch vs reference"
    assert jnp.allclose(mod, mod_exp, atol=2e-3, rtol=2e-3), "mod mismatch vs reference"
    assert jnp.allclose(y, y_exp, atol=2e-3, rtol=2e-3), "y mismatch vs reference"
    print("KERNEL_OK")
</pallas_src>

<mosaic_0001>
module attributes {stable_mosaic.version = 11 : i64} {
  func.func @_dit_premix_kernel(%arg0: i32, %arg1: i32, %arg2: memref<2xf32, #tpu.memory_space<smem>>, %arg3: memref<1x128xf32, #tpu.memory_space<vmem>>, %arg4: memref<128x384xf32, #tpu.memory_space<vmem>>, %arg5: memref<128x384xf32, #tpu.memory_space<vmem>>, %arg6: memref<1x384xf32, #tpu.memory_space<vmem>>, %arg7: memref<384x384xf32, #tpu.memory_space<vmem>>, %arg8: memref<1x384xf32, #tpu.memory_space<vmem>>, %arg9: memref<384x2304xf32, #tpu.memory_space<vmem>>, %arg10: memref<1x2304xf32, #tpu.memory_space<vmem>>, %arg11: memref<1x256x384xf32, #tpu.memory_space<vmem>>, %arg12: memref<1x256x384xf32, #tpu.memory_space<vmem>>, %arg13: memref<1x1x384xf32, #tpu.memory_space<vmem>>, %arg14: memref<1x1x2304xf32, #tpu.memory_space<vmem>>, %arg15: memref<1x384xf32, #tpu.memory_space<vmem>>, %arg16: memref<1x2304xf32, #tpu.memory_space<vmem>>) attributes {dimension_semantics = [#tpu.dimension_semantics<parallel>, #tpu.dimension_semantics<arbitrary>], iteration_bounds = array<i64: 2, 2>, scalar_prefetch = 0 : i64, scratch_operands = 2 : i64, tpu.core_type = #tpu.core_type<tc>, window_params = [{transform_indices = @transform_0, window_bounds = array<i64: 2>}, {pipeline_mode = #tpu.pipeline_mode<synchronous>, transform_indices = @transform_1, window_bounds = array<i64: 1, 128>}, {pipeline_mode = #tpu.pipeline_mode<synchronous>, transform_indices = @transform_2, window_bounds = array<i64: 128, 384>}, {pipeline_mode = #tpu.pipeline_mode<synchronous>, transform_indices = @transform_3, window_bounds = array<i64: 128, 384>}, {pipeline_mode = #tpu.pipeline_mode<synchronous>, transform_indices = @transform_4, window_bounds = array<i64: 1, 384>}, {pipeline_mode = #tpu.pipeline_mode<synchronous>, transform_indices = @transform_5, window_bounds = array<i64: 384, 384>}, {pipeline_mode = #tpu.pipeline_mode<synchronous>, transform_indices = @transform_6, window_bounds = array<i64: 1, 384>}, {pipeline_mode = #tpu.pipeline_mode<synchronous>, transform_indices = @transform_7, window_bounds = array<i64: 384, 2304>}, {pipeline_mode = #tpu.pipeline_mode<synchronous>, transform_indices = @transform_8, window_bounds = array<i64: 1, 2304>}, {transform_indices = @transform_9, window_bounds = array<i64: 1, 256, 384>}, {transform_indices = @transform_10, window_bounds = array<i64: 1, 256, 384>}, {transform_indices = @transform_11, window_bounds = array<i64: 1, 1, 384>}, {transform_indices = @transform_12, window_bounds = array<i64: 1, 1, 2304>}]} {
    %c0_i32 = arith.constant 0 : i32
    %0 = arith.cmpi eq, %arg1, %c0_i32 : i32
    %1 = arith.extui %0 : i1 to i32
    %c0_i32_0 = arith.constant 0 : i32
    %2 = arith.cmpi ne, %1, %c0_i32_0 : i32
    scf.if %2 {
      %31 = arith.index_cast %arg0 : i32 to index
      %32 = memref.load %arg2[%31] : memref<2xf32, #tpu.memory_space<smem>>
      %c0_14 = arith.constant 0 : index
      %c0_15 = arith.constant 0 : index
      %33 = vector.load %arg3[%c0_14, %c0_15] : memref<1x128xf32, #tpu.memory_space<vmem>>, vector<1x128xf32>
      %34 = vector.broadcast %32 : f32 to vector<1x128xf32>
      %35 = arith.mulf %34, %33 : vector<1x128xf32>
      %36 = math.cos %35 : vector<1x128xf32>
      %c0_16 = arith.constant 0 : index
      %c0_17 = arith.constant 0 : index
      %37 = vector.load %arg4[%c0_16, %c0_17] : memref<128x384xf32, #tpu.memory_space<vmem>>, vector<128x384xf32>
      %cst_18 = arith.constant dense<0.000000e+00> : vector<1x384xf32>
      %38 = tpu.matmul %36, %37, %cst_18 {dimension_numbers = #tpu.dot_dimension_numbers<[1], [0], [0], [1], [0, 0, 1, 1], [], []>} : vector<1x128xf32>, vector<128x384xf32>, vector<1x384xf32> -> vector<1x384xf32>
      %39 = math.sin %35 : vector<1x128xf32>
      %c0_19 = arith.constant 0 : index
      %c0_20 = arith.constant 0 : index
      %40 = vector.load %arg5[%c0_19, %c0_20] : memref<128x384xf32, #tpu.memory_space<vmem>>, vector<128x384xf32>
      %cst_21 = arith.constant dense<0.000000e+00> : vector<1x384xf32>
      %41 = tpu.matmul %39, %40, %cst_21 {dimension_numbers = #tpu.dot_dimension_numbers<[1], [0], [0], [1], [0, 0, 1, 1], [], []>} : vector<1x128xf32>, vector<128x384xf32>, vector<1x384xf32> -> vector<1x384xf32>
      %42 = arith.addf %38, %41 : vector<1x384xf32>
      %c0_22 = arith.constant 0 : index
      %c0_23 = arith.constant 0 : index
      %43 = vector.load %arg6[%c0_22, %c0_23] : memref<1x384xf32, #tpu.memory_space<vmem>>, vector<1x384xf32>
      %44 = arith.addf %42, %43 : vector<1x384xf32>
      %45 = arith.negf %44 : vector<1x384xf32>
      %46 = math.exp %45 : vector<1x384xf32>
      %cst_24 = arith.constant 1.000000e+00 : f32
      %47 = vector.broadcast %cst_24 : f32 to vector<1x384xf32>
      %48 = arith.addf %47, %46 : vector<1x384xf32>
      %49 = arith.divf %47, %48 : vector<1x384xf32>
      %50 = arith.mulf %44, %49 : vector<1x384xf32>
      %c0_25 = arith.constant 0 : index
      %c0_26 = arith.constant 0 : index
      %51 = vector.load %arg7[%c0_25, %c0_26] : memref<384x384xf32, #tpu.memory_space<vmem>>, vector<384x384xf32>
      %cst_27 = arith.constant dense<0.000000e+00> : vector<1x384xf32>
      %52 = tpu.matmul %50, %51, %cst_27 {dimension_numbers = #tpu.dot_dimension_numbers<[1], [0], [0], [1], [0, 0, 1, 1], [], []>} : vector<1x384xf32>, vector<384x384xf32>, vector<1x384xf32> -> vector<1x384xf32>
      %c0_28 = arith.constant 0 : index
      %c0_29 = arith.constant 0 : index
      %53 = vector.load %arg8[%c0_28, %c0_29] : memref<1x384xf32, #tpu.memory_space<vmem>>, vector<1x384xf32>
      %54 = arith.addf %52, %53 : vector<1x384xf32>
      %c0_30 = arith.constant 0 : index
      %c0_31 = arith.constant 0 : index
      %55 = vector.load %arg15[%c0_30, %c0_31] : memref<1x384xf32, #tpu.memory_space<vmem>>, vector<1x384xf32>
      tpu.vector_store %arg15[%c0_30, %c0_31], %54 {strides = array<i32>} : memref<1x384xf32, #tpu.memory_space<vmem>>, vector<1x384xf32>,
      %56 = arith.negf %54 : vector<1x384xf32>
      %57 = math.exp %56 : vector<1x384xf32>
      %cst_32 = arith.constant 1.000000e+00 : f32
      %58 = vector.broadcast %cst_32 : f32 to vector<1x384xf32>
      %59 = arith.addf %58, %57 : vector<1x384xf32>
      %60 = arith.divf %58, %59 : vector<1x384xf32>
      %61 = arith.mulf %54, %60 : vector<1x384xf32>
      %c0_33 = arith.constant 0 : index
      %c0_34 = arith.constant 0 : index
      %62 = vector.load %arg9[%c0_33, %c0_34] : memref<384x2304xf32, #tpu.memory_space<vmem>>, vector<384x2304xf32>
      %cst_35 = arith.constant dense<0.000000e+00> : vector<1x2304xf32>
      %63 = tpu.matmul %61, %62, %cst_35 {dimension_numbers = #tpu.dot_dimension_numbers<[1], [0], [0], [1], [0, 0, 1, 1], [], []>} : vector<1x384xf32>, vector<384x2304xf32>, vector<1x2304xf32> -> vector<1x2304xf32>
      %c0_36 = arith.constant 0 : index
      %c0_37 = arith.constant 0 : index
      %64 = vector.load %arg10[%c0_36, %c0_37] : memref<1x2304xf32, #tpu.memory_space<vmem>>, vector<1x2304xf32>
      %65 = arith.addf %63, %64 : vector<1x2304xf32>
      %c0_38 = arith.constant 0 : index
      %c0_39 = arith.constant 0 : index
      %66 = vector.load %arg16[%c0_38, %c0_39] : memref<1x2304xf32, #tpu.memory_space<vmem>>, vector<1x2304xf32>
      tpu.vector_store %arg16[%c0_38, %c0_39], %65 {strides = array<i32>} : memref<1x2304xf32, #tpu.memory_space<vmem>>, vector<1x2304xf32>,
      %c0_40 = arith.constant 0 : index
      %c0_41 = arith.constant 0 : index
      %67 = vector.load %arg15[%c0_40, %c0_41] : memref<1x384xf32, #tpu.memory_space<vmem>>, vector<1x384xf32>
      %c0_42 = arith.constant 0 : index
      %c0_43 = arith.constant 0 : index
      %c0_44 = arith.constant 0 : index
      %68 = vector.load %arg13[%c0_42, %c0_43, %c0_44] : memref<1x1x384xf32, #tpu.memory_space<vmem>>, vector<1x1x384xf32>
      %69 = vector.shape_cast %68 : vector<1x1x384xf32> to vector<1x384xf32>
      %70 = vector.shape_cast %67 : vector<1x384xf32> to vector<1x1x384xf32>
      tpu.vector_store %arg13[%c0_42, %c0_43, %c0_44], %70 {strides = array<i32>} : memref<1x1x384xf32, #tpu.memory_space<vmem>>, vector<1x1x384xf32>,
      %c0_45 = arith.constant 0 : index
      %c0_46 = arith.constant 0 : index
      %71 = vector.load %arg16[%c0_45, %c0_46] : memref<1x2304xf32, #tpu.memory_space<vmem>>, vector<1x2304xf32>
      %c0_47 = arith.constant 0 : index
      %c0_48 = arith.constant 0 : index
      %c0_49 = arith.constant 0 : index
      %72 = vector.load %arg14[%c0_47, %c0_48, %c0_49] : memref<1x1x2304xf32, #tpu.memory_space<vmem>>, vector<1x1x2304xf32>
      %73 = vector.shape_cast %72 : vector<1x1x2304xf32> to vector<1x2304xf32>
      %74 = vector.shape_cast %71 : vector<1x2304xf32> to vector<1x1x2304xf32>
      tpu.vector_store %arg14[%c0_47, %c0_48, %c0_49], %74 {strides = array<i32>} : memref<1x1x2304xf32, #tpu.memory_space<vmem>>, vector<1x1x2304xf32>,
    } else {
    }
    %c0 = arith.constant 0 : index
    %c0_1 = arith.constant 0 : index
    %c0_2 = arith.constant 0 : index
    %3 = vector.load %arg11[%c0, %c0_1, %c0_2] : memref<1x256x384xf32, #tpu.memory_space<vmem>>, vector<1x256x384xf32>
    %cst = arith.constant dense<0.000000e+00> : vector<1x256xf32>
    %4 = vector.multi_reduction <add>, %3, %cst [2] : vector<1x256x384xf32> to vector<1x256xf32>
    %5 = vector.shape_cast %4 : vector<1x256xf32> to vector<1x256x1xf32>
    %cst_3 = arith.constant 3.840000e+02 : f32
    %6 = vector.broadcast %cst_3 : f32 to vector<1x256x1xf32>
    %7 = arith.divf %5, %6 : vector<1x256x1xf32>
    %8 = vector.broadcast %7 : vector<1x256x1xf32> to vector<1x256x384xf32>
    %9 = arith.subf %3, %8 : vector<1x256x384xf32>
    %10 = arith.mulf %9, %9 : vector<1x256x384xf32>
    %cst_4 = arith.constant dense<0.000000e+00> : vector<1x256xf32>
    %11 = vector.multi_reduction <add>, %10, %cst_4 [2] : vector<1x256x384xf32> to vector<1x256xf32>
    %12 = vector.shape_cast %11 : vector<1x256xf32> to vector<1x256x1xf32>
    %cst_5 = arith.constant 3.840000e+02 : f32
    %13 = vector.broadcast %cst_5 : f32 to vector<1x256x1xf32>
    %14 = arith.divf %12, %13 : vector<1x256x1xf32>
    %cst_6 = arith.constant 9.99999997E-7 : f32
    %15 = vector.broadcast %cst_6 : f32 to vector<1x256x1xf32>
    %16 = arith.addf %14, %15 : vector<1x256x1xf32>
    %17 = math.rsqrt %16 : vector<1x256x1xf32>
    %18 = vector.broadcast %17 : vector<1x256x1xf32> to vector<1x256x384xf32>
    %19 = arith.mulf %9, %18 : vector<1x256x384xf32>
    %c0_7 = arith.constant 0 : index
    %c0_8 = arith.constant 0 : index
    %20 = vector.load %arg16[%c0_7, %c0_8] : memref<1x2304xf32, #tpu.memory_space<vmem>>, vector<1x384xf32>
    %c0_9 = arith.constant 0 : index
    %c384 = arith.constant 384 : index
    %21 = vector.load %arg16[%c0_9, %c384] : memref<1x2304xf32, #tpu.memory_space<vmem>>, vector<1x384xf32>
    %cst_10 = arith.constant 1.000000e+00 : f32
    %22 = vector.broadcast %cst_10 : f32 to vector<1x384xf32>
    %23 = arith.addf %22, %21 : vector<1x384xf32>
    %24 = vector.shape_cast %23 : vector<1x384xf32> to vector<1x1x384xf32>
    %25 = vector.broadcast %24 : vector<1x1x384xf32> to vector<1x256x384xf32>
    %26 = arith.mulf %19, %25 : vector<1x256x384xf32>
    %27 = vector.shape_cast %20 : vector<1x384xf32> to vector<1x1x384xf32>
    %28 = vector.broadcast %27 : vector<1x1x384xf32> to vector<1x256x384xf32>
    %29 = arith.addf %26, %28 : vector<1x256x384xf32>
    %c0_11 = arith.constant 0 : index
    %c0_12 = arith.constant 0 : index
    %c0_13 = arith.constant 0 : index
    %30 = vector.load %arg12[%c0_11, %c0_12, %c0_13] : memref<1x256x384xf32, #tpu.memory_space<vmem>>, vector<1x256x384xf32>
    tpu.vector_store %arg12[%c0_11, %c0_12, %c0_13], %29 {strides = array<i32>} : memref<1x256x384xf32, #tpu.memory_space<vmem>>, vector<1x256x384xf32>,
    return
  }
  func.func @transform_0(%arg0: i32, %arg1: i32) -> i32 {
    %c0_i32 = arith.constant 0 : i32
    %c0_i32_0 = arith.constant 0 : i32
    return %c0_i32 : i32
  }
  func.func @transform_1(%arg0: i32, %arg1: i32) -> (i32, i32) {
    %c0_i32 = arith.constant 0 : i32
    %c0_i32_0 = arith.constant 0 : i32
    %c0_i32_1 = arith.constant 0 : i32
    return %c0_i32, %c0_i32_0 : i32, i32
  }
  func.func @transform_2(%arg0: i32, %arg1: i32) -> (i32, i32) {
    %c0_i32 = arith.constant 0 : i32
    %c0_i32_0 = arith.constant 0 : i32
    %c0_i32_1 = arith.constant 0 : i32
    return %c0_i32, %c0_i32_0 : i32, i32
  }
  func.func @transform_3(%arg0: i32, %arg1: i32) -> (i32, i32) {
    %c0_i32 = arith.constant 0 : i32
    %c0_i32_0 = arith.constant 0 : i32
    %c0_i32_1 = arith.constant 0 : i32
    return %c0_i32, %c0_i32_0 : i32, i32
  }
  func.func @transform_4(%arg0: i32, %arg1: i32) -> (i32, i32) {
    %c0_i32 = arith.constant 0 : i32
    %c0_i32_0 = arith.constant 0 : i32
    %c0_i32_1 = arith.constant 0 : i32
    return %c0_i32, %c0_i32_0 : i32, i32
  }
  func.func @transform_5(%arg0: i32, %arg1: i32) -> (i32, i32) {
    %c0_i32 = arith.constant 0 : i32
    %c0_i32_0 = arith.constant 0 : i32
    %c0_i32_1 = arith.constant 0 : i32
    return %c0_i32, %c0_i32_0 : i32, i32
  }
  func.func @transform_6(%arg0: i32, %arg1: i32) -> (i32, i32) {
    %c0_i32 = arith.constant 0 : i32
    %c0_i32_0 = arith.constant 0 : i32
    %c0_i32_1 = arith.constant 0 : i32
    return %c0_i32, %c0_i32_0 : i32, i32
  }
  func.func @transform_7(%arg0: i32, %arg1: i32) -> (i32, i32) {
    %c0_i32 = arith.constant 0 : i32
    %c0_i32_0 = arith.constant 0 : i32
    %c0_i32_1 = arith.constant 0 : i32
    return %c0_i32, %c0_i32_0 : i32, i32
  }
  func.func @transform_8(%arg0: i32, %arg1: i32) -> (i32, i32) {
    %c0_i32 = arith.constant 0 : i32
    %c0_i32_0 = arith.constant 0 : i32
    %c0_i32_1 = arith.constant 0 : i32
    return %c0_i32, %c0_i32_0 : i32, i32
  }
  func.func @transform_9(%arg0: i32, %arg1: i32) -> (i32, i32, i32) {
    %c0_i32 = arith.constant 0 : i32
    %c0_i32_0 = arith.constant 0 : i32
    return %arg0, %arg1, %c0_i32 : i32, i32, i32
  }
  func.func @transform_10(%arg0: i32, %arg1: i32) -> (i32, i32, i32) {
    %c0_i32 = arith.constant 0 : i32
    %c0_i32_0 = arith.constant 0 : i32
    return %arg0, %arg1, %c0_i32 : i32, i32, i32
  }
  func.func @transform_11(%arg0: i32, %arg1: i32) -> (i32, i32, i32) {
    %c0_i32 = arith.constant 0 : i32
    %c0_i32_0 = arith.constant 0 : i32
    %c0_i32_1 = arith.constant 0 : i32
    return %arg0, %c0_i32, %c0_i32_0 : i32, i32, i32
  }
  func.func @transform_12(%arg0: i32, %arg1: i32) -> (i32, i32, i32) {
    %c0_i32 = arith.constant 0 : i32
    %c0_i32_0 = arith.constant 0 : i32
    %c0_i32_1 = arith.constant 0 : i32
    return %arg0, %c0_i32, %c0_i32_0 : i32, i32, i32
  }
}

</mosaic_0001>

<llo_original>
// kernel: tpu_custom_call.1
$region0: #{tpu_custom_call.1}
  #allocation0 [shape = 'u32[]', space=smem, size = 0x4, offset = 0x4, fixed_abs, tag = 'smem constant byte address 0x4 - core index']
  #allocation1 [shape = 'u32[144,128]{1,0:T(1,128)}', space=vmem, size = 0x12000, scoped, tag = 'internal scratch']
  #allocation2 [shape = 'f32[1,384]{1,0:T(1,128)}', space=vmem, size = 0x600, scoped, tag = 'scratch operand']
  #allocation3 [shape = 'f32[1,2304]{1,0:T(1,128)}', space=vmem, size = 0x2400, scoped, tag = 'scratch operand']
  %s0 = inlined_call_operand.hbm [shape: f32[2], index: 0, kind: input, shape index: {}]
  %s1 = inlined_call_operand.hbm [shape: f32[1,128], index: 1, kind: input, shape index: {}]
  %s2 = inlined_call_operand.hbm [shape: f32[128,384], index: 2, kind: input, shape index: {}]
  %s3 = inlined_call_operand.hbm [shape: f32[128,384], index: 3, kind: input, shape index: {}]
  %s4 = inlined_call_operand.hbm [shape: f32[1,384], index: 4, kind: input, shape index: {}]
  %s5 = inlined_call_operand.hbm [shape: f32[384,384], index: 5, kind: input, shape index: {}]
  %s6 = inlined_call_operand.hbm [shape: f32[1,384], index: 6, kind: input, shape index: {}]
  %s7 = inlined_call_operand.hbm [shape: f32[384,2304], index: 7, kind: input, shape index: {}]
  %s8 = inlined_call_operand.hbm [shape: f32[1,2304], index: 8, kind: input, shape index: {}]
  %s9 = inlined_call_operand.hbm [shape: f32[2,512,384], index: 9, kind: input, shape index: {}]
  %s10 = inlined_call_operand.hbm [shape: f32[2,512,384], index: 10, kind: output, shape index: {0}]
  %s11 = inlined_call_operand.hbm [shape: f32[2,1,384], index: 11, kind: output, shape index: {1}]
  %s12 = inlined_call_operand.hbm [shape: f32[2,1,2304], index: 12, kind: output, shape index: {2}]
  %13 = xla_tuple %s10, %s11, %s12
  %s14 = sld [smem:[#allocation0]]
  $region133: #{tpu_custom_call.1} parent=0
    _
  %s16 = ssub.s32 1, %s14
  %s17 = scalar_select 0, %s16, %s14
  $region1: #{tpu_custom_call.1} parent=0
    #allocation4 [shape = 'u8[512]{0}', space=smem, size = 0x200, scoped, tag = 'input window, operand 0, single buffered']
    #allocation5 [shape = 's32[2]{0}', space=sflag, size = 0x8, scoped, tag = 'scoped memory for tpu_custom_call.1']
    #allocation6 [shape = 's32[2]{0}', space=sflag, size = 0x8, scoped, tag = 'scoped memory for tpu_custom_call.1']
    #allocation7 [shape = 's32[2]{0}', space=sflag, size = 0x8, scoped, tag = 'scoped memory for tpu_custom_call.1']
    #allocation8 [shape = 'u8[512]{0}', space=vmem, size = 0x400, scoped, tag = 'input window, operand 1, single buffered']
    #allocation9 [shape = 'u8[196608]{0}', space=vmem, size = 0x30000, scoped, tag = 'input window, operand 2, single buffered']
    #allocation10 [shape = 's32[1]{0}', space=sflag, size = 0x4, scoped, tag = 'scoped memory for tpu_custom_call.1']
    #allocation11 [shape = 'u8[196608]{0}', space=vmem, size = 0x30000, scoped, tag = 'input window, operand 3, single buffered']
    #allocation12 [shape = 'u8[1536]{0}', space=vmem, size = 0x800, scoped, tag = 'input window, operand 4, single buffered']
    #allocation13 [shape = 's32[1]{0}', space=sflag, size = 0x4, scoped, tag = 'scoped memory for tpu_custom_call.1']
    #allocation14 [shape = 'u8[589824]{0}', space=vmem, size = 0x90000, scoped, tag = 'input window, operand 5, single buffered']
    #allocation15 [shape = 'u8[1536]{0}', space=vmem, size = 0x800, scoped, tag = 'input window, operand 6, single buffered']
    #allocation16 [shape = 's32[1]{0}', space=sflag, size = 0x4, scoped, tag = 'scoped memory for tpu_custom_call.1']
    #allocation17 [shape = 'u8[3538944]{0}', space=vmem, size = 0x360000, scoped, tag = 'input window, operand 7, single buffered']
    #allocation18 [shape = 'u8[9216]{0}', space=vmem, size = 0x2400, scoped, tag = 'input window, operand 8, single buffered']
    #allocation19 [shape = 's32[1]{0}', space=sflag, size = 0x4, scoped, tag = 'scoped memory for tpu_custom_call.1']
    #allocation20 [shape = 'u8[786432]{0}', space=vmem, size = 0xc0000, scoped, tag = 'input window, operand 9']
    #allocation21 [shape = 'u8[786432]{0}', space=vmem, size = 0xc0000, scoped, tag = 'output window, operand 0']
    #allocation22 [shape = 'u8[3072]{0}', space=vmem, size = 0xc00, scoped, tag = 'output window, operand 1']
    #allocation23 [shape = 's32[2]{0}', space=sflag, size = 0x8, scoped, tag = 'scoped memory for tpu_custom_call.1']
    #allocation24 [shape = 'u8[18432]{0}', space=vmem, size = 0x4800, scoped, tag = 'output window, operand 2']
    %18 = vsyncpa [#allocation7], 0
    %19 = vsyncpa [#allocation5], 0
    %20 = vsyncpa [#allocation10], 0
    %21 = vsyncpa [#allocation13], 0
    %22 = vsyncpa [#allocation16], 0
    %23 = vsyncpa [#allocation19], 0
    %24 = vsyncpa [#allocation6], 0
    %s25 = scalar_lea.sflag [#allocation6], 1
    %26 = vsyncpa %s25, 0
    %27 = vsyncpa [#allocation23], 0
    %s28 = scalar_lea.sflag [#allocation23], 1
    %29 = vsyncpa %s28, 0
    loop: start=0, step=1, limit=6
    $region2: #{tpu_custom_call.1} parent=1 // loop_pre_header
      _
    $region3: #{tpu_custom_call.1} parent=1 // loop_header
      %s31 = sphi 0, %s35
      %p32 = scmp.ge.s32.totalorder %s31, 6
      %s38 = sphi 0, %s50
      %s39 = sphi 0, %s46
      %s40 = sphi 0, %s38
      %s41 = sphi 0, %s39
      %s42 = sphi 0, %s40
      %s43 = sphi 0, %s41
      %s51 = sphi 0, %s51
      %s53 = sphi 0, %s51
      %s54 = sphi 0, %s53
      %s68 = sphi 0, %s54
      %s72 = sphi 0, %s72
      %s74 = sphi 0, %s72
      %s75 = sphi 0, %s74
      %s89 = sphi 0, %s75
      %s93 = sphi 0, %s93
      %s95 = sphi 0, %s93
      %s96 = sphi 0, %s95
      %s110 = sphi 0, %s96
      %s114 = sphi 0, %s114
      %s116 = sphi 0, %s114
      %s117 = sphi 0, %s116
      %s131 = sphi 0, %s117
      %s135 = sphi 0, %s135
      %s137 = sphi 0, %s135
      %s138 = sphi 0, %s137
      %s152 = sphi 0, %s138
      %s156 = sphi 0, %s156
      %s158 = sphi 0, %s156
      %s159 = sphi 0, %s158
      %s173 = sphi 0, %s159
      %s177 = sphi 0, %s177
      %s179 = sphi 0, %s177
      %s180 = sphi 0, %s179
      %s194 = sphi 0, %s180
      %s198 = sphi 0, %s198
      %s200 = sphi 0, %s198
      %s201 = sphi 0, %s200
      %s215 = sphi 0, %s201
      %s219 = sphi 0, %s219
      %s221 = sphi 0, %s219
      %s222 = sphi 0, %s221
      %s236 = sphi 0, %s222
      %s244 = sphi 0, %s246
      %s247 = sphi 0, %s244
      %s248 = sphi 0, %s247
      %s264 = sphi 0, %s248
      %s272 = sphi 0, %s274
      %s275 = sphi 0, %s272
      %s276 = sphi 0, %s275
      %s292 = sphi 0, %s276
      %s298 = sphi 0, %s300
      %s301 = sphi 0, %s298
      %s302 = sphi 0, %s301
      %s318 = sphi 0, %s302
      %s324 = sphi 0, %s326
      %s327 = sphi 0, %s324
      %s328 = sphi 0, %s327
      %s344 = sphi 0, %s328
    $region4: #{tpu_custom_call.1} parent=1 // loop_header_branch
      %34 = sbr.rel (%p32) target = $region8
    $region5: #{tpu_custom_call.1} parent=1 // loop_body
      %s36 = ssub.s32 %s31, 1
      %s37 = ssub.s32 %s31, 2
      %s44 = sadd.s32 1, %s39
      %p45 = scmp.ge.s32.totalorder %s44, 2
      %s46 = scalar_select %p45, 0, %s44
      %s47 = sadd.s32 1, %s38
      %s48 = scalar_select %p45, %s47, %s38
      %p49 = scmp.ge.s32.totalorder %s48, 2
      %s50 = scalar_select %p49, 0, %s48
      %s52 = sadd.s32 %s51, 1
      %p55 = scmp.eq.s32.totalorder %s31, 3
      %p56 = scmp.ne.s32.totalorder %s51, %s53
      %p57 = scmp.eq.s32.totalorder %s31, 0
      %p58 = por %p56, %p57
      %p59 = scmp.ne.s32.totalorder %s51, %s53
      %p60 = scmp.eq.s32.totalorder %s36, 3
      %p61 = por %p59, %p60
      %p62 = scmp.ne.s32.totalorder %s53, %s54
      %p63 = scmp.eq.s32.totalorder %s36, 0
      %p64 = por %p62, %p63
      %p65 = scmp.ne.s32.totalorder %s53, %s54
      %p66 = scmp.eq.s32.totalorder %s37, 3
      %p67 = por %p65, %p66
      %p69 = scmp.ne.s32.totalorder %s54, %s68
      %p70 = scmp.eq.s32.totalorder %s37, 0
      %p71 = por %p69, %p70
      %s73 = sadd.s32 %s72, 1
      %p76 = scmp.eq.s32.totalorder %s31, 3
      %p77 = scmp.ne.s32.totalorder %s72, %s74
      %p78 = scmp.eq.s32.totalorder %s31, 0
      %p79 = por %p77, %p78
      %p80 = scmp.ne.s32.totalorder %s72, %s74
      %p81 = scmp.eq.s32.totalorder %s36, 3
      %p82 = por %p80, %p81
      %p83 = scmp.ne.s32.totalorder %s74, %s75
      %p84 = scmp.eq.s32.totalorder %s36, 0
      %p85 = por %p83, %p84
      %p86 = scmp.ne.s32.totalorder %s74, %s75
      %p87 = scmp.eq.s32.totalorder %s37, 3
      %p88 = por %p86, %p87
      %p90 = scmp.ne.s32.totalorder %s75, %s89
      %p91 = scmp.eq.s32.totalorder %s37, 0
      %p92 = por %p90, %p91
      %s94 = sadd.s32 %s93, 1
      %p97 = scmp.eq.s32.totalorder %s31, 3
      %p98 = scmp.ne.s32.totalorder %s93, %s95
      %p99 = scmp.eq.s32.totalorder %s31, 0
      %p100 = por %p98, %p99
      %p101 = scmp.ne.s32.totalorder %s93, %s95
      %p102 = scmp.eq.s32.totalorder %s36, 3
      %p103 = por %p101, %p102
      %p104 = scmp.ne.s32.totalorder %s95, %s96
      %p105 = scmp.eq.s32.totalorder %s36, 0
      %p106 = por %p104, %p105
      %p107 = scmp.ne.s32.totalorder %s95, %s96
      %p108 = scmp.eq.s32.totalorder %s37, 3
      %p109 = por %p107, %p108
      %p111 = scmp.ne.s32.totalorder %s96, %s110
      %p112 = scmp.eq.s32.totalorder %s37, 0
      %p113 = por %p111, %p112
      %s115 = sadd.s32 %s114, 1
      %p118 = scmp.eq.s32.totalorder %s31, 3
      %p119 = scmp.ne.s32.totalorder %s114, %s116
      %p120 = scmp.eq.s32.totalorder %s31, 0
      %p121 = por %p119, %p120
      %p122 = scmp.ne.s32.totalorder %s114, %s116
      %p123 = scmp.eq.s32.totalorder %s36, 3
      %p124 = por %p122, %p123
      %p125 = scmp.ne.s32.totalorder %s116, %s117
      %p126 = scmp.eq.s32.totalorder %s36, 0
      %p127 = por %p125, %p126
      %p128 = scmp.ne.s32.totalorder %s116, %s117
      %p129 = scmp.eq.s32.totalorder %s37, 3
      %p130 = por %p128, %p129
      %p132 = scmp.ne.s32.totalorder %s117, %s131
      %p133 = scmp.eq.s32.totalorder %s37, 0
      %p134 = por %p132, %p133
      %s136 = sadd.s32 %s135, 1
      %p139 = scmp.eq.s32.totalorder %s31, 3
      %p140 = scmp.ne.s32.totalorder %s135, %s137
      %p141 = scmp.eq.s32.totalorder %s31, 0
      %p142 = por %p140, %p141
      %p143 = scmp.ne.s32.totalorder %s135, %s137
      %p144 = scmp.eq.s32.totalorder %s36, 3
      %p145 = por %p143, %p144
      %p146 = scmp.ne.s32.totalorder %s137, %s138
      %p147 = scmp.eq.s32.totalorder %s36, 0
      %p148 = por %p146, %p147
      %p149 = scmp.ne.s32.totalorder %s137, %s138
      %p150 = scmp.eq.s32.totalorder %s37, 3
      %p151 = por %p149, %p150
      %p153 = scmp.ne.s32.totalorder %s138, %s152
      %p154 = scmp.eq.s32.totalorder %s37, 0
      %p155 = por %p153, %p154
      %s157 = sadd.s32 %s156, 1
      %p160 = scmp.eq.s32.totalorder %s31, 3
      %p161 = scmp.ne.s32.totalorder %s156, %s158
      %p162 = scmp.eq.s32.totalorder %s31, 0
      %p163 = por %p161, %p162
      %p164 = scmp.ne.s32.totalorder %s156, %s158
      %p165 = scmp.eq.s32.totalorder %s36, 3
      %p166 = por %p164, %p165
      %p167 = scmp.ne.s32.totalorder %s158, %s159
      %p168 = scmp.eq.s32.totalorder %s36, 0
      %p169 = por %p167, %p168
      %p170 = scmp.ne.s32.totalorder %s158, %s159
      %p171 = scmp.eq.s32.totalorder %s37, 3
      %p172 = por %p170, %p171
      %p174 = scmp.ne.s32.totalorder %s159, %s173
      %p175 = scmp.eq.s32.totalorder %s37, 0
      %p176 = por %p174, %p175
      %s178 = sadd.s32 %s177, 1
      %p181 = scmp.eq.s32.totalorder %s31, 3
      %p182 = scmp.ne.s32.totalorder %s177, %s179
      %p183 = scmp.eq.s32.totalorder %s31, 0
      %p184 = por %p182, %p183
      %p185 = scmp.ne.s32.totalorder %s177, %s179
      %p186 = scmp.eq.s32.totalorder %s36, 3
      %p187 = por %p185, %p186
      %p188 = scmp.ne.s32.totalorder %s179, %s180
      %p189 = scmp.eq.s32.totalorder %s36, 0
      %p190 = por %p188, %p189
      %p191 = scmp.ne.s32.totalorder %s179, %s180
      %p192 = scmp.eq.s32.totalorder %s37, 3
      %p193 = por %p191, %p192
      %p195 = scmp.ne.s32.totalorder %s180, %s194
      %p196 = scmp.eq.s32.totalorder %s37, 0
      %p197 = por %p195, %p196
      %s199 = sadd.s32 %s198, 1
      %p202 = scmp.eq.s32.totalorder %s31, 3
      %p203 = scmp.ne.s32.totalorder %s198, %s200
      %p204 = scmp.eq.s32.totalorder %s31, 0
      %p205 = por %p203, %p204
      %p206 = scmp.ne.s32.totalorder %s198, %s200
      %p207 = scmp.eq.s32.totalorder %s36, 3
      %p208 = por %p206, %p207
      %p209 = scmp.ne.s32.totalorder %s200, %s201
      %p210 = scmp.eq.s32.totalorder %s36, 0
      %p211 = por %p209, %p210
      %p212 = scmp.ne.s32.totalorder %s200, %s201
      %p213 = scmp.eq.s32.totalorder %s37, 3
      %p214 = por %p212, %p213
      %p216 = scmp.ne.s32.totalorder %s201, %s215
      %p217 = scmp.eq.s32.totalorder %s37, 0
      %p218 = por %p216, %p217
      %s220 = sadd.s32 %s219, 1
      %p223 = scmp.eq.s32.totalorder %s31, 3
      %p224 = scmp.ne.s32.totalorder %s219, %s221
      %p225 = scmp.eq.s32.totalorder %s31, 0
      %p226 = por %p224, %p225
      %p227 = scmp.ne.s32.totalorder %s219, %s221
      %p228 = scmp.eq.s32.totalorder %s36, 3
      %p229 = por %p227, %p228
      %p230 = scmp.ne.s32.totalorder %s221, %s222
      %p231 = scmp.eq.s32.totalorder %s36, 0
      %p232 = por %p230, %p231
      %p233 = scmp.ne.s32.totalorder %s221, %s222
      %p234 = scmp.eq.s32.totalorder %s37, 3
      %p235 = por %p233, %p234
      %p237 = scmp.ne.s32.totalorder %s222, %s236
      %p238 = scmp.eq.s32.totalorder %s37, 0
      %p239 = por %p237, %p238
      %s240 = ssub.s32 %s38, %s50
      %s241 = ssub.s32 %s39, %s46
      %s242 = sor.u32 %s240, %s241
      %p243 = scmp.eq.s32.totalorder %s242, 0
      %s245 = sadd.s32 %s244, 1
      %s246 = scalar_select %p243, %s244, %s245
      %p249 = pneg %p243
      %p250 = scmp.eq.s32.totalorder %s31, 3
      %p251 = por %p249, %p250
      %p252 = scmp.ne.s32.totalorder %s244, %s247
      %p253 = scmp.eq.s32.totalorder %s31, 0
      %p254 = por %p252, %p253
      %p255 = scmp.ne.s32.totalorder %s244, %s247
      %p256 = scmp.eq.s32.totalorder %s36, 3
      %p257 = por %p255, %p256
      %p258 = scmp.ne.s32.totalorder %s247, %s248
      %p259 = scmp.eq.s32.totalorder %s36, 0
      %p260 = por %p258, %p259
      %p261 = scmp.ne.s32.totalorder %s247, %s248
      %p262 = scmp.eq.s32.totalorder %s37, 3
      %p263 = por %p261, %p262
      %p265 = scmp.ne.s32.totalorder %s248, %s264
      %p266 = scmp.eq.s32.totalorder %s37, 0
      %p267 = por %p265, %p266
      %s268 = ssub.s32 %s38, %s50
      %s269 = ssub.s32 %s39, %s46
      %s270 = sor.u32 %s268, %s269
      %p271 = scmp.eq.s32.totalorder %s270, 0
      %s273 = sadd.s32 %s272, 1
      %s274 = scalar_select %p271, %s272, %s273
      %p277 = pneg %p271
      %p278 = scmp.eq.s32.totalorder %s31, 3
      %p279 = por %p277, %p278
      %p280 = scmp.ne.s32.totalorder %s272, %s275
      %p281 = scmp.eq.s32.totalorder %s31, 0
      %p282 = por %p280, %p281
      %p283 = scmp.ne.s32.totalorder %s272, %s275
      %p284 = scmp.eq.s32.totalorder %s36, 3
      %p285 = por %p283, %p284
      %p286 = scmp.ne.s32.totalorder %s275, %s276
      %p287 = scmp.eq.s32.totalorder %s36, 0
      %p288 = por %p286, %p287
      %p289 = scmp.ne.s32.totalorder %s275, %s276
      %p290 = scmp.eq.s32.totalorder %s37, 3
      %p291 = por %p289, %p290
      %p293 = scmp.ne.s32.totalorder %s276, %s292
      %p294 = scmp.eq.s32.totalorder %s37, 0
      %p295 = por %p293, %p294
      %s296 = ssub.s32 %s38, %s50
      %p297 = scmp.eq.s32.totalorder %s296, 0
      %s299 = sadd.s32 %s298, 1
      %s300 = scalar_select %p297, %s298, %s299
      %p303 = pneg %p297
      %p304 = scmp.eq.s32.totalorder %s31, 3
      %p305 = por %p303, %p304
      %p306 = scmp.ne.s32.totalorder %s298, %s301
      %p307 = scmp.eq.s32.totalorder %s31, 0
      %p308 = por %p306, %p307
      %p309 = scmp.ne.s32.totalorder %s298, %s301
      %p310 = scmp.eq.s32.totalorder %s36, 3
      %p311 = por %p309, %p310
      %p312 = scmp.ne.s32.totalorder %s301, %s302
      %p313 = scmp.eq.s32.totalorder %s36, 0
      %p314 = por %p312, %p313
      %p315 = scmp.ne.s32.totalorder %s301, %s302
      %p316 = scmp.eq.s32.totalorder %s37, 3
      %p317 = por %p315, %p316
      %p319 = scmp.ne.s32.totalorder %s302, %s318
      %p320 = scmp.eq.s32.totalorder %s37, 0
      %p321 = por %p319, %p320
      %s322 = ssub.s32 %s38, %s50
      %p323 = scmp.eq.s32.totalorder %s322, 0
      %s325 = sadd.s32 %s324, 1
      %s326 = scalar_select %p323, %s324, %s325
      %p329 = pneg %p323
      %p330 = scmp.eq.s32.totalorder %s31, 3
      %p331 = por %p329, %p330
      %p332 = scmp.ne.s32.totalorder %s324, %s327
      %p333 = scmp.eq.s32.totalorder %s31, 0
      %p334 = por %p332, %p333
      %p335 = scmp.ne.s32.totalorder %s324, %s327
      %p336 = scmp.eq.s32.totalorder %s36, 3
      %p337 = por %p335, %p336
      %p338 = scmp.ne.s32.totalorder %s327, %s328
      %p339 = scmp.eq.s32.totalorder %s36, 0
      %p340 = por %p338, %p339
      %p341 = scmp.ne.s32.totalorder %s327, %s328
      %p342 = scmp.eq.s32.totalorder %s37, 3
      %p343 = por %p341, %p342
      %p345 = scmp.ne.s32.totalorder %s328, %s344
      %p346 = scmp.eq.s32.totalorder %s37, 0
      %p347 = por %p345, %p346
      %p348 = scmp.le.s32.totalorder 1, %s31
      %p349 = scmp.lt.s32.totalorder %s31, 5
      %p350 = pnand %p348, %p349
      %p351 = pneg %p350
      // Predicated region
      $region9: #{tpu_custom_call.1} parent=5 // pred_check
        _
      $region10: #{tpu_custom_call.1} parent=5 // pred_check_branch
        %353 = sbr.rel (%p350) target = $region12
      $region11: #{tpu_custom_call.1} parent=5 // pred_region
        %s354 = ssub.s32 %s31, 1
        // Predicated region
        $region13: #{tpu_custom_call.1} parent=11 // pred_check
          %p355 = pneg %p64
        $region14: #{tpu_custom_call.1} parent=11 // pred_check_branch
          %357 = sbr.rel (%p355) target = $region16
        $region15: #{tpu_custom_call.1} parent=11 // pred_region
          %s359 = ssub.s32 16, 16
          %360 = vsyncadd [#allocation7], %s359
          %363 = dma.hbm_to_smem %s0, 16, [#allocation4], [#allocation7]
        $region16: #{tpu_custom_call.1} parent=11 // pred_fallthru
          _
        // Predicated region
        $region17: #{tpu_custom_call.1} parent=11 // pred_check
          %p364 = pneg %p85
        $region18: #{tpu_custom_call.1} parent=11 // pred_check_branch
          %366 = sbr.rel (%p364) target = $region20
        $region19: #{tpu_custom_call.1} parent=11 // pred_region
          %s368 = ssub.s32 16, 16
          %369 = vsyncadd [#allocation5], %s368
          %s371 = sshll.u32 [#allocation8], 4
          %s372 = int_to_ptr.vmem [resolvable:$true] %s371
          %374 = dma.hbm_to_vmem [thread:$0]  %s1, 16, %s372, [#allocation5]
        $region20: #{tpu_custom_call.1} parent=11 // pred_fallthru
          _
        // Predicated region
        $region21: #{tpu_custom_call.1} parent=11 // pred_check
          %p375 = pneg %p106
        $region22: #{tpu_custom_call.1} parent=11 // pred_check_branch
          %377 = sbr.rel (%p375) target = $region24
        $region23: #{tpu_custom_call.1} parent=11 // pred_region
          %s379 = ssub.s32 6144, 6144
          %380 = vsyncadd [#allocation10], %s379
          %s381 = sshll.u32 [#allocation9], 4
          %s382 = int_to_ptr.vmem [resolvable:$true] %s381
          %387 = dma.hbm_to_vmem [thread:$0]  %s2, 6144, %s382, [#allocation10], 384, 384, 24
        $region24: #{tpu_custom_call.1} parent=11 // pred_fallthru
          _
        // Predicated region
        $region25: #{tpu_custom_call.1} parent=11 // pred_check
          %p388 = pneg %p127
        $region26: #{tpu_custom_call.1} parent=11 // pred_check_branch
          %390 = sbr.rel (%p388) target = $region28
        $region27: #{tpu_custom_call.1} parent=11 // pred_region
          %s392 = ssub.s32 6144, 6144
          %393 = vsyncadd [#allocation10], %s392
          %s394 = sshll.u32 [#allocation11], 4
          %s395 = int_to_ptr.vmem [resolvable:$true] %s394
          %400 = dma.hbm_to_vmem [thread:$0]  %s3, 6144, %s395, [#allocation10], 384, 384, 24
        $region28: #{tpu_custom_call.1} parent=11 // pred_fallthru
          _
        // Predicated region
        $region29: #{tpu_custom_call.1} parent=11 // pred_check
          %p401 = pneg %p148
        $region30: #{tpu_custom_call.1} parent=11 // pred_check_branch
          %403 = sbr.rel (%p401) target = $region32
        $region31: #{tpu_custom_call.1} parent=11 // pred_region
          %s405 = ssub.s32 48, 48
          %406 = vsyncadd [#allocation13], %s405
          %s408 = sshll.u32 [#allocation12], 4
          %s409 = int_to_ptr.vmem [resolvable:$true] %s408
          %411 = dma.hbm_to_vmem [thread:$0]  %s4, 48, %s409, [#allocation13]
        $region32: #{tpu_custom_call.1} parent=11 // pred_fallthru
          _
        // Predicated region
        $region33: #{tpu_custom_call.1} parent=11 // pred_check
          %p412 = pneg %p169
        $region34: #{tpu_custom_call.1} parent=11 // pred_check_branch
          %414 = sbr.rel (%p412) target = $region36
        $region35: #{tpu_custom_call.1} parent=11 // pred_region
          %s416 = ssub.s32 18432, 18432
          %417 = vsyncadd [#allocation13], %s416
          %s418 = sshll.u32 [#allocation14], 4
          %s419 = int_to_ptr.vmem [resolvable:$true] %s418
          %424 = dma.hbm_to_vmem [thread:$0]  %s5, 18432, %s419, [#allocation13], 384, 384, 24
        $region36: #{tpu_custom_call.1} parent=11 // pred_fallthru
          _
        // Predicated region
        $region37: #{tpu_custom_call.1} parent=11 // pred_check
          %p425 = pneg %p190
        $region38: #{tpu_custom_call.1} parent=11 // pred_check_branch
          %427 = sbr.rel (%p425) target = $region40
        $region39: #{tpu_custom_call.1} parent=11 // pred_region
          %s429 = ssub.s32 48, 48
          %430 = vsyncadd [#allocation16], %s429
          %s432 = sshll.u32 [#allocation15], 4
          %s433 = int_to_ptr.vmem [resolvable:$true] %s432
          %435 = dma.hbm_to_vmem [thread:$0]  %s6, 48, %s433, [#allocation16]
        $region40: #{tpu_custom_call.1} parent=11 // pred_fallthru
          _
        // Predicated region
        $region41: #{tpu_custom_call.1} parent=11 // pred_check
          %p436 = pneg %p211
        $region42: #{tpu_custom_call.1} parent=11 // pred_check_branch
          %438 = sbr.rel (%p436) target = $region44
        $region43: #{tpu_custom_call.1} parent=11 // pred_region
          %s440 = ssub.s32 110592, 110592
          %441 = vsyncadd [#allocation16], %s440
          %s442 = sshll.u32 [#allocation17], 4
          %s443 = int_to_ptr.vmem [resolvable:$true] %s442
          %448 = dma.hbm_to_vmem [thread:$0]  %s7, 110592, %s443, [#allocation16], 2304, 2304, 144
        $region44: #{tpu_custom_call.1} parent=11 // pred_fallthru
          _
        // Predicated region
        $region45: #{tpu_custom_call.1} parent=11 // pred_check
          %p449 = pneg %p232
        $region46: #{tpu_custom_call.1} parent=11 // pred_check_branch
          %451 = sbr.rel (%p449) target = $region48
        $region47: #{tpu_custom_call.1} parent=11 // pred_region
          %s453 = ssub.s32 288, 288
          %454 = vsyncadd [#allocation19], %s453
          %s456 = sshll.u32 [#allocation18], 4
          %s457 = int_to_ptr.vmem [resolvable:$true] %s456
          %459 = dma.hbm_to_vmem [thread:$0]  %s8, 288, %s457, [#allocation19]
        $region48: #{tpu_custom_call.1} parent=11 // pred_fallthru
          _
      $region12: #{tpu_custom_call.1} parent=5 // pred_fallthru
        _
      %p460 = scmp.lt.s32.totalorder %s31, 4
      // Predicated region
      $region49: #{tpu_custom_call.1} parent=5 // pred_check
        %p461 = pneg %p460
      $region50: #{tpu_custom_call.1} parent=5 // pred_check_branch
        %463 = sbr.rel (%p461) target = $region52
      $region51: #{tpu_custom_call.1} parent=5 // pred_region
        // Predicated region
        $region53: #{tpu_custom_call.1} parent=51 // pred_check
          %p464 = pneg %p254
        $region54: #{tpu_custom_call.1} parent=51 // pred_check_branch
          %466 = sbr.rel (%p464) target = $region56
        $region55: #{tpu_custom_call.1} parent=51 // pred_region
          %s467 = sand.u32 %s31, 1
          %s468 = scalar_lea.sflag [#allocation5], %s467
          %s469 = sand.u32 %s244, 1
          %s470 = smul.addr %s469, 768
          %s471 = scalar_lea.vmem [#allocation20], %s470
          %s472 = smul.u32 32, %s39
          %s474 = ssub.s32 12288, 12288
          %475 = vsyncadd %s468, %s474
          %s476 = smul.addr %s472, 3
          %s477 = smul.addr %s38, 192
          %s478 = sadd.s32 %s476, %s477
          %s479 = smul.addr %s478, 128
          %s480 = scalar_lea.hbm %s9, %s479
          %s481 = sshll.u32 %s471, 4
          %s482 = int_to_ptr.vmem [resolvable:$true] %s481
          %487 = dma.hbm_to_vmem [thread:$0]  %s480, 12288, %s482, %s468, 384, 384, 24
        $region56: #{tpu_custom_call.1} parent=51 // pred_fallthru
          _
      $region52: #{tpu_custom_call.1} parent=5 // pred_fallthru
        _
      %p488 = scmp.le.s32.totalorder 1, %s31
      %p489 = scmp.lt.s32.totalorder %s31, 5
      %p490 = pnand %p488, %p489
      %p491 = pneg %p490
      // Predicated region
      $region57: #{tpu_custom_call.1} parent=5 // pred_check
        _
      $region58: #{tpu_custom_call.1} parent=5 // pred_check_branch
        %493 = sbr.rel (%p490) target = $region60
      $region59: #{tpu_custom_call.1} parent=5 // pred_region
        %s494 = ssub.s32 %s31, 1
        // Predicated region
        $region61: #{tpu_custom_call.1} parent=59 // pred_check
          %p495 = pneg %p64
        $region62: #{tpu_custom_call.1} parent=59 // pred_check_branch
          %497 = sbr.rel (%p495) target = $region64
        $region63: #{tpu_custom_call.1} parent=59 // pred_region
          %498 = dma.done [#allocation7], 16
        $region64: #{tpu_custom_call.1} parent=59 // pred_fallthru
          _
        // Predicated region
        $region65: #{tpu_custom_call.1} parent=59 // pred_check
          %p499 = pneg %p85
        $region66: #{tpu_custom_call.1} parent=59 // pred_check_branch
          %501 = sbr.rel (%p499) target = $region68
        $region67: #{tpu_custom_call.1} parent=59 // pred_region
          %502 = dma.done [#allocation5], 16
        $region68: #{tpu_custom_call.1} parent=59 // pred_fallthru
          _
        // Predicated region
        $region69: #{tpu_custom_call.1} parent=59 // pred_check
          %p503 = pneg %p106
        $region70: #{tpu_custom_call.1} parent=59 // pred_check_branch
          %505 = sbr.rel (%p503) target = $region72
        $region71: #{tpu_custom_call.1} parent=59 // pred_region
          %506 = dma.done [#allocation10], 6144
        $region72: #{tpu_custom_call.1} parent=59 // pred_fallthru
          _
        // Predicated region
        $region73: #{tpu_custom_call.1} parent=59 // pred_check
          %p507 = pneg %p127
        $region74: #{tpu_custom_call.1} parent=59 // pred_check_branch
          %509 = sbr.rel (%p507) target = $region76
        $region75: #{tpu_custom_call.1} parent=59 // pred_region
          %510 = dma.done [#allocation10], 6144
        $region76: #{tpu_custom_call.1} parent=59 // pred_fallthru
          _
        // Predicated region
        $region77: #{tpu_custom_call.1} parent=59 // pred_check
          %p511 = pneg %p148
        $region78: #{tpu_custom_call.1} parent=59 // pred_check_branch
          %513 = sbr.rel (%p511) target = $region80
        $region79: #{tpu_custom_call.1} parent=59 // pred_region
          %514 = dma.done [#allocation13], 48
        $region80: #{tpu_custom_call.1} parent=59 // pred_fallthru
          _
        // Predicated region
        $region81: #{tpu_custom_call.1} parent=59 // pred_check
          %p515 = pneg %p169
        $region82: #{tpu_custom_call.1} parent=59 // pred_check_branch
          %517 = sbr.rel (%p515) target = $region84
        $region83: #{tpu_custom_call.1} parent=59 // pred_region
          %518 = dma.done [#allocation13], 18432
        $region84: #{tpu_custom_call.1} parent=59 // pred_fallthru
          _
        // Predicated region
        $region85: #{tpu_custom_call.1} parent=59 // pred_check
          %p519 = pneg %p190
        $region86: #{tpu_custom_call.1} parent=59 // pred_check_branch
          %521 = sbr.rel (%p519) target = $region88
        $region87: #{tpu_custom_call.1} parent=59 // pred_region
          %522 = dma.done [#allocation16], 48
        $region88: #{tpu_custom_call.1} parent=59 // pred_fallthru
          _
        // Predicated region
        $region89: #{tpu_custom_call.1} parent=59 // pred_check
          %p523 = pneg %p211
        $region90: #{tpu_custom_call.1} parent=59 // pred_check_branch
          %525 = sbr.rel (%p523) target = $region92
        $region91: #{tpu_custom_call.1} parent=59 // pred_region
          %526 = dma.done [#allocation16], 110592
        $region92: #{tpu_custom_call.1} parent=59 // pred_fallthru
          _
        // Predicated region
        $region93: #{tpu_custom_call.1} parent=59 // pred_check
          %p527 = pneg %p232
        $region94: #{tpu_custom_call.1} parent=59 // pred_check_branch
          %529 = sbr.rel (%p527) target = $region96
        $region95: #{tpu_custom_call.1} parent=59 // pred_region
          %530 = dma.done [#allocation19], 288
        $region96: #{tpu_custom_call.1} parent=59 // pred_fallthru
          _
        %s531 = sand.u32 %s36, 1
        %s532 = scalar_lea.sflag [#allocation5], %s531
        %s533 = sand.u32 %s247, 1
        %s534 = smul.addr %s533, 768
        %s535 = scalar_lea.vmem [#allocation20], %s534
        // Predicated region
        $region97: #{tpu_custom_call.1} parent=59 // pred_check
          %p536 = pneg %p260
        $region98: #{tpu_custom_call.1} parent=59 // pred_check_branch
          %538 = sbr.rel (%p536) target = $region100
        $region99: #{tpu_custom_call.1} parent=59 // pred_region
          %539 = dma.done %s532, 12288
        $region100: #{tpu_custom_call.1} parent=59 // pred_fallthru
          _
        %540 = sfence
        %p541 = pneg %p64
        %p542 = pneg %p61
        %p543 = pneg %p85
        %p544 = pneg %p82
        %p545 = pneg %p106
        %p546 = pneg %p103
        %p547 = pneg %p127
        %p548 = pneg %p124
        %p549 = pneg %p148
        %p550 = pneg %p145
        %p551 = pneg %p169
        %p552 = pneg %p166
        %p553 = pneg %p190
        %p554 = pneg %p187
        %p555 = pneg %p211
        %p556 = pneg %p208
        %p557 = pneg %p232
        %p558 = pneg %p229
        %s559 = sand.u32 %s36, 1
        %s560 = scalar_lea.sflag [#allocation5], %s559
        %s561 = sand.u32 %s247, 1
        %s562 = smul.addr %s561, 768
        %s563 = scalar_lea.vmem [#allocation20], %s562
        %p564 = pneg %p260
        %p565 = pneg %p257
        %p566 = pneg %p288
        %p567 = pneg %p285
        %s568 = sand.u32 %s275, 1
        %s569 = scalar_lea.sflag [#allocation6], %s568
        %s570 = sand.u32 %s275, 1
        %s571 = smul.addr %s570, 768
        %s572 = scalar_lea.vmem [#allocation21], %s571
        %p573 = pneg %p314
        %p574 = pneg %p311
        %s575 = sand.u32 %s36, 1
        %s576 = scalar_lea.sflag [#allocation23], %s575
        %s577 = sand.u32 %s301, 1
        %s578 = smul.addr %s577, 3
        %s579 = scalar_lea.vmem [#allocation22], %s578
        %p580 = pneg %p340
        %p581 = pneg %p337
        %s582 = sand.u32 %s36, 1
        %s583 = scalar_lea.sflag [#allocation23], %s582
        %s584 = sand.u32 %s327, 1
        %s585 = smul.addr %s584, 18
        %s586 = scalar_lea.vmem [#allocation24], %s585
        %s587 = smul.u32 32, %s41
        %s588 = smul.u32 32, %s41
        %p589 = scmp.eq.s32.totalorder %s41, 0
        // Predicated region
        $region101: #{tpu_custom_call.1} parent=59 // pred_check
          %p590 = pneg %p589
        $region102: #{tpu_custom_call.1} parent=59 // pred_check_branch
          %592 = sbr.rel (%p590) target = $region104
        $region103: #{tpu_custom_call.1} parent=59 // pred_region
          %s593 = sld [smem:[#allocation4 + %s40]]
          %v594 = vld [vmem:[#allocation8] sm:$0x1]
          %v595 = vstv %s593
          %v596 = vmul.f32 %v595, %v594
          %v597 = vand.u32 2147483647, %v596
          %vm598 = vcmp.le.f32.partialorder %v597, 0.7853982
          %vm599 = vcmp.lt.s32.totalorder %v596, 0
          %v600 = vand.u32 %v596, 2139095040
          %v601 = vshrl.u32 %v600, 23
          %v602 = vsub.s32 %v601, 127
          %v603 = vand.u32 2147483647, %v596
          %v604 = vand.u32 %v603, 8388607
          %v605 = vor.u32 %v604, 8388608
          %v606 = vsub.s32 0, %v605
          %v607 = vadd.s32 %v602, 1
          %vm608 = vcmp.gt.s32.totalorder %v607, 0
          %v609 = vsel %vm608, %v607, 0
          %v610 = vshrl.u32 %v609, 5
          %v611 = vand.u32 %v609, 31
          %v612 = vsub.s32 32, %v611
          %v613 = vshrl.u32 683565275, %v612
          %v614 = vshll.u32 683565275, %v611
          %v615 = vshrl.u32 2475754826, %v612
          %v616 = vor.u32 %v614, %v615
          %v617 = vshll.u32 2475754826, %v611
          %v618 = vshrl.u32 2131351028, %v612
          %v619 = vor.u32 %v617, %v618
          %v620 = vshll.u32 2131351028, %v611
          %v621 = vshrl.u32 2102212464, %v612
          %v622 = vor.u32 %v620, %v621
          %v623 = vshll.u32 2102212464, %v611
          %v624 = vshrl.u32 920167782, %v612
          %v625 = vor.u32 %v623, %v624
          %v626 = vshll.u32 920167782, %v611
          %v627 = vshrl.u32 1326507024, %v612
          %v628 = vor.u32 %v626, %v627
          %vm629 = vcmp.lt.s32.totalorder %v610, 1
          %vm630 = vcmp.lt.s32.totalorder %v610, 2
          %vm631 = vcmp.lt.s32.totalorder %v610, 3
          %vm632 = vcmp.lt.s32.totalorder %v610, 4
          %v633 = vsel %vm629, %v613, %v616
          %v634 = vsel %vm632, %v622, 2102212464
          %v635 = vsel %vm631, %v619, %v634
          %v636 = vsel %vm630, %v633, %v635
          %v637 = vsel %vm629, %v616, %v619
          %v638 = vsel %vm632, %v625, 920167782
          %v639 = vsel %vm631, %v622, %v638
          %v640 = vsel %vm630, %v637, %v639
          %v641 = vsel %vm629, %v619, %v622
          %v642 = vsel %vm632, %v628, 1326507024
          %v643 = vsel %vm631, %v625, %v642
          %v644 = vsel %vm630, %v641, %v643
          %v645 = vshll.u32 %v605, 8
          %v646 = vmul.u32.u64.compose %v645, %v644
          %v647 = vextract.low.u32 %v646
          %v648 = vextract.high.u32 %v646
          %v649 = vmul.u32.u64.compose %v645, %v640
          %v650 = vextract.low.u32 %v649
          %v651 = vextract.high.u32 %v649
          %v652 = vmul.u32 %v645, %v636
          %v653 = vadd.s32 %v648, %v650
          %vm654 = vc.u32 %v648, %v650
          %v655 = vadd.s32 %v651, 1
          %v656 = vsel %vm654, %v655, %v651
          %v657 = vadd.s32 %v652, %v656
          %v658 = vadd.s32 %v657, 536870912
          %v659 = vshrl.u32 %v658, 30
          %v660 = vshll.u32 %v659, 30
          %v661 = vsub.s32 %v657, %v660
          %vm662 = vcmp.lt.s32.totalorder %v661, 0
          %v663 = vsub.s32 0, %v661
          %v664 = vsel %vm662, %v663, %v661
          %v665 = vclz %v664
          %v666 = vsub.s32 %v665, 2
          %vm667 = vcmp.gt.s32.totalorder 0, %v666
          %v668 = vsel %vm667, 0, %v666
          %v669 = vsub.s32 32, %v668
          %v670 = vshll.u32 %v661, %v668
          %v671 = vshrl.u32 %v653, %v669
          %v672 = vor.u32 %v670, %v671
          %v673 = vsub.s32 4294967266, %v668
          %v674 = vadd.s32 %v673, 127
          %v675 = vshll.u32 %v674, 23
          %v676 = vor.u32 4788187, %v675
          %v677 = vand.u32 2147483647, %v676
          %v679 = vcvt.s32.f32 %v672
          %v680 = vmul.f32 %v679, %v677
          %v681 = vxor.u32 %v680, 2147483648
          %v682 = vsel %vm599, %v681, %v680
          %v683 = vsub.s32 4, %v659
          %v684 = vsel %vm599, %v683, %v659
          %v685 = vsel %vm598, %v596, %v682
          %v686 = vsel %vm598, 0, %v684
          %v687 = vcosq.f32.pop %v685
          %v688 = vsinq.f32.pop %v685
          %vm689 = vweird.f32 %v596
          %v690 = vand.u32 %v686, 3
          %vm691 = vcmp.lt.s32.totalorder %v690, 2
          %vm692 = vcmp.eq.s32.totalorder %v690, 0
          %v693 = vxor.u32 %v688, 2147483648
          %v694 = vsel %vm692, %v687, %v693
          %vm695 = vcmp.eq.s32.totalorder %v690, 2
          %v696 = vxor.u32 %v687, 2147483648
          %v697 = vsel %vm695, %v696, %v688
          %v698 = vsel %vm691, %v694, %v697
          %v699 = vsel %vm689, nan, %v698
          %v700 = vld [vmem:[#allocation9] sm:$0xff]
          %v701 = vld [vmem:[#allocation9 + $0x8] sm:$0xff]
          %v702 = vld [vmem:[#allocation9 + $0x10] sm:$0xff]
          %v703 = vld [vmem:[#allocation9 + $0x18] sm:$0xff]
          %v704 = vld [vmem:[#allocation9 + $0x20] sm:$0xff]
          %v705 = vld [vmem:[#allocation9 + $0x28] sm:$0xff]
          %v706 = vld [vmem:[#allocation9 + $0x30] sm:$0xff]
          %v707 = vld [vmem:[#allocation9 + $0x38] sm:$0xff]
          %v708 = vld [vmem:[#allocation9 + $0x40] sm:$0xff]
          %v709 = vld [vmem:[#allocation9 + $0x48] sm:$0xff]
          %v710 = vld [vmem:[#allocation9 + $0x50] sm:$0xff]
          %v711 = vld [vmem:[#allocation9 + $0x58] sm:$0xff]
          %v712 = vld [vmem:[#allocation9 + $0x60] sm:$0xff]
          %v713 = vld [vmem:[#allocation9 + $0x68] sm:$0xff]
          %v714 = vld [vmem:[#allocation9 + $0x70] sm:$0xff]
          %v715 = vld [vmem:[#allocation9 + $0x78] sm:$0xff]
          %v716 = vld [vmem:[#allocation9 + $0x80] sm:$0xff]
          %v717 = vld [vmem:[#allocation9 + $0x88] sm:$0xff]
          %v718 = vld [vmem:[#allocation9 + $0x90] sm:$0xff]
          %v719 = vld [vmem:[#allocation9 + $0x98] sm:$0xff]
          %v720 = vld [vmem:[#allocation9 + $0xa0] sm:$0xff]
          %v721 = vld [vmem:[#allocation9 + $0xa8] sm:$0xff]
          %v722 = vld [vmem:[#allocation9 + $0xb0] sm:$0xff]
          %v723 = vld [vmem:[#allocation9 + $0xb8] sm:$0xff]
          %v724 = vld [vmem:[#allocation9 + $0xc0] sm:$0xff]
          %v725 = vld [vmem:[#allocation9 + $0xc8] sm:$0xff]
          %v726 = vld [vmem:[#allocation9 + $0xd0] sm:$0xff]
          %v727 = vld [vmem:[#allocation9 + $0xd8] sm:$0xff]
          %v728 = vld [vmem:[#allocation9 + $0xe0] sm:$0xff]
          %v729 = vld [vmem:[#allocation9 + $0xe8] sm:$0xff]
          %v730 = vld [vmem:[#allocation9 + $0xf0] sm:$0xff]
          %v731 = vld [vmem:[#allocation9 + $0xf8] sm:$0xff]
          %v732 = vld [vmem:[#allocation9 + $0x100] sm:$0xff]
          %v733 = vld [vmem:[#allocation9 + $0x108] sm:$0xff]
          %v734 = vld [vmem:[#allocation9 + $0x110] sm:$0xff]
          %v735 = vld [vmem:[#allocation9 + $0x118] sm:$0xff]
          %v736 = vld [vmem:[#allocation9 + $0x120] sm:$0xff]
          %v737 = vld [vmem:[#allocation9 + $0x128] sm:$0xff]
          %v738 = vld [vmem:[#allocation9 + $0x130] sm:$0xff]
          %v739 = vld [vmem:[#allocation9 + $0x138] sm:$0xff]
          %v740 = vld [vmem:[#allocation9 + $0x140] sm:$0xff]
          %v741 = vld [vmem:[#allocation9 + $0x148] sm:$0xff]
          %v742 = vld [vmem:[#allocation9 + $0x150] sm:$0xff]
          %v743 = vld [vmem:[#allocation9 + $0x158] sm:$0xff]
          %v744 = vld [vmem:[#allocation9 + $0x160] sm:$0xff]
          %v745 = vld [vmem:[#allocation9 + $0x168] sm:$0xff]
          %v746 = vld [vmem:[#allocation9 + $0x170] sm:$0xff]
          %v747 = vld [vmem:[#allocation9 + $0x178] sm:$0xff]
          %v748 = vand.u32 2147483647, %v596
          %vm749 = vcmp.le.f32.partialorder %v748, 0.7853982
          %vm750 = vcmp.lt.s32.totalorder %v596, 0
          %v751 = vand.u32 %v596, 2139095040
          %v752 = vshrl.u32 %v751, 23
          %v753 = vsub.s32 %v752, 127
          %v754 = vand.u32 2147483647, %v596
          %v755 = vand.u32 %v754, 8388607
          %v756 = vor.u32 %v755, 8388608
          %v757 = vsub.s32 0, %v756
          %v758 = vadd.s32 %v753, 1
          %vm759 = vcmp.gt.s32.totalorder %v758, 0
          %v760 = vsel %vm759, %v758, 0
          %v761 = vshrl.u32 %v760, 5
          %v762 = vand.u32 %v760, 31
          %v763 = vsub.s32 32, %v762
          %v764 = vshrl.u32 683565275, %v763
          %v765 = vshll.u32 683565275, %v762
          %v766 = vshrl.u32 2475754826, %v763
          %v767 = vor.u32 %v765, %v766
          %v768 = vshll.u32 2475754826, %v762
          %v769 = vshrl.u32 2131351028, %v763
          %v770 = vor.u32 %v768, %v769
          %v771 = vshll.u32 2131351028, %v762
          %v772 = vshrl.u32 2102212464, %v763
          %v773 = vor.u32 %v771, %v772
          %v774 = vshll.u32 2102212464, %v762
          %v775 = vshrl.u32 920167782, %v763
          %v776 = vor.u32 %v774, %v775
          %v777 = vshll.u32 920167782, %v762
          %v778 = vshrl.u32 1326507024, %v763
          %v779 = vor.u32 %v777, %v778
          %vm780 = vcmp.lt.s32.totalorder %v761, 1
          %vm781 = vcmp.lt.s32.totalorder %v761, 2
          %vm782 = vcmp.lt.s32.totalorder %v761, 3
          %vm783 = vcmp.lt.s32.totalorder %v761, 4
          %v784 = vsel %vm780, %v764, %v767
          %v785 = vsel %vm783, %v773, 2102212464
          %v786 = vsel %vm782, %v770, %v785
          %v787 = vsel %vm781, %v784, %v786
          %v788 = vsel %vm780, %v767, %v770
          %v789 = vsel %vm783, %v776, 920167782
          %v790 = vsel %vm782, %v773, %v789
          %v791 = vsel %vm781, %v788, %v790
          %v792 = vsel %vm780, %v770, %v773
          %v793 = vsel %vm783, %v779, 1326507024
          %v794 = vsel %vm782, %v776, %v793
          %v795 = vsel %vm781, %v792, %v794
          %v796 = vshll.u32 %v756, 8
          %v797 = vmul.u32.u64.compose %v796, %v795
          %v798 = vextract.low.u32 %v797
          %v799 = vextract.high.u32 %v797
          %v800 = vmul.u32.u64.compose %v796, %v791
          %v801 = vextract.low.u32 %v800
          %v802 = vextract.high.u32 %v800
          %v803 = vmul.u32 %v796, %v787
          %v804 = vadd.s32 %v799, %v801
          %vm805 = vc.u32 %v799, %v801
          %v806 = vadd.s32 %v802, 1
          %v807 = vsel %vm805, %v806, %v802
          %v808 = vadd.s32 %v803, %v807
          %v809 = vadd.s32 %v808, 536870912
          %v810 = vshrl.u32 %v809, 30
          %v811 = vshll.u32 %v810, 30
          %v812 = vsub.s32 %v808, %v811
          %vm813 = vcmp.lt.s32.totalorder %v812, 0
          %v814 = vsub.s32 0, %v812
          %v815 = vsel %vm813, %v814, %v812
          %v816 = vclz %v815
          %v817 = vsub.s32 %v816, 2
          %vm818 = vcmp.gt.s32.totalorder 0, %v817
          %v819 = vsel %vm818, 0, %v817
          %v820 = vsub.s32 32, %v819
          %v821 = vshll.u32 %v812, %v819
          %v822 = vshrl.u32 %v804, %v820
          %v823 = vor.u32 %v821, %v822
          %v824 = vsub.s32 4294967266, %v819
          %v825 = vadd.s32 %v824, 127
          %v826 = vshll.u32 %v825, 23
          %v827 = vor.u32 4788187, %v826
          %v828 = vand.u32 2147483647, %v827
          %v830 = vcvt.s32.f32 %v823
          %v831 = vmul.f32 %v830, %v828
          %v832 = vxor.u32 %v831, 2147483648
          %v833 = vsel %vm750, %v832, %v831
          %v834 = vsub.s32 4, %v810
          %v835 = vsel %vm750, %v834, %v810
          %v836 = vsel %vm749, %v596, %v833
          %v837 = vsel %vm749, 0, %v835
          %v838 = vcosq.f32.pop %v836
          %v839 = vsinq.f32.pop %v836
          %vm840 = vweird.f32 %v596
          %v841 = vadd.s32 %v837, 3
          %v842 = vand.u32 %v841, 3
          %vm843 = vcmp.lt.s32.totalorder %v842, 2
          %vm844 = vcmp.eq.s32.totalorder %v842, 0
          %v845 = vxor.u32 %v839, 2147483648
          %v846 = vsel %vm844, %v838, %v845
          %vm847 = vcmp.eq.s32.totalorder %v842, 2
          %v848 = vxor.u32 %v838, 2147483648
          %v849 = vsel %vm847, %v848, %v839
          %v850 = vsel %vm843, %v846, %v849
          %v851 = vsel %vm840, nan, %v850
          %v852 = vld [vmem:[#allocation11] sm:$0xff]
          %v853 = vld [vmem:[#allocation11 + $0x8] sm:$0xff]
          %v854 = vld [vmem:[#allocation11 + $0x10] sm:$0xff]
          %v855 = vld [vmem:[#allocation11 + $0x18] sm:$0xff]
          %v856 = vld [vmem:[#allocation11 + $0x20] sm:$0xff]
          %v857 = vld [vmem:[#allocation11 + $0x28] sm:$0xff]
          %v858 = vld [vmem:[#allocation11 + $0x30] sm:$0xff]
          %v859 = vld [vmem:[#allocation11 + $0x38] sm:$0xff]
          %v860 = vld [vmem:[#allocation11 + $0x40] sm:$0xff]
          %v861 = vld [vmem:[#allocation11 + $0x48] sm:$0xff]
          %v862 = vld [vmem:[#allocation11 + $0x50] sm:$0xff]
          %v863 = vld [vmem:[#allocation11 + $0x58] sm:$0xff]
          %v864 = vld [vmem:[#allocation11 + $0x60] sm:$0xff]
          %v865 = vld [vmem:[#allocation11 + $0x68] sm:$0xff]
          %v866 = vld [vmem:[#allocation11 + $0x70] sm:$0xff]
          %v867 = vld [vmem:[#allocation11 + $0x78] sm:$0xff]
          %v868 = vld [vmem:[#allocation11 + $0x80] sm:$0xff]
          %v869 = vld [vmem:[#allocation11 + $0x88] sm:$0xff]
          %v870 = vld [vmem:[#allocation11 + $0x90] sm:$0xff]
          %v871 = vld [vmem:[#allocation11 + $0x98] sm:$0xff]
          %v872 = vld [vmem:[#allocation11 + $0xa0] sm:$0xff]
          %v873 = vld [vmem:[#allocation11 + $0xa8] sm:$0xff]
          %v874 = vld [vmem:[#allocation11 + $0xb0] sm:$0xff]
          %v875 = vld [vmem:[#allocation11 + $0xb8] sm:$0xff]
          %v876 = vld [vmem:[#allocation11 + $0xc0] sm:$0xff]
          %v877 = vld [vmem:[#allocation11 + $0xc8] sm:$0xff]
          %v878 = vld [vmem:[#allocation11 + $0xd0] sm:$0xff]
          %v879 = vld [vmem:[#allocation11 + $0xd8] sm:$0xff]
          %v880 = vld [vmem:[#allocation11 + $0xe0] sm:$0xff]
          %v881 = vld [vmem:[#allocation11 + $0xe8] sm:$0xff]
          %v882 = vld [vmem:[#allocation11 + $0xf0] sm:$0xff]
          %v883 = vld [vmem:[#allocation11 + $0xf8] sm:$0xff]
          %v884 = vld [vmem:[#allocation11 + $0x100] sm:$0xff]
          %v885 = vld [vmem:[#allocation11 + $0x108] sm:$0xff]
          %v886 = vld [vmem:[#allocation11 + $0x110] sm:$0xff]
          %v887 = vld [vmem:[#allocation11 + $0x118] sm:$0xff]
          %v888 = vld [vmem:[#allocation11 + $0x120] sm:$0xff]
          %v889 = vld [vmem:[#allocation11 + $0x128] sm:$0xff]
          %v890 = vld [vmem:[#allocation11 + $0x130] sm:$0xff]
          %v891 = vld [vmem:[#allocation11 + $0x138] sm:$0xff]
          %v892 = vld [vmem:[#allocation11 + $0x140] sm:$0xff]
          %v893 = vld [vmem:[#allocation11 + $0x148] sm:$0xff]
          %v894 = vld [vmem:[#allocation11 + $0x150] sm:$0xff]
          %v895 = vld [vmem:[#allocation11 + $0x158] sm:$0xff]
          %v896 = vld [vmem:[#allocation11 + $0x160] sm:$0xff]
          %v897 = vld [vmem:[#allocation11 + $0x168] sm:$0xff]
          %v898 = vld [vmem:[#allocation11 + $0x170] sm:$0xff]
          %v899 = vld [vmem:[#allocation11 + $0x178] sm:$0xff]
          %900 = vmatprep.subr.mxu0 %v898
          %901 = vmatpush1.msra.mxu0 %v897
          %902 = vmatprep.subr.mxu0 %v895
          %903 = vmatpush1.msra.mxu0 %v894
          %904 = vmatprep.subr.mxu0 %v892
          %905 = vmatpush1.msra.mxu0 %v891
          %906 = vmatprep.subr.mxu0 %v889
          %907 = vmatpush1.msra.mxu0 %v888
          %908 = vmatprep.subr.mxu0 %v886
          %909 = vmatpush1.msra.mxu0 %v885
          %910 = vmatprep.subr.mxu0 %v883
          %911 = vmatpush1.msra.mxu0 %v882
          %912 = vmatprep.subr.mxu0 %v880
          %913 = vmatpush1.msra.mxu0 %v879
          %914 = vmatprep.subr.mxu0 %v877
          %915 = vmatpush1.msra.mxu0 %v876
          %916 = vmatprep.subr.mxu0 %v874
          %917 = vmatpush1.msra.mxu0 %v873
          %918 = vmatprep.subr.mxu0 %v871
          %919 = vmatpush1.msra.mxu0 %v870
          %920 = vmatprep.subr.mxu0 %v868
          %921 = vmatpush1.msra.mxu0 %v867
          %922 = vmatprep.subr.mxu0 %v865
          %923 = vmatpush1.msra.mxu0 %v864
          %924 = vmatprep.subr.mxu0 %v862
          %925 = vmatpush1.msra.mxu0 %v861
          %926 = vmatprep.subr.mxu0 %v859
          %927 = vmatpush1.msra.mxu0 %v858
          %928 = vmatprep.subr.mxu0 %v856
          %929 = vmatpush1.msra.mxu0 %v855
          %930 = vmatprep.subr.mxu0 %v853
          %931 = vmatpush1.msra.mxu0 %v852
          %932 = vmatprep.subr.mxu0 0.0
          %933 = vmatpush2.msra.mxu0 0.0
          %934 = vmatprep.subr.mxu0 0.0
          %935 = vmatpush2.msra.mxu0 0.0
          %936 = vmatprep.subr.mxu0 0.0
          %937 = vmatpush2.msra.mxu0 0.0
          %938 = vmatprep.subr.mxu0 0.0
          %939 = vmatpush2.msra.mxu0 0.0
          %940 = vmatprep.subr.mxu0 0.0
          %941 = vmatpush2.msra.mxu0 0.0
          %942 = vmatprep.subr.mxu0 0.0
          %943 = vmatpush2.msra.mxu0 0.0
          %944 = vmatprep.subr.mxu0 0.0
          %945 = vmatpush2.msra.mxu0 0.0
          %946 = vmatprep.subr.mxu0 0.0
          %947 = vmatpush2.msra.mxu0 0.0
          %948 = vmatprep.subr.mxu0 0.0
          %949 = vmatpush2.msra.mxu0 0.0
          %950 = vmatprep.subr.mxu0 0.0
          %951 = vmatpush2.msra.mxu0 0.0
          %952 = vmatprep.subr.mxu0 0.0
          %953 = vmatpush2.msra.mxu0 0.0
          %954 = vmatprep.subr.mxu0 0.0
          %955 = vmatpush2.msra.mxu0 0.0
          %956 = vmatprep.subr.mxu0 0.0
          %957 = vmatpush2.msra.mxu0 0.0
          %958 = vmatprep.subr.mxu0 0.0
          %959 = vmatpush2.msra.mxu0 0.0
          %960 = vmatprep.subr.mxu0 0.0
          %961 = vmatpush2.msra.mxu0 0.0
          %962 = vmatprep.subr.mxu0 0.0
          %963 = vmatpush2.msra.mxu0 0.0
          %964 = vmatprep.mubr.f32.mxu0 0.0
          %965 = vmatmul.mubr.f32.gmra.mxu0 %v851
          %v966 = vpop.f32.mrf.mxu0
          %v967 = vadd.f32 0.0, %v966
          %v968 = vpop.f32.mrf.mxu0
          %v969 = vadd.f32 0.0, %v968
          %970 = vdwg.mxu0
          %971 = vmatprep.subr.mxu0 0.0
          %972 = vmatpush1.msra.mxu0 %v899
          %973 = vmatprep.subr.mxu0 0.0
          %974 = vmatpush1.msra.mxu0 %v896
          %975 = vmatprep.subr.mxu0 0.0
          %976 = vmatpush1.msra.mxu0 %v893
          %977 = vmatprep.subr.mxu0 0.0
          %978 = vmatpush1.msra.mxu0 %v890
          %979 = vmatprep.subr.mxu0 0.0
          %980 = vmatpush1.msra.mxu0 %v887
          %981 = vmatprep.subr.mxu0 0.0
          %982 = vmatpush1.msra.mxu0 %v884
          %983 = vmatprep.subr.mxu0 0.0
          %984 = vmatpush1.msra.mxu0 %v881
          %985 = vmatprep.subr.mxu0 0.0
          %986 = vmatpush1.msra.mxu0 %v878
          %987 = vmatprep.subr.mxu0 0.0
          %988 = vmatpush1.msra.mxu0 %v875
          %989 = vmatprep.subr.mxu0 0.0
          %990 = vmatpush1.msra.mxu0 %v872
          %991 = vmatprep.subr.mxu0 0.0
          %992 = vmatpush1.msra.mxu0 %v869
          %993 = vmatprep.subr.mxu0 0.0
          %994 = vmatpush1.msra.mxu0 %v866
          %995 = vmatprep.subr.mxu0 0.0
          %996 = vmatpush1.msra.mxu0 %v863
          %997 = vmatprep.subr.mxu0 0.0
          %998 = vmatpush1.msra.mxu0 %v860
          %999 = vmatprep.subr.mxu0 0.0
          %1000 = vmatpush1.msra.mxu0 %v857
          %1001 = vmatprep.subr.mxu0 0.0
          %1002 = vmatpush1.msra.mxu0 %v854
          %1003 = vmatprep.subr.mxu0 0.0
          %1004 = vmatpush2.msra.mxu0 0.0
          %1005 = vmatprep.subr.mxu0 0.0
          %1006 = vmatpush2.msra.mxu0 0.0
          %1007 = vmatprep.subr.mxu0 0.0
          %1008 = vmatpush2.msra.mxu0 0.0
          %1009 = vmatprep.subr.mxu0 0.0
          %1010 = vmatpush2.msra.mxu0 0.0
          %1011 = vmatprep.subr.mxu0 0.0
          %1012 = vmatpush2.msra.mxu0 0.0
          %1013 = vmatprep.subr.mxu0 0.0
          %1014 = vmatpush2.msra.mxu0 0.0
          %1015 = vmatprep.subr.mxu0 0.0
          %1016 = vmatpush2.msra.mxu0 0.0
          %1017 = vmatprep.subr.mxu0 0.0
          %1018 = vmatpush2.msra.mxu0 0.0
          %1019 = vmatprep.subr.mxu0 0.0
          %1020 = vmatpush2.msra.mxu0 0.0
          %1021 = vmatprep.subr.mxu0 0.0
          %1022 = vmatpush2.msra.mxu0 0.0
          %1023 = vmatprep.subr.mxu0 0.0
          %1024 = vmatpush2.msra.mxu0 0.0
          %1025 = vmatprep.subr.mxu0 0.0
          %1026 = vmatpush2.msra.mxu0 0.0
          %1027 = vmatprep.subr.mxu0 0.0
          %1028 = vmatpush2.msra.mxu0 0.0
          %1029 = vmatprep.subr.mxu0 0.0
          %1030 = vmatpush2.msra.mxu0 0.0
          %1031 = vmatprep.subr.mxu0 0.0
          %1032 = vmatpush2.msra.mxu0 0.0
          %1033 = vmatprep.subr.mxu0 0.0
          %1034 = vmatpush2.msra.mxu0 0.0
          %1035 = vmatprep.mubr.f32.mxu0 0.0
          %1036 = vmatmul.mubr.f32.gmra.mxu0 %v851
          %v1037 = vpop.f32.mrf.mxu0
          %v1038 = vadd.f32 0.0, %v1037
          %v1039 = vpop.f32.mrf.mxu0
          %1040 = vdwg.mxu0
          %1041 = vmatprep.subr.mxu0 %v746
          %1042 = vmatpush1.msra.mxu0 %v745
          %1043 = vmatprep.subr.mxu0 %v743
          %1044 = vmatpush1.msra.mxu0 %v742
          %1045 = vmatprep.subr.mxu0 %v740
          %1046 = vmatpush1.msra.mxu0 %v739
          %1047 = vmatprep.subr.mxu0 %v737
          %1048 = vmatpush1.msra.mxu0 %v736
          %1049 = vmatprep.subr.mxu0 %v734
          %1050 = vmatpush1.msra.mxu0 %v733
          %1051 = vmatprep.subr.mxu0 %v731
          %1052 = vmatpush1.msra.mxu0 %v730
          %1053 = vmatprep.subr.mxu0 %v728
          %1054 = vmatpush1.msra.mxu0 %v727
          %1055 = vmatprep.subr.mxu0 %v725
          %1056 = vmatpush1.msra.mxu0 %v724
          %1057 = vmatprep.subr.mxu0 %v722
          %1058 = vmatpush1.msra.mxu0 %v721
          %1059 = vmatprep.subr.mxu0 %v719
          %1060 = vmatpush1.msra.mxu0 %v718
          %1061 = vmatprep.subr.mxu0 %v716
          %1062 = vmatpush1.msra.mxu0 %v715
          %1063 = vmatprep.subr.mxu0 %v713
          %1064 = vmatpush1.msra.mxu0 %v712
          %1065 = vmatprep.subr.mxu0 %v710
          %1066 = vmatpush1.msra.mxu0 %v709
          %1067 = vmatprep.subr.mxu0 %v707
          %1068 = vmatpush1.msra.mxu0 %v706
          %1069 = vmatprep.subr.mxu0 %v704
          %1070 = vmatpush1.msra.mxu0 %v703
          %1071 = vmatprep.subr.mxu0 %v701
          %1072 = vmatpush1.msra.mxu0 %v700
          %1073 = vmatprep.subr.mxu0 0.0
          %1074 = vmatpush2.msra.mxu0 0.0
          %1075 = vmatprep.subr.mxu0 0.0
          %1076 = vmatpush2.msra.mxu0 0.0
          %1077 = vmatprep.subr.mxu0 0.0
          %1078 = vmatpush2.msra.mxu0 0.0
          %1079 = vmatprep.subr.mxu0 0.0
          %1080 = vmatpush2.msra.mxu0 0.0
          %1081 = vmatprep.subr.mxu0 0.0
          %1082 = vmatpush2.msra.mxu0 0.0
          %1083 = vmatprep.subr.mxu0 0.0
          %1084 = vmatpush2.msra.mxu0 0.0
          %1085 = vmatprep.subr.mxu0 0.0
          %1086 = vmatpush2.msra.mxu0 0.0
          %1087 = vmatprep.subr.mxu0 0.0
          %1088 = vmatpush2.msra.mxu0 0.0
          %1089 = vmatprep.subr.mxu0 0.0
          %1090 = vmatpush2.msra.mxu0 0.0
          %1091 = vmatprep.subr.mxu0 0.0
          %1092 = vmatpush2.msra.mxu0 0.0
          %1093 = vmatprep.subr.mxu0 0.0
          %1094 = vmatpush2.msra.mxu0 0.0
          %1095 = vmatprep.subr.mxu0 0.0
          %1096 = vmatpush2.msra.mxu0 0.0
          %1097 = vmatprep.subr.mxu0 0.0
          %1098 = vmatpush2.msra.mxu0 0.0
          %1099 = vmatprep.subr.mxu0 0.0
          %1100 = vmatpush2.msra.mxu0 0.0
          %1101 = vmatprep.subr.mxu0 0.0
          %1102 = vmatpush2.msra.mxu0 0.0
          %1103 = vmatprep.subr.mxu0 0.0
          %1104 = vmatpush2.msra.mxu0 0.0
          %1105 = vmatprep.mubr.f32.mxu0 0.0
          %1106 = vmatmul.mubr.f32.gmra.mxu0 %v699
          %v1107 = vpop.f32.mrf.mxu0
          %v1108 = vadd.f32 %v967, %v1107
          %v1109 = vpop.f32.mrf.mxu0
          %v1110 = vadd.f32 %v969, %v1109
          %1111 = vdwg.mxu0
          %1112 = vmatprep.subr.mxu0 0.0
          %1113 = vmatpush1.msra.mxu0 %v747
          %1114 = vmatprep.subr.mxu0 0.0
          %1115 = vmatpush1.msra.mxu0 %v744
          %1116 = vmatprep.subr.mxu0 0.0
          %1117 = vmatpush1.msra.mxu0 %v741
          %1118 = vmatprep.subr.mxu0 0.0
          %1119 = vmatpush1.msra.mxu0 %v738
          %1120 = vmatprep.subr.mxu0 0.0
          %1121 = vmatpush1.msra.mxu0 %v735
          %1122 = vmatprep.subr.mxu0 0.0
          %1123 = vmatpush1.msra.mxu0 %v732
          %1124 = vmatprep.subr.mxu0 0.0
          %1125 = vmatpush1.msra.mxu0 %v729
          %1126 = vmatprep.subr.mxu0 0.0
          %1127 = vmatpush1.msra.mxu0 %v726
          %1128 = vmatprep.subr.mxu0 0.0
          %1129 = vmatpush1.msra.mxu0 %v723
          %1130 = vmatprep.subr.mxu0 0.0
          %1131 = vmatpush1.msra.mxu0 %v720
          %1132 = vmatprep.subr.mxu0 0.0
          %1133 = vmatpush1.msra.mxu0 %v717
          %1134 = vmatprep.subr.mxu0 0.0
          %1135 = vmatpush1.msra.mxu0 %v714
          %1136 = vmatprep.subr.mxu0 0.0
          %1137 = vmatpush1.msra.mxu0 %v711
          %1138 = vmatprep.subr.mxu0 0.0
          %1139 = vmatpush1.msra.mxu0 %v708
          %1140 = vmatprep.subr.mxu0 0.0
          %1141 = vmatpush1.msra.mxu0 %v705
          %1142 = vmatprep.subr.mxu0 0.0
          %1143 = vmatpush1.msra.mxu0 %v702
          %1144 = vmatprep.subr.mxu0 0.0
          %1145 = vmatpush2.msra.mxu0 0.0
          %1146 = vmatprep.subr.mxu0 0.0
          %1147 = vmatpush2.msra.mxu0 0.0
          %1148 = vmatprep.subr.mxu0 0.0
          %1149 = vmatpush2.msra.mxu0 0.0
          %1150 = vmatprep.subr.mxu0 0.0
          %1151 = vmatpush2.msra.mxu0 0.0
          %1152 = vmatprep.subr.mxu0 0.0
          %1153 = vmatpush2.msra.mxu0 0.0
          %1154 = vmatprep.subr.mxu0 0.0
          %1155 = vmatpush2.msra.mxu0 0.0
          %1156 = vmatprep.subr.mxu0 0.0
          %1157 = vmatpush2.msra.mxu0 0.0
          %1158 = vmatprep.subr.mxu0 0.0
          %1159 = vmatpush2.msra.mxu0 0.0
          %1160 = vmatprep.subr.mxu0 0.0
          %1161 = vmatpush2.msra.mxu0 0.0
          %1162 = vmatprep.subr.mxu0 0.0
          %1163 = vmatpush2.msra.mxu0 0.0
          %1164 = vmatprep.subr.mxu0 0.0
          %1165 = vmatpush2.msra.mxu0 0.0
          %1166 = vmatprep.subr.mxu0 0.0
          %1167 = vmatpush2.msra.mxu0 0.0
          %1168 = vmatprep.subr.mxu0 0.0
          %1169 = vmatpush2.msra.mxu0 0.0
          %1170 = vmatprep.subr.mxu0 0.0
          %1171 = vmatpush2.msra.mxu0 0.0
          %1172 = vmatprep.subr.mxu0 0.0
          %1173 = vmatpush2.msra.mxu0 0.0
          %1174 = vmatprep.subr.mxu0 0.0
          %1175 = vmatpush2.msra.mxu0 0.0
          %1176 = vmatprep.mubr.f32.mxu0 0.0
          %1177 = vmatmul.mubr.f32.gmra.mxu0 %v699
          %v1178 = vpop.f32.mrf.mxu0
          %v1179 = vadd.f32 %v1038, %v1178
          %v1180 = vpop.f32.mrf.mxu0
          %1181 = vdwg.mxu0
          %v1182 = vld [vmem:[#allocation12] sm:$0x7]
          %v1184 = vlaneseq
          %v1185 = vshrl.u32 %v1184, 7
          %v1186 = vsub.s32 0, %v1185
          %v1187 = vrot.slane %v1182, %v1186
          %v1188 = vlaneseq
          %v1189 = vshrl.u32 %v1188, 7
          %v1190 = vsub.s32 1, %v1189
          %v1191 = vrot.slane %v1182, %v1190
          %v1192 = vlaneseq
          %v1193 = vshrl.u32 %v1192, 7
          %v1194 = vsub.s32 2, %v1193
          %v1195 = vrot.slane %v1182, %v1194
          %v1199 = vadd.f32 %v1108, %v1187
          %v1200 = vadd.f32 %v1110, %v1191
          %v1201 = vadd.f32 %v1179, %v1195
          %v1202 = vxor.u32 %v1199, 2147483648
          %v1203 = vxor.u32 %v1200, 2147483648
          %v1204 = vxor.u32 %v1201, 2147483648
          %v1205 = vmul.f32 %v1202, 1.442695
          %v1206 = vpow.pop %v1205
          %v1207 = vmul.f32 %v1203, 1.442695
          %v1208 = vpow.pop %v1207
          %v1209 = vmul.f32 %v1204, 1.442695
          %v1210 = vpow.pop %v1209
          %v1211 = vadd.f32 %v1206, 1.0
          %v1212 = vadd.f32 %v1208, 1.0
          %v1213 = vadd.f32 %v1210, 1.0
          %v1214 = vrcp.pop %v1211
          %v1215 = vmul.f32 1.0, %v1214
          %v1216 = vrcp.pop %v1212
          %v1217 = vmul.f32 1.0, %v1216
          %v1218 = vrcp.pop %v1213
          %v1219 = vmul.f32 1.0, %v1218
          %v1220 = vmul.f32 %v1199, %v1215
          %v1221 = vmul.f32 %v1200, %v1217
          %v1222 = vmul.f32 %v1201, %v1219
          %v1223 = vld [vmem:[#allocation14] sm:$0xff]
          %v1224 = vld [vmem:[#allocation14 + $0x8] sm:$0xff]
          %v1225 = vld [vmem:[#allocation14 + $0x10] sm:$0xff]
          %v1226 = vld [vmem:[#allocation14 + $0x18] sm:$0xff]
          %v1227 = vld [vmem:[#allocation14 + $0x20] sm:$0xff]
          %v1228 = vld [vmem:[#allocation14 + $0x28] sm:$0xff]
          %v1229 = vld [vmem:[#allocation14 + $0x30] sm:$0xff]
          %v1230 = vld [vmem:[#allocation14 + $0x38] sm:$0xff]
          %v1231 = vld [vmem:[#allocation14 + $0x40] sm:$0xff]
          %v1232 = vld [vmem:[#allocation14 + $0x48] sm:$0xff]
          %v1233 = vld [vmem:[#allocation14 + $0x50] sm:$0xff]
          %v1234 = vld [vmem:[#allocation14 + $0x58] sm:$0xff]
          %v1235 = vld [vmem:[#allocation14 + $0x60] sm:$0xff]
          %v1236 = vld [vmem:[#allocation14 + $0x68] sm:$0xff]
          %v1237 = vld [vmem:[#allocation14 + $0x70] sm:$0xff]
          %v1238 = vld [vmem:[#allocation14 + $0x78] sm:$0xff]
          %v1239 = vld [vmem:[#allocation14 + $0x80] sm:$0xff]
          %v1240 = vld [vmem:[#allocation14 + $0x88] sm:$0xff]
          %v1241 = vld [vmem:[#allocation14 + $0x90] sm:$0xff]
          %v1242 = vld [vmem:[#allocation14 + $0x98] sm:$0xff]
          %v1243 = vld [vmem:[#allocation14 + $0xa0] sm:$0xff]
          %v1244 = vld [vmem:[#allocation14 + $0xa8] sm:$0xff]
          %v1245 = vld [vmem:[#allocation14 + $0xb0] sm:$0xff]
          %v1246 = vld [vmem:[#allocation14 + $0xb8] sm:$0xff]
          %v1247 = vld [vmem:[#allocation14 + $0xc0] sm:$0xff]
          %v1248 = vld [vmem:[#allocation14 + $0xc8] sm:$0xff]
          %v1249 = vld [vmem:[#allocation14 + $0xd0] sm:$0xff]
          %v1250 = vld [vmem:[#allocation14 + $0xd8] sm:$0xff]
          %v1251 = vld [vmem:[#allocation14 + $0xe0] sm:$0xff]
          %v1252 = vld [vmem:[#allocation14 + $0xe8] sm:$0xff]
          %v1253 = vld [vmem:[#allocation14 + $0xf0] sm:$0xff]
          %v1254 = vld [vmem:[#allocation14 + $0xf8] sm:$0xff]
          %v1255 = vld [vmem:[#allocation14 + $0x100] sm:$0xff]
          %v1256 = vld [vmem:[#allocation14 + $0x108] sm:$0xff]
          %v1257 = vld [vmem:[#allocation14 + $0x110] sm:$0xff]
          %v1258 = vld [vmem:[#allocation14 + $0x118] sm:$0xff]
          %v1259 = vld [vmem:[#allocation14 + $0x120] sm:$0xff]
          %v1260 = vld [vmem:[#allocation14 + $0x128] sm:$0xff]
          %v1261 = vld [vmem:[#allocation14 + $0x130] sm:$0xff]
          %v1262 = vld [vmem:[#allocation14 + $0x138] sm:$0xff]
          %v1263 = vld [vmem:[#allocation14 + $0x140] sm:$0xff]
          %v1264 = vld [vmem:[#allocation14 + $0x148] sm:$0xff]
          %v1265 = vld [vmem:[#allocation14 + $0x150] sm:$0xff]
          %v1266 = vld [vmem:[#allocation14 + $0x158] sm:$0xff]
          %v1267 = vld [vmem:[#allocation14 + $0x160] sm:$0xff]
          %v1268 = vld [vmem:[#allocation14 + $0x168] sm:$0xff]
          %v1269 = vld [vmem:[#allocation14 + $0x170] sm:$0xff]
          %v1270 = vld [vmem:[#allocation14 + $0x178] sm:$0xff]
          %v1271 = vld [vmem:[#allocation14 + $0x180] sm:$0xff]
          %v1272 = vld [vmem:[#allocation14 + $0x188] sm:$0xff]
          %v1273 = vld [vmem:[#allocation14 + $0x190] sm:$0xff]
          %v1274 = vld [vmem:[#allocation14 + $0x198] sm:$0xff]
          %v1275 = vld [vmem:[#allocation14 + $0x1a0] sm:$0xff]
          %v1276 = vld [vmem:[#allocation14 + $0x1a8] sm:$0xff]
          %v1277 = vld [vmem:[#allocation14 + $0x1b0] sm:$0xff]
          %v1278 = vld [vmem:[#allocation14 + $0x1b8] sm:$0xff]
          %v1279 = vld [vmem:[#allocation14 + $0x1c0] sm:$0xff]
          %v1280 = vld [vmem:[#allocation14 + $0x1c8] sm:$0xff]
          %v1281 = vld [vmem:[#allocation14 + $0x1d0] sm:$0xff]
          %v1282 = vld [vmem:[#allocation14 + $0x1d8] sm:$0xff]
          %v1283 = vld [vmem:[#allocation14 + $0x1e0] sm:$0xff]
          %v1284 = vld [vmem:[#allocation14 + $0x1e8] sm:$0xff]
          %v1285 = vld [vmem:[#allocation14 + $0x1f0] sm:$0xff]
          %v1286 = vld [vmem:[#allocation14 + $0x1f8] sm:$0xff]
          %v1287 = vld [vmem:[#allocation14 + $0x200] sm:$0xff]
          %v1288 = vld [vmem:[#allocation14 + $0x208] sm:$0xff]
          %v1289 = vld [vmem:[#allocation14 + $0x210] sm:$0xff]
          %v1290 = vld [vmem:[#allocation14 + $0x218] sm:$0xff]
          %v1291 = vld [vmem:[#allocation14 + $0x220] sm:$0xff]
          %v1292 = vld [vmem:[#allocation14 + $0x228] sm:$0xff]
          %v1293 = vld [vmem:[#allocation14 + $0x230] sm:$0xff]
          %v1294 = vld [vmem:[#allocation14 + $0x238] sm:$0xff]
          %v1295 = vld [vmem:[#allocation14 + $0x240] sm:$0xff]
          %v1296 = vld [vmem:[#allocation14 + $0x248] sm:$0xff]
          %v1297 = vld [vmem:[#allocation14 + $0x250] sm:$0xff]
          %v1298 = vld [vmem:[#allocation14 + $0x258] sm:$0xff]
          %v1299 = vld [vmem:[#allocation14 + $0x260] sm:$0xff]
          %v1300 = vld [vmem:[#allocation14 + $0x268] sm:$0xff]
          %v1301 = vld [vmem:[#allocation14 + $0x270] sm:$0xff]
          %v1302 = vld [vmem:[#allocation14 + $0x278] sm:$0xff]
          %v1303 = vld [vmem:[#allocation14 + $0x280] sm:$0xff]
          %v1304 = vld [vmem:[#allocation14 + $0x288] sm:$0xff]
          %v1305 = vld [vmem:[#allocation14 + $0x290] sm:$0xff]
          %v1306 = vld [vmem:[#allocation14 + $0x298] sm:$0xff]
          %v1307 = vld [vmem:[#allocation14 + $0x2a0] sm:$0xff]
          %v1308 = vld [vmem:[#allocation14 + $0x2a8] sm:$0xff]
          %v1309 = vld [vmem:[#allocation14 + $0x2b0] sm:$0xff]
          %v1310 = vld [vmem:[#allocation14 + $0x2b8] sm:$0xff]
          %v1311 = vld [vmem:[#allocation14 + $0x2c0] sm:$0xff]
          %v1312 = vld [vmem:[#allocation14 + $0x2c8] sm:$0xff]
          %v1313 = vld [vmem:[#allocation14 + $0x2d0] sm:$0xff]
          %v1314 = vld [vmem:[#allocation14 + $0x2d8] sm:$0xff]
          %v1315 = vld [vmem:[#allocation14 + $0x2e0] sm:$0xff]
          %v1316 = vld [vmem:[#allocation14 + $0x2e8] sm:$0xff]
          %v1317 = vld [vmem:[#allocation14 + $0x2f0] sm:$0xff]
          %v1318 = vld [vmem:[#allocation14 + $0x2f8] sm:$0xff]
          %v1319 = vld [vmem:[#allocation14 + $0x300] sm:$0xff]
          %v1320 = vld [vmem:[#allocation14 + $0x308] sm:$0xff]
          %v1321 = vld [vmem:[#allocation14 + $0x310] sm:$0xff]
          %v1322 = vld [vmem:[#allocation14 + $0x318] sm:$0xff]
          %v1323 = vld [vmem:[#allocation14 + $0x320] sm:$0xff]
          %v1324 = vld [vmem:[#allocation14 + $0x328] sm:$0xff]
          %v1325 = vld [vmem:[#allocation14 + $0x330] sm:$0xff]
          %v1326 = vld [vmem:[#allocation14 + $0x338] sm:$0xff]
          %v1327 = vld [vmem:[#allocation14 + $0x340] sm:$0xff]
          %v1328 = vld [vmem:[#allocation14 + $0x348] sm:$0xff]
          %v1329 = vld [vmem:[#allocation14 + $0x350] sm:$0xff]
          %v1330 = vld [vmem:[#allocation14 + $0x358] sm:$0xff]
          %v1331 = vld [vmem:[#allocation14 + $0x360] sm:$0xff]
          %v1332 = vld [vmem:[#allocation14 + $0x368] sm:$0xff]
          %v1333 = vld [vmem:[#allocation14 + $0x370] sm:$0xff]
          %v1334 = vld [vmem:[#allocation14 + $0x378] sm:$0xff]
          %v1335 = vld [vmem:[#allocation14 + $0x380] sm:$0xff]
          %v1336 = vld [vmem:[#allocation14 + $0x388] sm:$0xff]
          %v1337 = vld [vmem:[#allocation14 + $0x390] sm:$0xff]
          %v1338 = vld [vmem:[#allocation14 + $0x398] sm:$0xff]
          %v1339 = vld [vmem:[#allocation14 + $0x3a0] sm:$0xff]
          %v1340 = vld [vmem:[#allocation14 + $0x3a8] sm:$0xff]
          %v1341 = vld [vmem:[#allocation14 + $0x3b0] sm:$0xff]
          %v1342 = vld [vmem:[#allocation14 + $0x3b8] sm:$0xff]
          %v1343 = vld [vmem:[#allocation14 + $0x3c0] sm:$0xff]
          %v1344 = vld [vmem:[#allocation14 + $0x3c8] sm:$0xff]
          %v1345 = vld [vmem:[#allocation14 + $0x3d0] sm:$0xff]
          %v1346 = vld [vmem:[#allocation14 + $0x3d8] sm:$0xff]
          %v1347 = vld [vmem:[#allocation14 + $0x3e0] sm:$0xff]
          %v1348 = vld [vmem:[#allocation14 + $0x3e8] sm:$0xff]
          %v1349 = vld [vmem:[#allocation14 + $0x3f0] sm:$0xff]
          %v1350 = vld [vmem:[#allocation14 + $0x3f8] sm:$0xff]
          %v1351 = vld [vmem:[#allocation14 + $0x400] sm:$0xff]
          %v1352 = vld [vmem:[#allocation14 + $0x408] sm:$0xff]
          %v1353 = vld [vmem:[#allocation14 + $0x410] sm:$0xff]
          %v1354 = vld [vmem:[#allocation14 + $0x418] sm:$0xff]
          %v1355 = vld [vmem:[#allocation14 + $0x420] sm:$0xff]
          %v1356 = vld [vmem:[#allocation14 + $0x428] sm:$0xff]
          %v1357 = vld [vmem:[#allocation14 + $0x430] sm:$0xff]
          %v1358 = vld [vmem:[#allocation14 + $0x438] sm:$0xff]
          %v1359 = vld [vmem:[#allocation14 + $0x440] sm:$0xff]
          %v1360 = vld [vmem:[#allocation14 + $0x448] sm:$0xff]
          %v1361 = vld [vmem:[#allocation14 + $0x450] sm:$0xff]
          %v1362 = vld [vmem:[#allocation14 + $0x458] sm:$0xff]
          %v1363 = vld [vmem:[#allocation14 + $0x460] sm:$0xff]
          %v1364 = vld [vmem:[#allocation14 + $0x468] sm:$0xff]
          %v1365 = vld [vmem:[#allocation14 + $0x470] sm:$0xff]
          %v1366 = vld [vmem:[#allocation14 + $0x478] sm:$0xff]
          %v1367 = vld [vmem:[#allocation15] sm:$0x7]
          %v1369 = vlaneseq
          %v1370 = vshrl.u32 %v1369, 7
          %v1371 = vsub.s32 0, %v1370
          %v1372 = vrot.slane %v1367, %v1371
          %v1373 = vlaneseq
          %v1374 = vshrl.u32 %v1373, 7
          %v1375 = vsub.s32 1, %v1374
          %v1376 = vrot.slane %v1367, %v1375
          %v1377 = vlaneseq
          %v1378 = vshrl.u32 %v1377, 7
          %v1379 = vsub.s32 2, %v1378
          %v1380 = vrot.slane %v1367, %v1379
          %1384 = vmatprep.subr.mxu0 %v1269
          %1385 = vmatpush1.msra.mxu0 %v1268
          %1386 = vmatprep.subr.mxu0 %v1266
          %1387 = vmatpush1.msra.mxu0 %v1265
          %1388 = vmatprep.subr.mxu0 %v1263
          %1389 = vmatpush1.msra.mxu0 %v1262
          %1390 = vmatprep.subr.mxu0 %v1260
          %1391 = vmatpush1.msra.mxu0 %v1259
          %1392 = vmatprep.subr.mxu0 %v1257
          %1393 = vmatpush1.msra.mxu0 %v1256
          %1394 = vmatprep.subr.mxu0 %v1254
          %1395 = vmatpush1.msra.mxu0 %v1253
          %1396 = vmatprep.subr.mxu0 %v1251
          %1397 = vmatpush1.msra.mxu0 %v1250
          %1398 = vmatprep.subr.mxu0 %v1248
          %1399 = vmatpush1.msra.mxu0 %v1247
          %1400 = vmatprep.subr.mxu0 %v1245
          %1401 = vmatpush1.msra.mxu0 %v1244
          %1402 = vmatprep.subr.mxu0 %v1242
          %1403 = vmatpush1.msra.mxu0 %v1241
          %1404 = vmatprep.subr.mxu0 %v1239
          %1405 = vmatpush1.msra.mxu0 %v1238
          %1406 = vmatprep.subr.mxu0 %v1236
          %1407 = vmatpush1.msra.mxu0 %v1235
          %1408 = vmatprep.subr.mxu0 %v1233
          %1409 = vmatpush1.msra.mxu0 %v1232
          %1410 = vmatprep.subr.mxu0 %v1230
          %1411 = vmatpush1.msra.mxu0 %v1229
          %1412 = vmatprep.subr.mxu0 %v1227
          %1413 = vmatpush1.msra.mxu0 %v1226
          %1414 = vmatprep.subr.mxu0 %v1224
          %1415 = vmatpush1.msra.mxu0 %v1223
          %1416 = vmatprep.subr.mxu0 %v1317
          %1417 = vmatpush2.msra.mxu0 %v1316
          %1418 = vmatprep.subr.mxu0 %v1314
          %1419 = vmatpush2.msra.mxu0 %v1313
          %1420 = vmatprep.subr.mxu0 %v1311
          %1421 = vmatpush2.msra.mxu0 %v1310
          %1422 = vmatprep.subr.mxu0 %v1308
          %1423 = vmatpush2.msra.mxu0 %v1307
          %1424 = vmatprep.subr.mxu0 %v1305
          %1425 = vmatpush2.msra.mxu0 %v1304
          %1426 = vmatprep.subr.mxu0 %v1302
          %1427 = vmatpush2.msra.mxu0 %v1301
          %1428 = vmatprep.subr.mxu0 %v1299
          %1429 = vmatpush2.msra.mxu0 %v1298
          %1430 = vmatprep.subr.mxu0 %v1296
          %1431 = vmatpush2.msra.mxu0 %v1295
          %1432 = vmatprep.subr.mxu0 %v1293
          %1433 = vmatpush2.msra.mxu0 %v1292
          %1434 = vmatprep.subr.mxu0 %v1290
          %1435 = vmatpush2.msra.mxu0 %v1289
          %1436 = vmatprep.subr.mxu0 %v1287
          %1437 = vmatpush2.msra.mxu0 %v1286
          %1438 = vmatprep.subr.mxu0 %v1284
          %1439 = vmatpush2.msra.mxu0 %v1283
          %1440 = vmatprep.subr.mxu0 %v1281
          %1441 = vmatpush2.msra.mxu0 %v1280
          %1442 = vmatprep.subr.mxu0 %v1278
          %1443 = vmatpush2.msra.mxu0 %v1277
          %1444 = vmatprep.subr.mxu0 %v1275
          %1445 = vmatpush2.msra.mxu0 %v1274
          %1446 = vmatprep.subr.mxu0 %v1272
          %1447 = vmatpush2.msra.mxu0 %v1271
          %1448 = vmatprep.mubr.f32.mxu0 %v1221
          %1449 = vmatmul.mubr.f32.gmra.mxu0 %v1220
          %v1450 = vpop.f32.mrf.mxu0
          %v1451 = vadd.f32 %v1372, %v1450
          %v1452 = vpop.f32.mrf.mxu0
          %v1453 = vadd.f32 %v1376, %v1452
          %1454 = vdwg.mxu0
          %1455 = vmatprep.subr.mxu0 %v1365
          %1456 = vmatpush1.msra.mxu0 %v1364
          %1457 = vmatprep.subr.mxu0 %v1362
          %1458 = vmatpush1.msra.mxu0 %v1361
          %1459 = vmatprep.subr.mxu0 %v1359
          %1460 = vmatpush1.msra.mxu0 %v1358
          %1461 = vmatprep.subr.mxu0 %v1356
          %1462 = vmatpush1.msra.mxu0 %v1355
          %1463 = vmatprep.subr.mxu0 %v1353
          %1464 = vmatpush1.msra.mxu0 %v1352
          %1465 = vmatprep.subr.mxu0 %v1350
          %1466 = vmatpush1.msra.mxu0 %v1349
          %1467 = vmatprep.subr.mxu0 %v1347
          %1468 = vmatpush1.msra.mxu0 %v1346
          %1469 = vmatprep.subr.mxu0 %v1344
          %1470 = vmatpush1.msra.mxu0 %v1343
          %1471 = vmatprep.subr.mxu0 %v1341
          %1472 = vmatpush1.msra.mxu0 %v1340
          %1473 = vmatprep.subr.mxu0 %v1338
          %1474 = vmatpush1.msra.mxu0 %v1337
          %1475 = vmatprep.subr.mxu0 %v1335
          %1476 = vmatpush1.msra.mxu0 %v1334
          %1477 = vmatprep.subr.mxu0 %v1332
          %1478 = vmatpush1.msra.mxu0 %v1331
          %1479 = vmatprep.subr.mxu0 %v1329
          %1480 = vmatpush1.msra.mxu0 %v1328
          %1481 = vmatprep.subr.mxu0 %v1326
          %1482 = vmatpush1.msra.mxu0 %v1325
          %1483 = vmatprep.subr.mxu0 %v1323
          %1484 = vmatpush1.msra.mxu0 %v1322
          %1485 = vmatprep.subr.mxu0 %v1320
          %1486 = vmatpush1.msra.mxu0 %v1319
          %1487 = vmatprep.subr.mxu0 0.0
          %1488 = vmatpush2.msra.mxu0 0.0
          %1489 = vmatprep.subr.mxu0 0.0
          %1490 = vmatpush2.msra.mxu0 0.0
          %1491 = vmatprep.subr.mxu0 0.0
          %1492 = vmatpush2.msra.mxu0 0.0
          %1493 = vmatprep.subr.mxu0 0.0
          %1494 = vmatpush2.msra.mxu0 0.0
          %1495 = vmatprep.subr.mxu0 0.0
          %1496 = vmatpush2.msra.mxu0 0.0
          %1497 = vmatprep.subr.mxu0 0.0
          %1498 = vmatpush2.msra.mxu0 0.0
          %1499 = vmatprep.subr.mxu0 0.0
          %1500 = vmatpush2.msra.mxu0 0.0
          %1501 = vmatprep.subr.mxu0 0.0
          %1502 = vmatpush2.msra.mxu0 0.0
          %1503 = vmatprep.subr.mxu0 0.0
          %1504 = vmatpush2.msra.mxu0 0.0
          %1505 = vmatprep.subr.mxu0 0.0
          %1506 = vmatpush2.msra.mxu0 0.0
          %1507 = vmatprep.subr.mxu0 0.0
          %1508 = vmatpush2.msra.mxu0 0.0
          %1509 = vmatprep.subr.mxu0 0.0
          %1510 = vmatpush2.msra.mxu0 0.0
          %1511 = vmatprep.subr.mxu0 0.0
          %1512 = vmatpush2.msra.mxu0 0.0
          %1513 = vmatprep.subr.mxu0 0.0
          %1514 = vmatpush2.msra.mxu0 0.0
          %1515 = vmatprep.subr.mxu0 0.0
          %1516 = vmatpush2.msra.mxu0 0.0
          %1517 = vmatprep.subr.mxu0 0.0
          %1518 = vmatpush2.msra.mxu0 0.0
          %1519 = vmatprep.mubr.f32.mxu0 0.0
          %1520 = vmatmul.mubr.f32.gmra.mxu0 %v1222
          %v1521 = vpop.f32.mrf.mxu0
          %v1522 = vadd.f32 %v1451, %v1521
          %v1523 = vpop.f32.mrf.mxu0
          %v1524 = vadd.f32 %v1453, %v1523
          %1525 = vdwg.mxu0
          %1526 = vmatprep.subr.mxu0 0.0
          %1527 = vmatpush1.msra.mxu0 %v1270
          %1528 = vmatprep.subr.mxu0 0.0
          %1529 = vmatpush1.msra.mxu0 %v1267
          %1530 = vmatprep.subr.mxu0 0.0
          %1531 = vmatpush1.msra.mxu0 %v1264
          %1532 = vmatprep.subr.mxu0 0.0
          %1533 = vmatpush1.msra.mxu0 %v1261
          %1534 = vmatprep.subr.mxu0 0.0
          %1535 = vmatpush1.msra.mxu0 %v1258
          %1536 = vmatprep.subr.mxu0 0.0
          %1537 = vmatpush1.msra.mxu0 %v1255
          %1538 = vmatprep.subr.mxu0 0.0
          %1539 = vmatpush1.msra.mxu0 %v1252
          %1540 = vmatprep.subr.mxu0 0.0
          %1541 = vmatpush1.msra.mxu0 %v1249
          %1542 = vmatprep.subr.mxu0 0.0
          %1543 = vmatpush1.msra.mxu0 %v1246
          %1544 = vmatprep.subr.mxu0 0.0
          %1545 = vmatpush1.msra.mxu0 %v1243
          %1546 = vmatprep.subr.mxu0 0.0
          %1547 = vmatpush1.msra.mxu0 %v1240
          %1548 = vmatprep.subr.mxu0 0.0
          %1549 = vmatpush1.msra.mxu0 %v1237
          %1550 = vmatprep.subr.mxu0 0.0
          %1551 = vmatpush1.msra.mxu0 %v1234
          %1552 = vmatprep.subr.mxu0 0.0
          %1553 = vmatpush1.msra.mxu0 %v1231
          %1554 = vmatprep.subr.mxu0 0.0
          %1555 = vmatpush1.msra.mxu0 %v1228
          %1556 = vmatprep.subr.mxu0 0.0
          %1557 = vmatpush1.msra.mxu0 %v1225
          %1558 = vmatprep.subr.mxu0 0.0
          %1559 = vmatpush2.msra.mxu0 %v1318
          %1560 = vmatprep.subr.mxu0 0.0
          %1561 = vmatpush2.msra.mxu0 %v1315
          %1562 = vmatprep.subr.mxu0 0.0
          %1563 = vmatpush2.msra.mxu0 %v1312
          %1564 = vmatprep.subr.mxu0 0.0
          %1565 = vmatpush2.msra.mxu0 %v1309
          %1566 = vmatprep.subr.mxu0 0.0
          %1567 = vmatpush2.msra.mxu0 %v1306
          %1568 = vmatprep.subr.mxu0 0.0
          %1569 = vmatpush2.msra.mxu0 %v1303
          %1570 = vmatprep.subr.mxu0 0.0
          %1571 = vmatpush2.msra.mxu0 %v1300
          %1572 = vmatprep.subr.mxu0 0.0
          %1573 = vmatpush2.msra.mxu0 %v1297
          %1574 = vmatprep.subr.mxu0 0.0
          %1575 = vmatpush2.msra.mxu0 %v1294
          %1576 = vmatprep.subr.mxu0 0.0
          %1577 = vmatpush2.msra.mxu0 %v1291
          %1578 = vmatprep.subr.mxu0 0.0
          %1579 = vmatpush2.msra.mxu0 %v1288
          %1580 = vmatprep.subr.mxu0 0.0
          %1581 = vmatpush2.msra.mxu0 %v1285
          %1582 = vmatprep.subr.mxu0 0.0
          %1583 = vmatpush2.msra.mxu0 %v1282
          %1584 = vmatprep.subr.mxu0 0.0
          %1585 = vmatpush2.msra.mxu0 %v1279
          %1586 = vmatprep.subr.mxu0 0.0
          %1587 = vmatpush2.msra.mxu0 %v1276
          %1588 = vmatprep.subr.mxu0 0.0
          %1589 = vmatpush2.msra.mxu0 %v1273
          %1590 = vmatprep.mubr.f32.mxu0 %v1221
          %1591 = vmatmul.mubr.f32.gmra.mxu0 %v1220
          %v1592 = vpop.f32.mrf.mxu0
          %v1593 = vadd.f32 %v1380, %v1592
          %v1594 = vpop.f32.mrf.mxu0
          %1595 = vdwg.mxu0
          %1596 = vmatprep.subr.mxu0 0.0
          %1597 = vmatpush1.msra.mxu0 %v1366
          %1598 = vmatprep.subr.mxu0 0.0
          %1599 = vmatpush1.msra.mxu0 %v1363
          %1600 = vmatprep.subr.mxu0 0.0
          %1601 = vmatpush1.msra.mxu0 %v1360
          %1602 = vmatprep.subr.mxu0 0.0
          %1603 = vmatpush1.msra.mxu0 %v1357
          %1604 = vmatprep.subr.mxu0 0.0
          %1605 = vmatpush1.msra.mxu0 %v1354
          %1606 = vmatprep.subr.mxu0 0.0
          %1607 = vmatpush1.msra.mxu0 %v1351
          %1608 = vmatprep.subr.mxu0 0.0
          %1609 = vmatpush1.msra.mxu0 %v1348
          %1610 = vmatprep.subr.mxu0 0.0
          %1611 = vmatpush1.msra.mxu0 %v1345
          %1612 = vmatprep.subr.mxu0 0.0
          %1613 = vmatpush1.msra.mxu0 %v1342
          %1614 = vmatprep.subr.mxu0 0.0
          %1615 = vmatpush1.msra.mxu0 %v1339
          %1616 = vmatprep.subr.mxu0 0.0
          %1617 = vmatpush1.msra.mxu0 %v1336
          %1618 = vmatprep.subr.mxu0 0.0
          %1619 = vmatpush1.msra.mxu0 %v1333
          %1620 = vmatprep.subr.mxu0 0.0
          %1621 = vmatpush1.msra.mxu0 %v1330
          %1622 = vmatprep.subr.mxu0 0.0
          %1623 = vmatpush1.msra.mxu0 %v1327
          %1624 = vmatprep.subr.mxu0 0.0
          %1625 = vmatpush1.msra.mxu0 %v1324
          %1626 = vmatprep.subr.mxu0 0.0
          %1627 = vmatpush1.msra.mxu0 %v1321
          %1628 = vmatprep.subr.mxu0 0.0
          %1629 = vmatpush2.msra.mxu0 0.0
          %1630 = vmatprep.subr.mxu0 0.0
          %1631 = vmatpush2.msra.mxu0 0.0
          %1632 = vmatprep.subr.mxu0 0.0
          %1633 = vmatpush2.msra.mxu0 0.0
          %1634 = vmatprep.subr.mxu0 0.0
          %1635 = vmatpush2.msra.mxu0 0.0
          %1636 = vmatprep.subr.mxu0 0.0
          %1637 = vmatpush2.msra.mxu0 0.0
          %1638 = vmatprep.subr.mxu0 0.0
          %1639 = vmatpush2.msra.mxu0 0.0
          %1640 = vmatprep.subr.mxu0 0.0
          %1641 = vmatpush2.msra.mxu0 0.0
          %1642 = vmatprep.subr.mxu0 0.0
          %1643 = vmatpush2.msra.mxu0 0.0
          %1644 = vmatprep.subr.mxu0 0.0
          %1645 = vmatpush2.msra.mxu0 0.0
          %1646 = vmatprep.subr.mxu0 0.0
          %1647 = vmatpush2.msra.mxu0 0.0
          %1648 = vmatprep.subr.mxu0 0.0
          %1649 = vmatpush2.msra.mxu0 0.0
          %1650 = vmatprep.subr.mxu0 0.0
          %1651 = vmatpush2.msra.mxu0 0.0
          %1652 = vmatprep.subr.mxu0 0.0
          %1653 = vmatpush2.msra.mxu0 0.0
          %1654 = vmatprep.subr.mxu0 0.0
          %1655 = vmatpush2.msra.mxu0 0.0
          %1656 = vmatprep.subr.mxu0 0.0
          %1657 = vmatpush2.msra.mxu0 0.0
          %1658 = vmatprep.subr.mxu0 0.0
          %1659 = vmatpush2.msra.mxu0 0.0
          %1660 = vmatprep.mubr.f32.mxu0 0.0
          %1661 = vmatmul.mubr.f32.gmra.mxu0 %v1222
          %v1662 = vpop.f32.mrf.mxu0
          %v1663 = vadd.f32 %v1593, %v1662
          %v1664 = vpop.f32.mrf.mxu0
          %1665 = vdwg.mxu0
          %v1669 = vcombine.low %v1522, %v1524
          %v1671 = vunpack.c.l.s4 1966171168
          %v1672 = vunpack.c.0.s8 %v1671
          %v1673 = vlaneseq
          %v1674 = vshrl.u32 %v1673, 7
          %v1675 = vsub.s32 %v1672, %v1674
          %v1676 = vrot.slane %v1669, %v1675
          %v1678 = vunpack.c.l.s4 1966171168
          %v1679 = vunpack.c.0.s8 %v1678
          %v1680 = vlaneseq
          %v1681 = vshrl.u32 %v1680, 7
          %v1682 = vsub.s32 %v1679, %v1681
          %v1683 = vrot.slane %v1663, %v1682
          %v1684 = vcombine.low %v1676, %v1683
          %v1686 = vunpack.c.l.s4 1966171168
          %v1687 = vunpack.c.0.s8 %v1686
          %v1688 = vlaneseq
          %v1689 = vshrl.u32 %v1688, 7
          %v1690 = vsub.s32 %v1687, %v1689
          %v1691 = vrot.slane %v1684, %v1690
          %v1693 = vlaneseq
          %vm1694 = vcmp.ge.s32.totalorder %v1693, 0
          %vm1695 = vcmp.lt.s32.totalorder %v1693, 384
          %vm1696 = vmand %vm1694, %vm1695
          %1697 = vst.msk [vmem:[#allocation2] sm:$0x7] %vm1696, %v1691
          %v1698 = vxor.u32 %v1522, 2147483648
          %v1699 = vxor.u32 %v1524, 2147483648
          %v1700 = vxor.u32 %v1663, 2147483648
          %v1701 = vmul.f32 %v1698, 1.442695
          %v1702 = vpow.pop %v1701
          %v1703 = vmul.f32 %v1699, 1.442695
          %v1704 = vpow.pop %v1703
          %v1705 = vmul.f32 %v1700, 1.442695
          %v1706 = vpow.pop %v1705
          %v1707 = vadd.f32 %v1702, 1.0
          %v1708 = vadd.f32 %v1704, 1.0
          %v1709 = vadd.f32 %v1706, 1.0
          %v1710 = vrcp.pop %v1707
          %v1711 = vmul.f32 1.0, %v1710
          %v1712 = vrcp.pop %v1708
          %v1713 = vmul.f32 1.0, %v1712
          %v1714 = vrcp.pop %v1709
          %v1715 = vmul.f32 1.0, %v1714
          %v1716 = vmul.f32 %v1522, %v1711
          %v1717 = vmul.f32 %v1524, %v1713
          %v1718 = vmul.f32 %v1663, %v1715
          %v1719 = vld [vmem:[#allocation17] sm:$0xff]
          %v1720 = vld [vmem:[#allocation17 + $0x8] sm:$0xff]
          %v1721 = vld [vmem:[#allocation17 + $0x10] sm:$0xff]
          %v1722 = vld [vmem:[#allocation17 + $0x18] sm:$0xff]
          %v1723 = vld [vmem:[#allocation17 + $0x20] sm:$0xff]
          %v1724 = vld [vmem:[#allocation17 + $0x28] sm:$0xff]
          %v1725 = vld [vmem:[#allocation17 + $0x30] sm:$0xff]
          %v1726 = vld [vmem:[#allocation17 + $0x38] sm:$0xff]
          %v1727 = vld [vmem:[#allocation17 + $0x40] sm:$0xff]
          %v1728 = vld [vmem:[#allocation17 + $0x48] sm:$0xff]
          %v1729 = vld [vmem:[#allocation17 + $0x50] sm:$0xff]
          %v1730 = vld [vmem:[#allocation17 + $0x58] sm:$0xff]
          %v1731 = vld [vmem:[#allocation17 + $0x60] sm:$0xff]
          %v1732 = vld [vmem:[#allocation17 + $0x68] sm:$0xff]
          %v1733 = vld [vmem:[#allocation17 + $0x70] sm:$0xff]
          %v1734 = vld [vmem:[#allocation17 + $0x78] sm:$0xff]
          %v1735 = vld [vmem:[#allocation17 + $0x80] sm:$0xff]
          %v1736 = vld [vmem:[#allocation17 + $0x88] sm:$0xff]
          %v1737 = vld [vmem:[#allocation17 + $0x90] sm:$0xff]
          %v1738 = vld [vmem:[#allocation17 + $0x98] sm:$0xff]
          %v1739 = vld [vmem:[#allocation17 + $0xa0] sm:$0xff]
          %v1740 = vld [vmem:[#allocation17 + $0xa8] sm:$0xff]
          %v1741 = vld [vmem:[#allocation17 + $0xb0] sm:$0xff]
          %v1742 = vld [vmem:[#allocation17 + $0xb8] sm:$0xff]
          %v1743 = vld [vmem:[#allocation17 + $0xc0] sm:$0xff]
          %v1744 = vld [vmem:[#allocation17 + $0xc8] sm:$0xff]
          %v1745 = vld [vmem:[#allocation17 + $0xd0] sm:$0xff]
          %v1746 = vld [vmem:[#allocation17 + $0xd8] sm:$0xff]
          %v1747 = vld [vmem:[#allocation17 + $0xe0] sm:$0xff]
          %v1748 = vld [vmem:[#allocation17 + $0xe8] sm:$0xff]
          %v1749 = vld [vmem:[#allocation17 + $0xf0] sm:$0xff]
          %v1750 = vld [vmem:[#allocation17 + $0xf8] sm:$0xff]
          %v1751 = vld [vmem:[#allocation17 + $0x100] sm:$0xff]
          %v1752 = vld [vmem:[#allocation17 + $0x108] sm:$0xff]
          %v1753 = vld [vmem:[#allocation17 + $0x110] sm:$0xff]
          %v1754 = vld [vmem:[#allocation17 + $0x118] sm:$0xff]
          %v1755 = vld [vmem:[#allocation17 + $0x120] sm:$0xff]
          %v1756 = vld [vmem:[#allocation17 + $0x128] sm:$0xff]
          %v1757 = vld [vmem:[#allocation17 + $0x130] sm:$0xff]
          %v1758 = vld [vmem:[#allocation17 + $0x138] sm:$0xff]
          %v1759 = vld [vmem:[#allocation17 + $0x140] sm:$0xff]
          %v1760 = vld [vmem:[#allocation17 + $0x148] sm:$0xff]
          %v1761 = vld [vmem:[#allocation17 + $0x150] sm:$0xff]
          %v1762 = vld [vmem:[#allocation17 + $0x158] sm:$0xff]
          %v1763 = vld [vmem:[#allocation17 + $0x160] sm:$0xff]
          %v1764 = vld [vmem:[#allocation17 + $0x168] sm:$0xff]
          %v1765 = vld [vmem:[#allocation17 + $0x170] sm:$0xff]
          %v1766 = vld [vmem:[#allocation17 + $0x178] sm:$0xff]
          %v1767 = vld [vmem:[#allocation17 + $0x180] sm:$0xff]
          %v1768 = vld [vmem:[#allocation17 + $0x188] sm:$0xff]
          %v1769 = vld [vmem:[#allocation17 + $0x190] sm:$0xff]
          %v1770 = vld [vmem:[#allocation17 + $0x198] sm:$0xff]
          %v1771 = vld [vmem:[#allocation17 + $0x1a0] sm:$0xff]
          %v1772 = vld [vmem:[#allocation17 + $0x1a8] sm:$0xff]
          %v1773 = vld [vmem:[#allocation17 + $0x1b0] sm:$0xff]
          %v1774 = vld [vmem:[#allocation17 + $0x1b8] sm:$0xff]
          %v1775 = vld [vmem:[#allocation17 + $0x1c0] sm:$0xff]
          %v1776 = vld [vmem:[#allocation17 + $0x1c8] sm:$0xff]
          %v1777 = vld [vmem:[#allocation17 + $0x1d0] sm:$0xff]
          %v1778 = vld [vmem:[#allocation17 + $0x1d8] sm:$0xff]
          %v1779 = vld [vmem:[#allocation17 + $0x1e0] sm:$0xff]
          %v1780 = vld [vmem:[#allocation17 + $0x1e8] sm:$0xff]
          %v1781 = vld [vmem:[#allocation17 + $0x1f0] sm:$0xff]
          %v1782 = vld [vmem:[#allocation17 + $0x1f8] sm:$0xff]
          %v1783 = vld [vmem:[#allocation17 + $0x200] sm:$0xff]
          %v1784 = vld [vmem:[#allocation17 + $0x208] sm:$0xff]
          %v1785 = vld [vmem:[#allocation17 + $0x210] sm:$0xff]
          %v1786 = vld [vmem:[#allocation17 + $0x218] sm:$0xff]
          %v1787 = vld [vmem:[#allocation17 + $0x220] sm:$0xff]
          %v1788 = vld [vmem:[#allocation17 + $0x228] sm:$0xff]
          %v1789 = vld [vmem:[#allocation17 + $0x230] sm:$0xff]
          %v1790 = vld [vmem:[#allocation17 + $0x238] sm:$0xff]
          %v1791 = vld [vmem:[#allocation17 + $0x240] sm:$0xff]
          %v1792 = vld [vmem:[#allocation17 + $0x248] sm:$0xff]
          %v1793 = vld [vmem:[#allocation17 + $0x250] sm:$0xff]
          %v1794 = vld [vmem:[#allocation17 + $0x258] sm:$0xff]
          %v1795 = vld [vmem:[#allocation17 + $0x260] sm:$0xff]
          %v1796 = vld [vmem:[#allocation17 + $0x268] sm:$0xff]
          %v1797 = vld [vmem:[#allocation17 + $0x270] sm:$0xff]
          %v1798 = vld [vmem:[#allocation17 + $0x278] sm:$0xff]
          %v1799 = vld [vmem:[#allocation17 + $0x280] sm:$0xff]
          %v1800 = vld [vmem:[#allocation17 + $0x288] sm:$0xff]
          %v1801 = vld [vmem:[#allocation17 + $0x290] sm:$0xff]
          %v1802 = vld [vmem:[#allocation17 + $0x298] sm:$0xff]
          %v1803 = vld [vmem:[#allocation17 + $0x2a0] sm:$0xff]
          %v1804 = vld [vmem:[#allocation17 + $0x2a8] sm:$0xff]
          %v1805 = vld [vmem:[#allocation17 + $0x2b0] sm:$0xff]
          %v1806 = vld [vmem:[#allocation17 + $0x2b8] sm:$0xff]
          %v1807 = vld [vmem:[#allocation17 + $0x2c0] sm:$0xff]
          %v1808 = vld [vmem:[#allocation17 + $0x2c8] sm:$0xff]
          %v1809 = vld [vmem:[#allocation17 + $0x2d0] sm:$0xff]
          %v1810 = vld [vmem:[#allocation17 + $0x2d8] sm:$0xff]
          %v1811 = vld [vmem:[#allocation17 + $0x2e0] sm:$0xff]
          %v1812 = vld [vmem:[#allocation17 + $0x2e8] sm:$0xff]
          %v1813 = vld [vmem:[#allocation17 + $0x2f0] sm:$0xff]
          %v1814 = vld [vmem:[#allocation17 + $0x2f8] sm:$0xff]
          %v1815 = vld [vmem:[#allocation17 + $0x300] sm:$0xff]
          %v1816 = vld [vmem:[#allocation17 + $0x308] sm:$0xff]
          %v1817 = vld [vmem:[#allocation17 + $0x310] sm:$0xff]
          %v1818 = vld [vmem:[#allocation17 + $0x318] sm:$0xff]
          %v1819 = vld [vmem:[#allocation17 + $0x320] sm:$0xff]
          %v1820 = vld [vmem:[#allocation17 + $0x328] sm:$0xff]
          %v1821 = vld [vmem:[#allocation17 + $0x330] sm:$0xff]
          %v1822 = vld [vmem:[#allocation17 + $0x338] sm:$0xff]
          %v1823 = vld [vmem:[#allocation17 + $0x340] sm:$0xff]
          %v1824 = vld [vmem:[#allocation17 + $0x348] sm:$0xff]
          %v1825 = vld [vmem:[#allocation17 + $0x350] sm:$0xff]
          %v1826 = vld [vmem:[#allocation17 + $0x358] sm:$0xff]
          %v1827 = vld [vmem:[#allocation17 + $0x360] sm:$0xff]
          %v1828 = vld [vmem:[#allocation17 + $0x368] sm:$0xff]
          %v1829 = vld [vmem:[#allocation17 + $0x370] sm:$0xff]
          %v1830 = vld [vmem:[#allocation17 + $0x378] sm:$0xff]
          %v1831 = vld [vmem:[#allocation17 + $0x380] sm:$0xff]
          %v1832 = vld [vmem:[#allocation17 + $0x388] sm:$0xff]
          %v1833 = vld [vmem:[#allocation17 + $0x390] sm:$0xff]
          %v1834 = vld [vmem:[#allocation17 + $0x398] sm:$0xff]
          %v1835 = vld [vmem:[#allocation17 + $0x3a0] sm:$0xff]
          %v1836 = vld [vmem:[#allocation17 + $0x3a8] sm:$0xff]
          %v1837 = vld [vmem:[#allocation17 + $0x3b0] sm:$0xff]
          %v1838 = vld [vmem:[#allocation17 + $0x3b8] sm:$0xff]
          %v1839 = vld [vmem:[#allocation17 + $0x3c0] sm:$0xff]
          %v1840 = vld [vmem:[#allocation17 + $0x3c8] sm:$0xff]
          %v1841 = vld [vmem:[#allocation17 + $0x3d0] sm:$0xff]
          %v1842 = vld [vmem:[#allocation17 + $0x3d8] sm:$0xff]
          %v1843 = vld [vmem:[#allocation17 + $0x3e0] sm:$0xff]
          %v1844 = vld [vmem:[#allocation17 + $0x3e8] sm:$0xff]
          %v1845 = vld [vmem:[#allocation17 + $0x3f0] sm:$0xff]
          %v1846 = vld [vmem:[#allocation17 + $0x3f8] sm:$0xff]
          %v1847 = vld [vmem:[#allocation17 + $0x400] sm:$0xff]
          %v1848 = vld [vmem:[#allocation17 + $0x408] sm:$0xff]
          %v1849 = vld [vmem:[#allocation17 + $0x410] sm:$0xff]
          %v1850 = vld [vmem:[#allocation17 + $0x418] sm:$0xff]
          %v1851 = vld [vmem:[#allocation17 + $0x420] sm:$0xff]
          %v1852 = vld [vmem:[#allocation17 + $0x428] sm:$0xff]
          %v1853 = vld [vmem:[#allocation17 + $0x430] sm:$0xff]
          %v1854 = vld [vmem:[#allocation17 + $0x438] sm:$0xff]
          %v1855 = vld [vmem:[#allocation17 + $0x440] sm:$0xff]
          %v1856 = vld [vmem:[#allocation17 + $0x448] sm:$0xff]
          %v1857 = vld [vmem:[#allocation17 + $0x450] sm:$0xff]
          %v1858 = vld [vmem:[#allocation17 + $0x458] sm:$0xff]
          %v1859 = vld [vmem:[#allocation17 + $0x460] sm:$0xff]
          %v1860 = vld [vmem:[#allocation17 + $0x468] sm:$0xff]
          %v1861 = vld [vmem:[#allocation17 + $0x470] sm:$0xff]
          %v1862 = vld [vmem:[#allocation17 + $0x478] sm:$0xff]
          %v1863 = vld [vmem:[#allocation17 + $0x480] sm:$0xff]
          %v1864 = vld [vmem:[#allocation17 + $0x488] sm:$0xff]
          %v1865 = vld [vmem:[#allocation17 + $0x490] sm:$0xff]
          %v1866 = vld [vmem:[#allocation17 + $0x498] sm:$0xff]
          %v1867 = vld [vmem:[#allocation17 + $0x4a0] sm:$0xff]
          %v1868 = vld [vmem:[#allocation17 + $0x4a8] sm:$0xff]
          %v1869 = vld [vmem:[#allocation17 + $0x4b0] sm:$0xff]
          %v1870 = vld [vmem:[#allocation17 + $0x4b8] sm:$0xff]
          %v1871 = vld [vmem:[#allocation17 + $0x4c0] sm:$0xff]
          %v1872 = vld [vmem:[#allocation17 + $0x4c8] sm:$0xff]
          %v1873 = vld [vmem:[#allocation17 + $0x4d0] sm:$0xff]
          %v1874 = vld [vmem:[#allocation17 + $0x4d8] sm:$0xff]
          %v1875 = vld [vmem:[#allocation17 + $0x4e0] sm:$0xff]
          %v1876 = vld [vmem:[#allocation17 + $0x4e8] sm:$0xff]
          %v1877 = vld [vmem:[#allocation17 + $0x4f0] sm:$0xff]
          %v1878 = vld [vmem:[#allocation17 + $0x4f8] sm:$0xff]
          %v1879 = vld [vmem:[#allocation17 + $0x500] sm:$0xff]
          %v1880 = vld [vmem:[#allocation17 + $0x508] sm:$0xff]
          %v1881 = vld [vmem:[#allocation17 + $0x510] sm:$0xff]
          %v1882 = vld [vmem:[#allocation17 + $0x518] sm:$0xff]
          %v1883 = vld [vmem:[#allocation17 + $0x520] sm:$0xff]
          %v1884 = vld [vmem:[#allocation17 + $0x528] sm:$0xff]
          %v1885 = vld [vmem:[#allocation17 + $0x530] sm:$0xff]
          %v1886 = vld [vmem:[#allocation17 + $0x538] sm:$0xff]
          %v1887 = vld [vmem:[#allocation17 + $0x540] sm:$0xff]
          %v1888 = vld [vmem:[#allocation17 + $0x548] sm:$0xff]
          %v1889 = vld [vmem:[#allocation17 + $0x550] sm:$0xff]
          %v1890 = vld [vmem:[#allocation17 + $0x558] sm:$0xff]
          %v1891 = vld [vmem:[#allocation17 + $0x560] sm:$0xff]
          %v1892 = vld [vmem:[#allocation17 + $0x568] sm:$0xff]
          %v1893 = vld [vmem:[#allocation17 + $0x570] sm:$0xff]
          %v1894 = vld [vmem:[#allocation17 + $0x578] sm:$0xff]
          %v1895 = vld [vmem:[#allocation17 + $0x580] sm:$0xff]
          %v1896 = vld [vmem:[#allocation17 + $0x588] sm:$0xff]
          %v1897 = vld [vmem:[#allocation17 + $0x590] sm:$0xff]
          %v1898 = vld [vmem:[#allocation17 + $0x598] sm:$0xff]
          %v1899 = vld [vmem:[#allocation17 + $0x5a0] sm:$0xff]
          %v1900 = vld [vmem:[#allocation17 + $0x5a8] sm:$0xff]
          %v1901 = vld [vmem:[#allocation17 + $0x5b0] sm:$0xff]
          %v1902 = vld [vmem:[#allocation17 + $0x5b8] sm:$0xff]
          %v1903 = vld [vmem:[#allocation17 + $0x5c0] sm:$0xff]
          %v1904 = vld [vmem:[#allocation17 + $0x5c8] sm:$0xff]
          %v1905 = vld [vmem:[#allocation17 + $0x5d0] sm:$0xff]
          %v1906 = vld [vmem:[#allocation17 + $0x5d8] sm:$0xff]
          %v1907 = vld [vmem:[#allocation17 + $0x5e0] sm:$0xff]
          %v1908 = vld [vmem:[#allocation17 + $0x5e8] sm:$0xff]
          %v1909 = vld [vmem:[#allocation17 + $0x5f0] sm:$0xff]
          %v1910 = vld [vmem:[#allocation17 + $0x5f8] sm:$0xff]
          %v1911 = vld [vmem:[#allocation17 + $0x600] sm:$0xff]
          %v1912 = vld [vmem:[#allocation17 + $0x608] sm:$0xff]
          %v1913 = vld [vmem:[#allocation17 + $0x610] sm:$0xff]
          %v1914 = vld [vmem:[#allocation17 + $0x618] sm:$0xff]
          %v1915 = vld [vmem:[#allocation17 + $0x620] sm:$0xff]
          %v1916 = vld [vmem:[#allocation17 + $0x628] sm:$0xff]
          %v1917 = vld [vmem:[#allocation17 + $0x630] sm:$0xff]
          %v1918 = vld [vmem:[#allocation17 + $0x638] sm:$0xff]
          %v1919 = vld [vmem:[#allocation17 + $0x640] sm:$0xff]
          %v1920 = vld [vmem:[#allocation17 + $0x648] sm:$0xff]
          %v1921 = vld [vmem:[#allocation17 + $0x650] sm:$0xff]
          %v1922 = vld [vmem:[#allocation17 + $0x658] sm:$0xff]
          %v1923 = vld [vmem:[#allocation17 + $0x660] sm:$0xff]
          %v1924 = vld [vmem:[#allocation17 + $0x668] sm:$0xff]
          %v1925 = vld [vmem:[#allocation17 + $0x670] sm:$0xff]
          %v1926 = vld [vmem:[#allocation17 + $0x678] sm:$0xff]
          %v1927 = vld [vmem:[#allocation17 + $0x680] sm:$0xff]
          %v1928 = vld [vmem:[#allocation17 + $0x688] sm:$0xff]
          %v1929 = vld [vmem:[#allocation17 + $0x690] sm:$0xff]
          %v1930 = vld [vmem:[#allocation17 + $0x698] sm:$0xff]
          %v1931 = vld [vmem:[#allocation17 + $0x6a0] sm:$0xff]
          %v1932 = vld [vmem:[#allocation17 + $0x6a8] sm:$0xff]
          %v1933 = vld [vmem:[#allocation17 + $0x6b0] sm:$0xff]
          %v1934 = vld [vmem:[#allocation17 + $0x6b8] sm:$0xff]
          %v1935 = vld [vmem:[#allocation17 + $0x6c0] sm:$0xff]
          %v1936 = vld [vmem:[#allocation17 + $0x6c8] sm:$0xff]
          %v1937 = vld [vmem:[#allocation17 + $0x6d0] sm:$0xff]
          %v1938 = vld [vmem:[#allocation17 + $0x6d8] sm:$0xff]
          %v1939 = vld [vmem:[#allocation17 + $0x6e0] sm:$0xff]
          %v1940 = vld [vmem:[#allocation17 + $0x6e8] sm:$0xff]
          %v1941 = vld [vmem:[#allocation17 + $0x6f0] sm:$0xff]
          %v1942 = vld [vmem:[#allocation17 + $0x6f8] sm:$0xff]
          %v1943 = vld [vmem:[#allocation17 + $0x700] sm:$0xff]
          %v1944 = vld [vmem:[#allocation17 + $0x708] sm:$0xff]
          %v1945 = vld [vmem:[#allocation17 + $0x710] sm:$0xff]
          %v1946 = vld [vmem:[#allocation17 + $0x718] sm:$0xff]
          %v1947 = vld [vmem:[#allocation17 + $0x720] sm:$0xff]
          %v1948 = vld [vmem:[#allocation17 + $0x728] sm:$0xff]
          %v1949 = vld [vmem:[#allocation17 + $0x730] sm:$0xff]
          %v1950 = vld [vmem:[#allocation17 + $0x738] sm:$0xff]
          %v1951 = vld [vmem:[#allocation17 + $0x740] sm:$0xff]
          %v1952 = vld [vmem:[#allocation17 + $0x748] sm:$0xff]
          %v1953 = vld [vmem:[#allocation17 + $0x750] sm:$0xff]
          %v1954 = vld [vmem:[#allocation17 + $0x758] sm:$0xff]
          %v1955 = vld [vmem:[#allocation17 + $0x760] sm:$0xff]
          %v1956 = vld [vmem:[#allocation17 + $0x768] sm:$0xff]
          %v1957 = vld [vmem:[#allocation17 + $0x770] sm:$0xff]
          %v1958 = vld [vmem:[#allocation17 + $0x778] sm:$0xff]
          %v1959 = vld [vmem:[#allocation17 + $0x780] sm:$0xff]
          %v1960 = vld [vmem:[#allocation17 + $0x788] sm:$0xff]
          %v1961 = vld [vmem:[#allocation17 + $0x790] sm:$0xff]
          %v1962 = vld [vmem:[#allocation17 + $0x798] sm:$0xff]
          %v1963 = vld [vmem:[#allocation17 + $0x7a0] sm:$0xff]
          %v1964 = vld [vmem:[#allocation17 + $0x7a8] sm:$0xff]
          %v1965 = vld [vmem:[#allocation17 + $0x7b0] sm:$0xff]
          %v1966 = vld [vmem:[#allocation17 + $0x7b8] sm:$0xff]
          %v1967 = vld [vmem:[#allocation17 + $0x7c0] sm:$0xff]
          %v1968 = vld [vmem:[#allocation17 + $0x7c8] sm:$0xff]
          %v1969 = vld [vmem:[#allocation17 + $0x7d0] sm:$0xff]
          %v1970 = vld [vmem:[#allocation17 + $0x7d8] sm:$0xff]
          %v1971 = vld [vmem:[#allocation17 + $0x7e0] sm:$0xff]
          %v1972 = vld [vmem:[#allocation17 + $0x7e8] sm:$0xff]
          %v1973 = vld [vmem:[#allocation17 + $0x7f0] sm:$0xff]
          %v1974 = vld [vmem:[#allocation17 + $0x7f8] sm:$0xff]
          %v1975 = vld [vmem:[#allocation17 + $0x800] sm:$0xff]
          %v1976 = vld [vmem:[#allocation17 + $0x808] sm:$0xff]
          %v1977 = vld [vmem:[#allocation17 + $0x810] sm:$0xff]
          %v1978 = vld [vmem:[#allocation17 + $0x818] sm:$0xff]
          %v1979 = vld [vmem:[#allocation17 + $0x820] sm:$0xff]
          %v1980 = vld [vmem:[#allocation17 + $0x828] sm:$0xff]
          %v1981 = vld [vmem:[#allocation17 + $0x830] sm:$0xff]
          %v1982 = vld [vmem:[#allocation17 + $0x838] sm:$0xff]
          %v1983 = vld [vmem:[#allocation17 + $0x840] sm:$0xff]
          %v1984 = vld [vmem:[#allocation17 + $0x848] sm:$0xff]
          %v1985 = vld [vmem:[#allocation17 + $0x850] sm:$0xff]
          %v1986 = vld [vmem:[#allocation17 + $0x858] sm:$0xff]
          %v1987 = vld [vmem:[#allocation17 + $0x860] sm:$0xff]
          %v1988 = vld [vmem:[#allocation17 + $0x868] sm:$0xff]
          %v1989 = vld [vmem:[#allocation17 + $0x870] sm:$0xff]
          %v1990 = vld [vmem:[#allocation17 + $0x878] sm:$0xff]
          %v1991 = vld [vmem:[#allocation17 + $0x880] sm:$0xff]
          %v1992 = vld [vmem:[#allocation17 + $0x888] sm:$0xff]
          %v1993 = vld [vmem:[#allocation17 + $0x890] sm:$0xff]
          %v1994 = vld [vmem:[#allocation17 + $0x898] sm:$0xff]
          %v1995 = vld [vmem:[#allocation17 + $0x8a0] sm:$0xff]
          %v1996 = vld [vmem:[#allocation17 + $0x8a8] sm:$0xff]
          %v1997 = vld [vmem:[#allocation17 + $0x8b0] sm:$0xff]
          %v1998 = vld [vmem:[#allocation17 + $0x8b8] sm:$0xff]
          %v1999 = vld [vmem:[#allocation17 + $0x8c0] sm:$0xff]
          %v2000 = vld [vmem:[#allocation17 + $0x8c8] sm:$0xff]
          %v2001 = vld [vmem:[#allocation17 + $0x8d0] sm:$0xff]
          %v2002 = vld [vmem:[#allocation17 + $0x8d8] sm:$0xff]
          %v2003 = vld [vmem:[#allocation17 + $0x8e0] sm:$0xff]
          %v2004 = vld [vmem:[#allocation17 + $0x8e8] sm:$0xff]
          %v2005 = vld [vmem:[#allocation17 + $0x8f0] sm:$0xff]
          %v2006 = vld [vmem:[#allocation17 + $0x8f8] sm:$0xff]
          %v2007 = vld [vmem:[#allocation17 + $0x900] sm:$0xff]
          %v2008 = vld [vmem:[#allocation17 + $0x908] sm:$0xff]
          %v2009 = vld [vmem:[#allocation17 + $0x910] sm:$0xff]
          %v2010 = vld [vmem:[#allocation17 + $0x918] sm:$0xff]
          %v2011 = vld [vmem:[#allocation17 + $0x920] sm:$0xff]
          %v2012 = vld [vmem:[#allocation17 + $0x928] sm:$0xff]
          %v2013 = vld [vmem:[#allocation17 + $0x930] sm:$0xff]
          %v2014 = vld [vmem:[#allocation17 + $0x938] sm:$0xff]
          %v2015 = vld [vmem:[#allocation17 + $0x940] sm:$0xff]
          %v2016 = vld [vmem:[#allocation17 + $0x948] sm:$0xff]
          %v2017 = vld [vmem:[#allocation17 + $0x950] sm:$0xff]
          %v2018 = vld [vmem:[#allocation17 + $0x958] sm:$0xff]
          %v2019 = vld [vmem:[#allocation17 + $0x960] sm:$0xff]
          %v2020 = vld [vmem:[#allocation17 + $0x968] sm:$0xff]
          %v2021 = vld [vmem:[#allocation17 + $0x970] sm:$0xff]
          %v2022 = vld [vmem:[#allocation17 + $0x978] sm:$0xff]
          %v2023 = vld [vmem:[#allocation17 + $0x980] sm:$0xff]
          %v2024 = vld [vmem:[#allocation17 + $0x988] sm:$0xff]
          %v2025 = vld [vmem:[#allocation17 + $0x990] sm:$0xff]
          %v2026 = vld [vmem:[#allocation17 + $0x998] sm:$0xff]
          %v2027 = vld [vmem:[#allocation17 + $0x9a0] sm:$0xff]
          %v2028 = vld [vmem:[#allocation17 + $0x9a8] sm:$0xff]
          %v2029 = vld [vmem:[#allocation17 + $0x9b0] sm:$0xff]
          %v2030 = vld [vmem:[#allocation17 + $0x9b8] sm:$0xff]
          %v2031 = vld [vmem:[#allocation17 + $0x9c0] sm:$0xff]
          %v2032 = vld [vmem:[#allocation17 + $0x9c8] sm:$0xff]
          %v2033 = vld [vmem:[#allocation17 + $0x9d0] sm:$0xff]
          %v2034 = vld [vmem:[#allocation17 + $0x9d8] sm:$0xff]
          %v2035 = vld [vmem:[#allocation17 + $0x9e0] sm:$0xff]
          %v2036 = vld [vmem:[#allocation17 + $0x9e8] sm:$0xff]
          %v2037 = vld [vmem:[#allocation17 + $0x9f0] sm:$0xff]
          %v2038 = vld [vmem:[#allocation17 + $0x9f8] sm:$0xff]
          %v2039 = vld [vmem:[#allocation17 + $0xa00] sm:$0xff]
          %v2040 = vld [vmem:[#allocation17 + $0xa08] sm:$0xff]
          %v2041 = vld [vmem:[#allocation17 + $0xa10] sm:$0xff]
          %v2042 = vld [vmem:[#allocation17 + $0xa18] sm:$0xff]
          %v2043 = vld [vmem:[#allocation17 + $0xa20] sm:$0xff]
          %v2044 = vld [vmem:[#allocation17 + $0xa28] sm:$0xff]
          %v2045 = vld [vmem:[#allocation17 + $0xa30] sm:$0xff]
          %v2046 = vld [vmem:[#allocation17 + $0xa38] sm:$0xff]
          %v2047 = vld [vmem:[#allocation17 + $0xa40] sm:$0xff]
          %v2048 = vld [vmem:[#allocation17 + $0xa48] sm:$0xff]
          %v2049 = vld [vmem:[#allocation17 + $0xa50] sm:$0xff]
          %v2050 = vld [vmem:[#allocation17 + $0xa58] sm:$0xff]
          %v2051 = vld [vmem:[#allocation17 + $0xa60] sm:$0xff]
          %v2052 = vld [vmem:[#allocation17 + $0xa68] sm:$0xff]
          %v2053 = vld [vmem:[#allocation17 + $0xa70] sm:$0xff]
          %v2054 = vld [vmem:[#allocation17 + $0xa78] sm:$0xff]
          %v2055 = vld [vmem:[#allocation17 + $0xa80] sm:$0xff]
          %v2056 = vld [vmem:[#allocation17 + $0xa88] sm:$0xff]
          %v2057 = vld [vmem:[#allocation17 + $0xa90] sm:$0xff]
          %v2058 = vld [vmem:[#allocation17 + $0xa98] sm:$0xff]
          %v2059 = vld [vmem:[#allocation17 + $0xaa0] sm:$0xff]
          %v2060 = vld [vmem:[#allocation17 + $0xaa8] sm:$0xff]
          %v2061 = vld [vmem:[#allocation17 + $0xab0] sm:$0xff]
          %v2062 = vld [vmem:[#allocation17 + $0xab8] sm:$0xff]
          %v2063 = vld [vmem:[#allocation17 + $0xac0] sm:$0xff]
          %v2064 = vld [vmem:[#allocation17 + $0xac8] sm:$0xff]
          %v2065 = vld [vmem:[#allocation17 + $0xad0] sm:$0xff]
          %v2066 = vld [vmem:[#allocation17 + $0xad8] sm:$0xff]
          %v2067 = vld [vmem:[#allocation17 + $0xae0] sm:$0xff]
          %v2068 = vld [vmem:[#allocation17 + $0xae8] sm:$0xff]
          %v2069 = vld [vmem:[#allocation17 + $0xaf0] sm:$0xff]
          %v2070 = vld [vmem:[#allocation17 + $0xaf8] sm:$0xff]
          %v2071 = vld [vmem:[#allocation17 + $0xb00] sm:$0xff]
          %v2072 = vld [vmem:[#allocation17 + $0xb08] sm:$0xff]
          %v2073 = vld [vmem:[#allocation17 + $0xb10] sm:$0xff]
          %v2074 = vld [vmem:[#allocation17 + $0xb18] sm:$0xff]
          %v2075 = vld [vmem:[#allocation17 + $0xb20] sm:$0xff]
          %v2076 = vld [vmem:[#allocation17 + $0xb28] sm:$0xff]
          %v2077 = vld [vmem:[#allocation17 + $0xb30] sm:$0xff]
          %v2078 = vld [vmem:[#allocation17 + $0xb38] sm:$0xff]
          %v2079 = vld [vmem:[#allocation17 + $0xb40] sm:$0xff]
          %v2080 = vld [vmem:[#allocation17 + $0xb48] sm:$0xff]
          %v2081 = vld [vmem:[#allocation17 + $0xb50] sm:$0xff]
          %v2082 = vld [vmem:[#allocation17 + $0xb58] sm:$0xff]
          %v2083 = vld [vmem:[#allocation17 + $0xb60] sm:$0xff]
          %v2084 = vld [vmem:[#allocation17 + $0xb68] sm:$0xff]
          %v2085 = vld [vmem:[#allocation17 + $0xb70] sm:$0xff]
          %v2086 = vld [vmem:[#allocation17 + $0xb78] sm:$0xff]
          %v2087 = vld [vmem:[#allocation17 + $0xb80] sm:$0xff]
          %v2088 = vld [vmem:[#allocation17 + $0xb88] sm:$0xff]
          %v2089 = vld [vmem:[#allocation17 + $0xb90] sm:$0xff]
          %v2090 = vld [vmem:[#allocation17 + $0xb98] sm:$0xff]
          %v2091 = vld [vmem:[#allocation17 + $0xba0] sm:$0xff]
          %v2092 = vld [vmem:[#allocation17 + $0xba8] sm:$0xff]
          %v2093 = vld [vmem:[#allocation17 + $0xbb0] sm:$0xff]
          %v2094 = vld [vmem:[#allocation17 + $0xbb8] sm:$0xff]
          %v2095 = vld [vmem:[#allocation17 + $0xbc0] sm:$0xff]
          %v2096 = vld [vmem:[#allocation17 + $0xbc8] sm:$0xff]
          %v2097 = vld [vmem:[#allocation17 + $0xbd0] sm:$0xff]
          %v2098 = vld [vmem:[#allocation17 + $0xbd8] sm:$0xff]
          %v2099 = vld [vmem:[#allocation17 + $0xbe0] sm:$0xff]
          %v2100 = vld [vmem:[#allocation17 + $0xbe8] sm:$0xff]
          %v2101 = vld [vmem:[#allocation17 + $0xbf0] sm:$0xff]
          %v2102 = vld [vmem:[#allocation17 + $0xbf8] sm:$0xff]
          %v2103 = vld [vmem:[#allocation17 + $0xc00] sm:$0xff]
          %v2104 = vld [vmem:[#allocation17 + $0xc08] sm:$0xff]
          %v2105 = vld [vmem:[#allocation17 + $0xc10] sm:$0xff]
          %v2106 = vld [vmem:[#allocation17 + $0xc18] sm:$0xff]
          %v2107 = vld [vmem:[#allocation17 + $0xc20] sm:$0xff]
          %v2108 = vld [vmem:[#allocation17 + $0xc28] sm:$0xff]
          %v2109 = vld [vmem:[#allocation17 + $0xc30] sm:$0xff]
          %v2110 = vld [vmem:[#allocation17 + $0xc38] sm:$0xff]
          %v2111 = vld [vmem:[#allocation17 + $0xc40] sm:$0xff]
          %v2112 = vld [vmem:[#allocation17 + $0xc48] sm:$0xff]
          %v2113 = vld [vmem:[#allocation17 + $0xc50] sm:$0xff]
          %v2114 = vld [vmem:[#allocation17 + $0xc58] sm:$0xff]
          %v2115 = vld [vmem:[#allocation17 + $0xc60] sm:$0xff]
          %v2116 = vld [vmem:[#allocation17 + $0xc68] sm:$0xff]
          %v2117 = vld [vmem:[#allocation17 + $0xc70] sm:$0xff]
          %v2118 = vld [vmem:[#allocation17 + $0xc78] sm:$0xff]
          %v2119 = vld [vmem:[#allocation17 + $0xc80] sm:$0xff]
          %v2120 = vld [vmem:[#allocation17 + $0xc88] sm:$0xff]
          %v2121 = vld [vmem:[#allocation17 + $0xc90] sm:$0xff]
          %v2122 = vld [vmem:[#allocation17 + $0xc98] sm:$0xff]
          %v2123 = vld [vmem:[#allocation17 + $0xca0] sm:$0xff]
          %v2124 = vld [vmem:[#allocation17 + $0xca8] sm:$0xff]
          %v2125 = vld [vmem:[#allocation17 + $0xcb0] sm:$0xff]
          %v2126 = vld [vmem:[#allocation17 + $0xcb8] sm:$0xff]
          %v2127 = vld [vmem:[#allocation17 + $0xcc0] sm:$0xff]
          %v2128 = vld [vmem:[#allocation17 + $0xcc8] sm:$0xff]
          %v2129 = vld [vmem:[#allocation17 + $0xcd0] sm:$0xff]
          %v2130 = vld [vmem:[#allocation17 + $0xcd8] sm:$0xff]
          %v2131 = vld [vmem:[#allocation17 + $0xce0] sm:$0xff]
          %v2132 = vld [vmem:[#allocation17 + $0xce8] sm:$0xff]
          %v2133 = vld [vmem:[#allocation17 + $0xcf0] sm:$0xff]
          %v2134 = vld [vmem:[#allocation17 + $0xcf8] sm:$0xff]
          %v2135 = vld [vmem:[#allocation17 + $0xd00] sm:$0xff]
          %v2136 = vld [vmem:[#allocation17 + $0xd08] sm:$0xff]
          %v2137 = vld [vmem:[#allocation17 + $0xd10] sm:$0xff]
          %v2138 = vld [vmem:[#allocation17 + $0xd18] sm:$0xff]
          %v2139 = vld [vmem:[#allocation17 + $0xd20] sm:$0xff]
          %v2140 = vld [vmem:[#allocation17 + $0xd28] sm:$0xff]
          %v2141 = vld [vmem:[#allocation17 + $0xd30] sm:$0xff]
          %v2142 = vld [vmem:[#allocation17 + $0xd38] sm:$0xff]
          %v2143 = vld [vmem:[#allocation17 + $0xd40] sm:$0xff]
          %v2144 = vld [vmem:[#allocation17 + $0xd48] sm:$0xff]
          %v2145 = vld [vmem:[#allocation17 + $0xd50] sm:$0xff]
          %v2146 = vld [vmem:[#allocation17 + $0xd58] sm:$0xff]
          %v2147 = vld [vmem:[#allocation17 + $0xd60] sm:$0xff]
          %v2148 = vld [vmem:[#allocation17 + $0xd68] sm:$0xff]
          %v2149 = vld [vmem:[#allocation17 + $0xd70] sm:$0xff]
          %v2150 = vld [vmem:[#allocation17 + $0xd78] sm:$0xff]
          %v2151 = vld [vmem:[#allocation17 + $0xd80] sm:$0xff]
          %v2152 = vld [vmem:[#allocation17 + $0xd88] sm:$0xff]
          %v2153 = vld [vmem:[#allocation17 + $0xd90] sm:$0xff]
          %v2154 = vld [vmem:[#allocation17 + $0xd98] sm:$0xff]
          %v2155 = vld [vmem:[#allocation17 + $0xda0] sm:$0xff]
          %v2156 = vld [vmem:[#allocation17 + $0xda8] sm:$0xff]
          %v2157 = vld [vmem:[#allocation17 + $0xdb0] sm:$0xff]
          %v2158 = vld [vmem:[#allocation17 + $0xdb8] sm:$0xff]
          %v2159 = vld [vmem:[#allocation17 + $0xdc0] sm:$0xff]
          %v2160 = vld [vmem:[#allocation17 + $0xdc8] sm:$0xff]
          %v2161 = vld [vmem:[#allocation17 + $0xdd0] sm:$0xff]
          %v2162 = vld [vmem:[#allocation17 + $0xdd8] sm:$0xff]
          %v2163 = vld [vmem:[#allocation17 + $0xde0] sm:$0xff]
          %v2164 = vld [vmem:[#allocation17 + $0xde8] sm:$0xff]
          %v2165 = vld [vmem:[#allocation17 + $0xdf0] sm:$0xff]
          %v2166 = vld [vmem:[#allocation17 + $0xdf8] sm:$0xff]
          %v2167 = vld [vmem:[#allocation17 + $0xe00] sm:$0xff]
          %v2168 = vld [vmem:[#allocation17 + $0xe08] sm:$0xff]
          %v2169 = vld [vmem:[#allocation17 + $0xe10] sm:$0xff]
          %v2170 = vld [vmem:[#allocation17 + $0xe18] sm:$0xff]
          %v2171 = vld [vmem:[#allocation17 + $0xe20] sm:$0xff]
          %v2172 = vld [vmem:[#allocation17 + $0xe28] sm:$0xff]
          %v2173 = vld [vmem:[#allocation17 + $0xe30] sm:$0xff]
          %v2174 = vld [vmem:[#allocation17 + $0xe38] sm:$0xff]
          %v2175 = vld [vmem:[#allocation17 + $0xe40] sm:$0xff]
          %v2176 = vld [vmem:[#allocation17 + $0xe48] sm:$0xff]
          %v2177 = vld [vmem:[#allocation17 + $0xe50] sm:$0xff]
          %v2178 = vld [vmem:[#allocation17 + $0xe58] sm:$0xff]
          %v2179 = vld [vmem:[#allocation17 + $0xe60] sm:$0xff]
          %v2180 = vld [vmem:[#allocation17 + $0xe68] sm:$0xff]
          %v2181 = vld [vmem:[#allocation17 + $0xe70] sm:$0xff]
          %v2182 = vld [vmem:[#allocation17 + $0xe78] sm:$0xff]
          %v2183 = vld [vmem:[#allocation17 + $0xe80] sm:$0xff]
          %v2184 = vld [vmem:[#allocation17 + $0xe88] sm:$0xff]
          %v2185 = vld [vmem:[#allocation17 + $0xe90] sm:$0xff]
          %v2186 = vld [vmem:[#allocation17 + $0xe98] sm:$0xff]
          %v2187 = vld [vmem:[#allocation17 + $0xea0] sm:$0xff]
          %v2188 = vld [vmem:[#allocation17 + $0xea8] sm:$0xff]
          %v2189 = vld [vmem:[#allocation17 + $0xeb0] sm:$0xff]
          %v2190 = vld [vmem:[#allocation17 + $0xeb8] sm:$0xff]
          %v2191 = vld [vmem:[#allocation17 + $0xec0] sm:$0xff]
          %v2192 = vld [vmem:[#allocation17 + $0xec8] sm:$0xff]
          %v2193 = vld [vmem:[#allocation17 + $0xed0] sm:$0xff]
          %v2194 = vld [vmem:[#allocation17 + $0xed8] sm:$0xff]
          %v2195 = vld [vmem:[#allocation17 + $0xee0] sm:$0xff]
          %v2196 = vld [vmem:[#allocation17 + $0xee8] sm:$0xff]
          %v2197 = vld [vmem:[#allocation17 + $0xef0] sm:$0xff]
          %v2198 = vld [vmem:[#allocation17 + $0xef8] sm:$0xff]
          %v2199 = vld [vmem:[#allocation17 + $0xf00] sm:$0xff]
          %v2200 = vld [vmem:[#allocation17 + $0xf08] sm:$0xff]
          %v2201 = vld [vmem:[#allocation17 + $0xf10] sm:$0xff]
          %v2202 = vld [vmem:[#allocation17 + $0xf18] sm:$0xff]
          %v2203 = vld [vmem:[#allocation17 + $0xf20] sm:$0xff]
          %v2204 = vld [vmem:[#allocation17 + $0xf28] sm:$0xff]
          %v2205 = vld [vmem:[#allocation17 + $0xf30] sm:$0xff]
          %v2206 = vld [vmem:[#allocation17 + $0xf38] sm:$0xff]
          %v2207 = vld [vmem:[#allocation17 + $0xf40] sm:$0xff]
          %v2208 = vld [vmem:[#allocation17 + $0xf48] sm:$0xff]
          %v2209 = vld [vmem:[#allocation17 + $0xf50] sm:$0xff]
          %v2210 = vld [vmem:[#allocation17 + $0xf58] sm:$0xff]
          %v2211 = vld [vmem:[#allocation17 + $0xf60] sm:$0xff]
          %v2212 = vld [vmem:[#allocation17 + $0xf68] sm:$0xff]
          %v2213 = vld [vmem:[#allocation17 + $0xf70] sm:$0xff]
          %v2214 = vld [vmem:[#allocation17 + $0xf78] sm:$0xff]
          %v2215 = vld [vmem:[#allocation17 + $0xf80] sm:$0xff]
          %v2216 = vld [vmem:[#allocation17 + $0xf88] sm:$0xff]
          %v2217 = vld [vmem:[#allocation17 + $0xf90] sm:$0xff]
          %v2218 = vld [vmem:[#allocation17 + $0xf98] sm:$0xff]
          %v2219 = vld [vmem:[#allocation17 + $0xfa0] sm:$0xff]
          %v2220 = vld [vmem:[#allocation17 + $0xfa8] sm:$0xff]
          %v2221 = vld [vmem:[#allocation17 + $0xfb0] sm:$0xff]
          %v2222 = vld [vmem:[#allocation17 + $0xfb8] sm:$0xff]
          %v2223 = vld [vmem:[#allocation17 + $0xfc0] sm:$0xff]
          %v2224 = vld [vmem:[#allocation17 + $0xfc8] sm:$0xff]
          %v2225 = vld [vmem:[#allocation17 + $0xfd0] sm:$0xff]
          %v2226 = vld [vmem:[#allocation17 + $0xfd8] sm:$0xff]
          %v2227 = vld [vmem:[#allocation17 + $0xfe0] sm:$0xff]
          %v2228 = vld [vmem:[#allocation17 + $0xfe8] sm:$0xff]
          %v2229 = vld [vmem:[#allocation17 + $0xff0] sm:$0xff]
          %v2230 = vld [vmem:[#allocation17 + $0xff8] sm:$0xff]
          %v2231 = vld [vmem:[#allocation17 + $0x1000] sm:$0xff]
          %v2232 = vld [vmem:[#allocation17 + $0x1008] sm:$0xff]
          %v2233 = vld [vmem:[#allocation17 + $0x1010] sm:$0xff]
          %v2234 = vld [vmem:[#allocation17 + $0x1018] sm:$0xff]
          %v2235 = vld [vmem:[#allocation17 + $0x1020] sm:$0xff]
          %v2236 = vld [vmem:[#allocation17 + $0x1028] sm:$0xff]
          %v2237 = vld [vmem:[#allocation17 + $0x1030] sm:$0xff]
          %v2238 = vld [vmem:[#allocation17 + $0x1038] sm:$0xff]
          %v2239 = vld [vmem:[#allocation17 + $0x1040] sm:$0xff]
          %v2240 = vld [vmem:[#allocation17 + $0x1048] sm:$0xff]
          %v2241 = vld [vmem:[#allocation17 + $0x1050] sm:$0xff]
          %v2242 = vld [vmem:[#allocation17 + $0x1058] sm:$0xff]
          %v2243 = vld [vmem:[#allocation17 + $0x1060] sm:$0xff]
          %v2244 = vld [vmem:[#allocation17 + $0x1068] sm:$0xff]
          %v2245 = vld [vmem:[#allocation17 + $0x1070] sm:$0xff]
          %v2246 = vld [vmem:[#allocation17 + $0x1078] sm:$0xff]
          %v2247 = vld [vmem:[#allocation17 + $0x1080] sm:$0xff]
          %v2248 = vld [vmem:[#allocation17 + $0x1088] sm:$0xff]
          %v2249 = vld [vmem:[#allocation17 + $0x1090] sm:$0xff]
          %v2250 = vld [vmem:[#allocation17 + $0x1098] sm:$0xff]
          %v2251 = vld [vmem:[#allocation17 + $0x10a0] sm:$0xff]
          %v2252 = vld [vmem:[#allocation17 + $0x10a8] sm:$0xff]
          %v2253 = vld [vmem:[#allocation17 + $0x10b0] sm:$0xff]
          %v2254 = vld [vmem:[#allocation17 + $0x10b8] sm:$0xff]
          %v2255 = vld [vmem:[#allocation17 + $0x10c0] sm:$0xff]
          %v2256 = vld [vmem:[#allocation17 + $0x10c8] sm:$0xff]
          %v2257 = vld [vmem:[#allocation17 + $0x10d0] sm:$0xff]
          %v2258 = vld [vmem:[#allocation17 + $0x10d8] sm:$0xff]
          %v2259 = vld [vmem:[#allocation17 + $0x10e0] sm:$0xff]
          %v2260 = vld [vmem:[#allocation17 + $0x10e8] sm:$0xff]
          %v2261 = vld [vmem:[#allocation17 + $0x10f0] sm:$0xff]
          %v2262 = vld [vmem:[#allocation17 + $0x10f8] sm:$0xff]
          %v2263 = vld [vmem:[#allocation17 + $0x1100] sm:$0xff]
          %v2264 = vld [vmem:[#allocation17 + $0x1108] sm:$0xff]
          %v2265 = vld [vmem:[#allocation17 + $0x1110] sm:$0xff]
          %v2266 = vld [vmem:[#allocation17 + $0x1118] sm:$0xff]
          %v2267 = vld [vmem:[#allocation17 + $0x1120] sm:$0xff]
          %v2268 = vld [vmem:[#allocation17 + $0x1128] sm:$0xff]
          %v2269 = vld [vmem:[#allocation17 + $0x1130] sm:$0xff]
          %v2270 = vld [vmem:[#allocation17 + $0x1138] sm:$0xff]
          %v2271 = vld [vmem:[#allocation17 + $0x1140] sm:$0xff]
          %v2272 = vld [vmem:[#allocation17 + $0x1148] sm:$0xff]
          %v2273 = vld [vmem:[#allocation17 + $0x1150] sm:$0xff]
          %v2274 = vld [vmem:[#allocation17 + $0x1158] sm:$0xff]
          %v2275 = vld [vmem:[#allocation17 + $0x1160] sm:$0xff]
          %v2276 = vld [vmem:[#allocation17 + $0x1168] sm:$0xff]
          %v2277 = vld [vmem:[#allocation17 + $0x1170] sm:$0xff]
          %v2278 = vld [vmem:[#allocation17 + $0x1178] sm:$0xff]
          %v2279 = vld [vmem:[#allocation17 + $0x1180] sm:$0xff]
          %v2280 = vld [vmem:[#allocation17 + $0x1188] sm:$0xff]
          %v2281 = vld [vmem:[#allocation17 + $0x1190] sm:$0xff]
          %v2282 = vld [vmem:[#allocation17 + $0x1198] sm:$0xff]
          %v2283 = vld [vmem:[#allocation17 + $0x11a0] sm:$0xff]
          %v2284 = vld [vmem:[#allocation17 + $0x11a8] sm:$0xff]
          %v2285 = vld [vmem:[#allocation17 + $0x11b0] sm:$0xff]
          %v2286 = vld [vmem:[#allocation17 + $0x11b8] sm:$0xff]
          %v2287 = vld [vmem:[#allocation17 + $0x11c0] sm:$0xff]
          %v2288 = vld [vmem:[#allocation17 + $0x11c8] sm:$0xff]
          %v2289 = vld [vmem:[#allocation17 + $0x11d0] sm:$0xff]
          %v2290 = vld [vmem:[#allocation17 + $0x11d8] sm:$0xff]
          %v2291 = vld [vmem:[#allocation17 + $0x11e0] sm:$0xff]
          %v2292 = vld [vmem:[#allocation17 + $0x11e8] sm:$0xff]
          %v2293 = vld [vmem:[#allocation17 + $0x11f0] sm:$0xff]
          %v2294 = vld [vmem:[#allocation17 + $0x11f8] sm:$0xff]
          %v2295 = vld [vmem:[#allocation17 + $0x1200] sm:$0xff]
          %v2296 = vld [vmem:[#allocation17 + $0x1208] sm:$0xff]
          %v2297 = vld [vmem:[#allocation17 + $0x1210] sm:$0xff]
          %v2298 = vld [vmem:[#allocation17 + $0x1218] sm:$0xff]
          %v2299 = vld [vmem:[#allocation17 + $0x1220] sm:$0xff]
          %v2300 = vld [vmem:[#allocation17 + $0x1228] sm:$0xff]
          %v2301 = vld [vmem:[#allocation17 + $0x1230] sm:$0xff]
          %v2302 = vld [vmem:[#allocation17 + $0x1238] sm:$0xff]
          %v2303 = vld [vmem:[#allocation17 + $0x1240] sm:$0xff]
          %v2304 = vld [vmem:[#allocation17 + $0x1248] sm:$0xff]
          %v2305 = vld [vmem:[#allocation17 + $0x1250] sm:$0xff]
          %v2306 = vld [vmem:[#allocation17 + $0x1258] sm:$0xff]
          %v2307 = vld [vmem:[#allocation17 + $0x1260] sm:$0xff]
          %v2308 = vld [vmem:[#allocation17 + $0x1268] sm:$0xff]
          %v2309 = vld [vmem:[#allocation17 + $0x1270] sm:$0xff]
          %v2310 = vld [vmem:[#allocation17 + $0x1278] sm:$0xff]
          %v2311 = vld [vmem:[#allocation17 + $0x1280] sm:$0xff]
          %v2312 = vld [vmem:[#allocation17 + $0x1288] sm:$0xff]
          %v2313 = vld [vmem:[#allocation17 + $0x1290] sm:$0xff]
          %v2314 = vld [vmem:[#allocation17 + $0x1298] sm:$0xff]
          %v2315 = vld [vmem:[#allocation17 + $0x12a0] sm:$0xff]
          %v2316 = vld [vmem:[#allocation17 + $0x12a8] sm:$0xff]
          %v2317 = vld [vmem:[#allocation17 + $0x12b0] sm:$0xff]
          %v2318 = vld [vmem:[#allocation17 + $0x12b8] sm:$0xff]
          %v2319 = vld [vmem:[#allocation17 + $0x12c0] sm:$0xff]
          %v2320 = vld [vmem:[#allocation17 + $0x12c8] sm:$0xff]
          %v2321 = vld [vmem:[#allocation17 + $0x12d0] sm:$0xff]
          %v2322 = vld [vmem:[#allocation17 + $0x12d8] sm:$0xff]
          %v2323 = vld [vmem:[#allocation17 + $0x12e0] sm:$0xff]
          %v2324 = vld [vmem:[#allocation17 + $0x12e8] sm:$0xff]
          %v2325 = vld [vmem:[#allocation17 + $0x12f0] sm:$0xff]
          %v2326 = vld [vmem:[#allocation17 + $0x12f8] sm:$0xff]
          %v2327 = vld [vmem:[#allocation17 + $0x1300] sm:$0xff]
          %v2328 = vld [vmem:[#allocation17 + $0x1308] sm:$0xff]
          %v2329 = vld [vmem:[#allocation17 + $0x1310] sm:$0xff]
          %v2330 = vld [vmem:[#allocation17 + $0x1318] sm:$0xff]
          %v2331 = vld [vmem:[#allocation17 + $0x1320] sm:$0xff]
          %v2332 = vld [vmem:[#allocation17 + $0x1328] sm:$0xff]
          %v2333 = vld [vmem:[#allocation17 + $0x1330] sm:$0xff]
          %v2334 = vld [vmem:[#allocation17 + $0x1338] sm:$0xff]
          %v2335 = vld [vmem:[#allocation17 + $0x1340] sm:$0xff]
          %v2336 = vld [vmem:[#allocation17 + $0x1348] sm:$0xff]
          %v2337 = vld [vmem:[#allocation17 + $0x1350] sm:$0xff]
          %v2338 = vld [vmem:[#allocation17 + $0x1358] sm:$0xff]
          %v2339 = vld [vmem:[#allocation17 + $0x1360] sm:$0xff]
          %v2340 = vld [vmem:[#allocation17 + $0x1368] sm:$0xff]
          %v2341 = vld [vmem:[#allocation17 + $0x1370] sm:$0xff]
          %v2342 = vld [vmem:[#allocation17 + $0x1378] sm:$0xff]
          %v2343 = vld [vmem:[#allocation17 + $0x1380] sm:$0xff]
          %v2344 = vld [vmem:[#allocation17 + $0x1388] sm:$0xff]
          %v2345 = vld [vmem:[#allocation17 + $0x1390] sm:$0xff]
          %v2346 = vld [vmem:[#allocation17 + $0x1398] sm:$0xff]
          %v2347 = vld [vmem:[#allocation17 + $0x13a0] sm:$0xff]
          %v2348 = vld [vmem:[#allocation17 + $0x13a8] sm:$0xff]
          %v2349 = vld [vmem:[#allocation17 + $0x13b0] sm:$0xff]
          %v2350 = vld [vmem:[#allocation17 + $0x13b8] sm:$0xff]
          %v2351 = vld [vmem:[#allocation17 + $0x13c0] sm:$0xff]
          %v2352 = vld [vmem:[#allocation17 + $0x13c8] sm:$0xff]
          %v2353 = vld [vmem:[#allocation17 + $0x13d0] sm:$0xff]
          %v2354 = vld [vmem:[#allocation17 + $0x13d8] sm:$0xff]
          %v2355 = vld [vmem:[#allocation17 + $0x13e0] sm:$0xff]
          %v2356 = vld [vmem:[#allocation17 + $0x13e8] sm:$0xff]
          %v2357 = vld [vmem:[#allocation17 + $0x13f0] sm:$0xff]
          %v2358 = vld [vmem:[#allocation17 + $0x13f8] sm:$0xff]
          %v2359 = vld [vmem:[#allocation17 + $0x1400] sm:$0xff]
          %v2360 = vld [vmem:[#allocation17 + $0x1408] sm:$0xff]
          %v2361 = vld [vmem:[#allocation17 + $0x1410] sm:$0xff]
          %v2362 = vld [vmem:[#allocation17 + $0x1418] sm:$0xff]
          %v2363 = vld [vmem:[#allocation17 + $0x1420] sm:$0xff]
          %v2364 = vld [vmem:[#allocation17 + $0x1428] sm:$0xff]
          %v2365 = vld [vmem:[#allocation17 + $0x1430] sm:$0xff]
          %v2366 = vld [vmem:[#allocation17 + $0x1438] sm:$0xff]
          %v2367 = vld [vmem:[#allocation17 + $0x1440] sm:$0xff]
          %v2368 = vld [vmem:[#allocation17 + $0x1448] sm:$0xff]
          %v2369 = vld [vmem:[#allocation17 + $0x1450] sm:$0xff]
          %v2370 = vld [vmem:[#allocation17 + $0x1458] sm:$0xff]
          %v2371 = vld [vmem:[#allocation17 + $0x1460] sm:$0xff]
          %v2372 = vld [vmem:[#allocation17 + $0x1468] sm:$0xff]
          %v2373 = vld [vmem:[#allocation17 + $0x1470] sm:$0xff]
          %v2374 = vld [vmem:[#allocation17 + $0x1478] sm:$0xff]
          %v2375 = vld [vmem:[#allocation17 + $0x1480] sm:$0xff]
          %v2376 = vld [vmem:[#allocation17 + $0x1488] sm:$0xff]
          %v2377 = vld [vmem:[#allocation17 + $0x1490] sm:$0xff]
          %v2378 = vld [vmem:[#allocation17 + $0x1498] sm:$0xff]
          %v2379 = vld [vmem:[#allocation17 + $0x14a0] sm:$0xff]
          %v2380 = vld [vmem:[#allocation17 + $0x14a8] sm:$0xff]
          %v2381 = vld [vmem:[#allocation17 + $0x14b0] sm:$0xff]
          %v2382 = vld [vmem:[#allocation17 + $0x14b8] sm:$0xff]
          %v2383 = vld [vmem:[#allocation17 + $0x14c0] sm:$0xff]
          %v2384 = vld [vmem:[#allocation17 + $0x14c8] sm:$0xff]
          %v2385 = vld [vmem:[#allocation17 + $0x14d0] sm:$0xff]
          %v2386 = vld [vmem:[#allocation17 + $0x14d8] sm:$0xff]
          %v2387 = vld [vmem:[#allocation17 + $0x14e0] sm:$0xff]
          %v2388 = vld [vmem:[#allocation17 + $0x14e8] sm:$0xff]
          %v2389 = vld [vmem:[#allocation17 + $0x14f0] sm:$0xff]
          %v2390 = vld [vmem:[#allocation17 + $0x14f8] sm:$0xff]
          %v2391 = vld [vmem:[#allocation17 + $0x1500] sm:$0xff]
          %v2392 = vld [vmem:[#allocation17 + $0x1508] sm:$0xff]
          %v2393 = vld [vmem:[#allocation17 + $0x1510] sm:$0xff]
          %v2394 = vld [vmem:[#allocation17 + $0x1518] sm:$0xff]
          %v2395 = vld [vmem:[#allocation17 + $0x1520] sm:$0xff]
          %v2396 = vld [vmem:[#allocation17 + $0x1528] sm:$0xff]
          %v2397 = vld [vmem:[#allocation17 + $0x1530] sm:$0xff]
          %v2398 = vld [vmem:[#allocation17 + $0x1538] sm:$0xff]
          %v2399 = vld [vmem:[#allocation17 + $0x1540] sm:$0xff]
          %v2400 = vld [vmem:[#allocation17 + $0x1548] sm:$0xff]
          %v2401 = vld [vmem:[#allocation17 + $0x1550] sm:$0xff]
          %v2402 = vld [vmem:[#allocation17 + $0x1558] sm:$0xff]
          %v2403 = vld [vmem:[#allocation17 + $0x1560] sm:$0xff]
          %v2404 = vld [vmem:[#allocation17 + $0x1568] sm:$0xff]
          %v2405 = vld [vmem:[#allocation17 + $0x1570] sm:$0xff]
          %v2406 = vld [vmem:[#allocation17 + $0x1578] sm:$0xff]
          %v2407 = vld [vmem:[#allocation17 + $0x1580] sm:$0xff]
          %v2408 = vld [vmem:[#allocation17 + $0x1588] sm:$0xff]
          %v2409 = vld [vmem:[#allocation17 + $0x1590] sm:$0xff]
          %v2410 = vld [vmem:[#allocation17 + $0x1598] sm:$0xff]
          %v2411 = vld [vmem:[#allocation17 + $0x15a0] sm:$0xff]
          %v2412 = vld [vmem:[#allocation17 + $0x15a8] sm:$0xff]
          %v2413 = vld [vmem:[#allocation17 + $0x15b0] sm:$0xff]
          %v2414 = vld [vmem:[#allocation17 + $0x15b8] sm:$0xff]
          %v2415 = vld [vmem:[#allocation17 + $0x15c0] sm:$0xff]
          %v2416 = vld [vmem:[#allocation17 + $0x15c8] sm:$0xff]
          %v2417 = vld [vmem:[#allocation17 + $0x15d0] sm:$0xff]
          %v2418 = vld [vmem:[#allocation17 + $0x15d8] sm:$0xff]
          %v2419 = vld [vmem:[#allocation17 + $0x15e0] sm:$0xff]
          %v2420 = vld [vmem:[#allocation17 + $0x15e8] sm:$0xff]
          %v2421 = vld [vmem:[#allocation17 + $0x15f0] sm:$0xff]
          %v2422 = vld [vmem:[#allocation17 + $0x15f8] sm:$0xff]
          %v2423 = vld [vmem:[#allocation17 + $0x1600] sm:$0xff]
          %v2424 = vld [vmem:[#allocation17 + $0x1608] sm:$0xff]
          %v2425 = vld [vmem:[#allocation17 + $0x1610] sm:$0xff]
          %v2426 = vld [vmem:[#allocation17 + $0x1618] sm:$0xff]
          %v2427 = vld [vmem:[#allocation17 + $0x1620] sm:$0xff]
          %v2428 = vld [vmem:[#allocation17 + $0x1628] sm:$0xff]
          %v2429 = vld [vmem:[#allocation17 + $0x1630] sm:$0xff]
          %v2430 = vld [vmem:[#allocation17 + $0x1638] sm:$0xff]
          %v2431 = vld [vmem:[#allocation17 + $0x1640] sm:$0xff]
          %v2432 = vld [vmem:[#allocation17 + $0x1648] sm:$0xff]
          %v2433 = vld [vmem:[#allocation17 + $0x1650] sm:$0xff]
          %v2434 = vld [vmem:[#allocation17 + $0x1658] sm:$0xff]
          %v2435 = vld [vmem:[#allocation17 + $0x1660] sm:$0xff]
          %v2436 = vld [vmem:[#allocation17 + $0x1668] sm:$0xff]
          %v2437 = vld [vmem:[#allocation17 + $0x1670] sm:$0xff]
          %v2438 = vld [vmem:[#allocation17 + $0x1678] sm:$0xff]
          %v2439 = vld [vmem:[#allocation17 + $0x1680] sm:$0xff]
          %v2440 = vld [vmem:[#allocation17 + $0x1688] sm:$0xff]
          %v2441 = vld [vmem:[#allocation17 + $0x1690] sm:$0xff]
          %v2442 = vld [vmem:[#allocation17 + $0x1698] sm:$0xff]
          %v2443 = vld [vmem:[#allocation17 + $0x16a0] sm:$0xff]
          %v2444 = vld [vmem:[#allocation17 + $0x16a8] sm:$0xff]
          %v2445 = vld [vmem:[#allocation17 + $0x16b0] sm:$0xff]
          %v2446 = vld [vmem:[#allocation17 + $0x16b8] sm:$0xff]
          %v2447 = vld [vmem:[#allocation17 + $0x16c0] sm:$0xff]
          %v2448 = vld [vmem:[#allocation17 + $0x16c8] sm:$0xff]
          %v2449 = vld [vmem:[#allocation17 + $0x16d0] sm:$0xff]
          %v2450 = vld [vmem:[#allocation17 + $0x16d8] sm:$0xff]
          %v2451 = vld [vmem:[#allocation17 + $0x16e0] sm:$0xff]
          %v2452 = vld [vmem:[#allocation17 + $0x16e8] sm:$0xff]
          %v2453 = vld [vmem:[#allocation17 + $0x16f0] sm:$0xff]
          %v2454 = vld [vmem:[#allocation17 + $0x16f8] sm:$0xff]
          %v2455 = vld [vmem:[#allocation17 + $0x1700] sm:$0xff]
          %v2456 = vld [vmem:[#allocation17 + $0x1708] sm:$0xff]
          %v2457 = vld [vmem:[#allocation17 + $0x1710] sm:$0xff]
          %v2458 = vld [vmem:[#allocation17 + $0x1718] sm:$0xff]
          %v2459 = vld [vmem:[#allocation17 + $0x1720] sm:$0xff]
          %v2460 = vld [vmem:[#allocation17 + $0x1728] sm:$0xff]
          %v2461 = vld [vmem:[#allocation17 + $0x1730] sm:$0xff]
          %v2462 = vld [vmem:[#allocation17 + $0x1738] sm:$0xff]
          %v2463 = vld [vmem:[#allocation17 + $0x1740] sm:$0xff]
          %v2464 = vld [vmem:[#allocation17 + $0x1748] sm:$0xff]
          %v2465 = vld [vmem:[#allocation17 + $0x1750] sm:$0xff]
          %v2466 = vld [vmem:[#allocation17 + $0x1758] sm:$0xff]
          %v2467 = vld [vmem:[#allocation17 + $0x1760] sm:$0xff]
          %v2468 = vld [vmem:[#allocation17 + $0x1768] sm:$0xff]
          %v2469 = vld [vmem:[#allocation17 + $0x1770] sm:$0xff]
          %v2470 = vld [vmem:[#allocation17 + $0x1778] sm:$0xff]
          %v2471 = vld [vmem:[#allocation17 + $0x1780] sm:$0xff]
          %v2472 = vld [vmem:[#allocation17 + $0x1788] sm:$0xff]
          %v2473 = vld [vmem:[#allocation17 + $0x1790] sm:$0xff]
          %v2474 = vld [vmem:[#allocation17 + $0x1798] sm:$0xff]
          %v2475 = vld [vmem:[#allocation17 + $0x17a0] sm:$0xff]
          %v2476 = vld [vmem:[#allocation17 + $0x17a8] sm:$0xff]
          %v2477 = vld [vmem:[#allocation17 + $0x17b0] sm:$0xff]
          %v2478 = vld [vmem:[#allocation17 + $0x17b8] sm:$0xff]
          %v2479 = vld [vmem:[#allocation17 + $0x17c0] sm:$0xff]
          %v2480 = vld [vmem:[#allocation17 + $0x17c8] sm:$0xff]
          %v2481 = vld [vmem:[#allocation17 + $0x17d0] sm:$0xff]
          %v2482 = vld [vmem:[#allocation17 + $0x17d8] sm:$0xff]
          %v2483 = vld [vmem:[#allocation17 + $0x17e0] sm:$0xff]
          %v2484 = vld [vmem:[#allocation17 + $0x17e8] sm:$0xff]
          %v2485 = vld [vmem:[#allocation17 + $0x17f0] sm:$0xff]
          %v2486 = vld [vmem:[#allocation17 + $0x17f8] sm:$0xff]
          %v2487 = vld [vmem:[#allocation17 + $0x1800] sm:$0xff]
          %v2488 = vld [vmem:[#allocation17 + $0x1808] sm:$0xff]
          %v2489 = vld [vmem:[#allocation17 + $0x1810] sm:$0xff]
          %v2490 = vld [vmem:[#allocation17 + $0x1818] sm:$0xff]
          %v2491 = vld [vmem:[#allocation17 + $0x1820] sm:$0xff]
          %v2492 = vld [vmem:[#allocation17 + $0x1828] sm:$0xff]
          %v2493 = vld [vmem:[#allocation17 + $0x1830] sm:$0xff]
          %v2494 = vld [vmem:[#allocation17 + $0x1838] sm:$0xff]
          %v2495 = vld [vmem:[#allocation17 + $0x1840] sm:$0xff]
          %v2496 = vld [vmem:[#allocation17 + $0x1848] sm:$0xff]
          %v2497 = vld [vmem:[#allocation17 + $0x1850] sm:$0xff]
          %v2498 = vld [vmem:[#allocation17 + $0x1858] sm:$0xff]
          %v2499 = vld [vmem:[#allocation17 + $0x1860] sm:$0xff]
          %v2500 = vld [vmem:[#allocation17 + $0x1868] sm:$0xff]
          %v2501 = vld [vmem:[#allocation17 + $0x1870] sm:$0xff]
          %v2502 = vld [vmem:[#allocation17 + $0x1878] sm:$0xff]
          %v2503 = vld [vmem:[#allocation17 + $0x1880] sm:$0xff]
          %v2504 = vld [vmem:[#allocation17 + $0x1888] sm:$0xff]
          %v2505 = vld [vmem:[#allocation17 + $0x1890] sm:$0xff]
          %v2506 = vld [vmem:[#allocation17 + $0x1898] sm:$0xff]
          %v2507 = vld [vmem:[#allocation17 + $0x18a0] sm:$0xff]
          %v2508 = vld [vmem:[#allocation17 + $0x18a8] sm:$0xff]
          %v2509 = vld [vmem:[#allocation17 + $0x18b0] sm:$0xff]
          %v2510 = vld [vmem:[#allocation17 + $0x18b8] sm:$0xff]
          %v2511 = vld [vmem:[#allocation17 + $0x18c0] sm:$0xff]
          %v2512 = vld [vmem:[#allocation17 + $0x18c8] sm:$0xff]
          %v2513 = vld [vmem:[#allocation17 + $0x18d0] sm:$0xff]
          %v2514 = vld [vmem:[#allocation17 + $0x18d8] sm:$0xff]
          %v2515 = vld [vmem:[#allocation17 + $0x18e0] sm:$0xff]
          %v2516 = vld [vmem:[#allocation17 + $0x18e8] sm:$0xff]
          %v2517 = vld [vmem:[#allocation17 + $0x18f0] sm:$0xff]
          %v2518 = vld [vmem:[#allocation17 + $0x18f8] sm:$0xff]
          %v2519 = vld [vmem:[#allocation17 + $0x1900] sm:$0xff]
          %v2520 = vld [vmem:[#allocation17 + $0x1908] sm:$0xff]
          %v2521 = vld [vmem:[#allocation17 + $0x1910] sm:$0xff]
          %v2522 = vld [vmem:[#allocation17 + $0x1918] sm:$0xff]
          %v2523 = vld [vmem:[#allocation17 + $0x1920] sm:$0xff]
          %v2524 = vld [vmem:[#allocation17 + $0x1928] sm:$0xff]
          %v2525 = vld [vmem:[#allocation17 + $0x1930] sm:$0xff]
          %v2526 = vld [vmem:[#allocation17 + $0x1938] sm:$0xff]
          %v2527 = vld [vmem:[#allocation17 + $0x1940] sm:$0xff]
          %v2528 = vld [vmem:[#allocation17 + $0x1948] sm:$0xff]
          %v2529 = vld [vmem:[#allocation17 + $0x1950] sm:$0xff]
          %v2530 = vld [vmem:[#allocation17 + $0x1958] sm:$0xff]
          %v2531 = vld [vmem:[#allocation17 + $0x1960] sm:$0xff]
          %v2532 = vld [vmem:[#allocation17 + $0x1968] sm:$0xff]
          %v2533 = vld [vmem:[#allocation17 + $0x1970] sm:$0xff]
          %v2534 = vld [vmem:[#allocation17 + $0x1978] sm:$0xff]
          %v2535 = vld [vmem:[#allocation17 + $0x1980] sm:$0xff]
          %v2536 = vld [vmem:[#allocation17 + $0x1988] sm:$0xff]
          %v2537 = vld [vmem:[#allocation17 + $0x1990] sm:$0xff]
          %v2538 = vld [vmem:[#allocation17 + $0x1998] sm:$0xff]
          %v2539 = vld [vmem:[#allocation17 + $0x19a0] sm:$0xff]
          %v2540 = vld [vmem:[#allocation17 + $0x19a8] sm:$0xff]
          %v2541 = vld [vmem:[#allocation17 + $0x19b0] sm:$0xff]
          %v2542 = vld [vmem:[#allocation17 + $0x19b8] sm:$0xff]
          %v2543 = vld [vmem:[#allocation17 + $0x19c0] sm:$0xff]
          %v2544 = vld [vmem:[#allocation17 + $0x19c8] sm:$0xff]
          %v2545 = vld [vmem:[#allocation17 + $0x19d0] sm:$0xff]
          %v2546 = vld [vmem:[#allocation17 + $0x19d8] sm:$0xff]
          %v2547 = vld [vmem:[#allocation17 + $0x19e0] sm:$0xff]
          %v2548 = vld [vmem:[#allocation17 + $0x19e8] sm:$0xff]
          %v2549 = vld [vmem:[#allocation17 + $0x19f0] sm:$0xff]
          %v2550 = vld [vmem:[#allocation17 + $0x19f8] sm:$0xff]
          %v2551 = vld [vmem:[#allocation17 + $0x1a00] sm:$0xff]
          %v2552 = vld [vmem:[#allocation17 + $0x1a08] sm:$0xff]
          %v2553 = vld [vmem:[#allocation17 + $0x1a10] sm:$0xff]
          %v2554 = vld [vmem:[#allocation17 + $0x1a18] sm:$0xff]
          %v2555 = vld [vmem:[#allocation17 + $0x1a20] sm:$0xff]
          %v2556 = vld [vmem:[#allocation17 + $0x1a28] sm:$0xff]
          %v2557 = vld [vmem:[#allocation17 + $0x1a30] sm:$0xff]
          %v2558 = vld [vmem:[#allocation17 + $0x1a38] sm:$0xff]
          %v2559 = vld [vmem:[#allocation17 + $0x1a40] sm:$0xff]
          %v2560 = vld [vmem:[#allocation17 + $0x1a48] sm:$0xff]
          %v2561 = vld [vmem:[#allocation17 + $0x1a50] sm:$0xff]
          %v2562 = vld [vmem:[#allocation17 + $0x1a58] sm:$0xff]
          %v2563 = vld [vmem:[#allocation17 + $0x1a60] sm:$0xff]
          %v2564 = vld [vmem:[#allocation17 + $0x1a68] sm:$0xff]
          %v2565 = vld [vmem:[#allocation17 + $0x1a70] sm:$0xff]
          %v2566 = vld [vmem:[#allocation17 + $0x1a78] sm:$0xff]
          %v2567 = vld [vmem:[#allocation17 + $0x1a80] sm:$0xff]
          %v2568 = vld [vmem:[#allocation17 + $0x1a88] sm:$0xff]
          %v2569 = vld [vmem:[#allocation17 + $0x1a90] sm:$0xff]
          %v2570 = vld [vmem:[#allocation17 + $0x1a98] sm:$0xff]
          %v2571 = vld [vmem:[#allocation17 + $0x1aa0] sm:$0xff]
          %v2572 = vld [vmem:[#allocation17 + $0x1aa8] sm:$0xff]
          %v2573 = vld [vmem:[#allocation17 + $0x1ab0] sm:$0xff]
          %v2574 = vld [vmem:[#allocation17 + $0x1ab8] sm:$0xff]
          %v2575 = vld [vmem:[#allocation17 + $0x1ac0] sm:$0xff]
          %v2576 = vld [vmem:[#allocation17 + $0x1ac8] sm:$0xff]
          %v2577 = vld [vmem:[#allocation17 + $0x1ad0] sm:$0xff]
          %v2578 = vld [vmem:[#allocation17 + $0x1ad8] sm:$0xff]
          %v2579 = vld [vmem:[#allocation17 + $0x1ae0] sm:$0xff]
          %v2580 = vld [vmem:[#allocation17 + $0x1ae8] sm:$0xff]
          %v2581 = vld [vmem:[#allocation17 + $0x1af0] sm:$0xff]
          %v2582 = vld [vmem:[#allocation17 + $0x1af8] sm:$0xff]
          %v2583 = vld [vmem:[#allocation18] sm:$0xff]
          %v2584 = vld [vmem:[#allocation18 + $0x8] sm:$0xff]
          %v2585 = vld [vmem:[#allocation18 + $0x10] sm:$0x3]
          %v2589 = vlaneseq
          %v2590 = vshrl.u32 %v2589, 7
          %v2591 = vsub.s32 0, %v2590
          %v2592 = vrot.slane %v2583, %v2591
          %v2593 = vlaneseq
          %v2594 = vshrl.u32 %v2593, 7
          %v2595 = vsub.s32 1, %v2594
          %v2596 = vrot.slane %v2583, %v2595
          %v2597 = vlaneseq
          %v2598 = vshrl.u32 %v2597, 7
          %v2599 = vsub.s32 2, %v2598
          %v2600 = vrot.slane %v2583, %v2599
          %v2601 = vlaneseq
          %v2602 = vshrl.u32 %v2601, 7
          %v2603 = vsub.s32 3, %v2602
          %v2604 = vrot.slane %v2583, %v2603
          %v2605 = vlaneseq
          %v2606 = vshrl.u32 %v2605, 7
          %v2607 = vsub.s32 4, %v2606
          %v2608 = vrot.slane %v2583, %v2607
          %v2609 = vlaneseq
          %v2610 = vshrl.u32 %v2609, 7
          %v2611 = vsub.s32 5, %v2610
          %v2612 = vrot.slane %v2583, %v2611
          %v2613 = vlaneseq
          %v2614 = vshrl.u32 %v2613, 7
          %v2615 = vsub.s32 6, %v2614
          %v2616 = vrot.slane %v2583, %v2615
          %v2617 = vlaneseq
          %v2618 = vshrl.u32 %v2617, 7
          %v2619 = vsub.s32 7, %v2618
          %v2620 = vrot.slane %v2583, %v2619
          %v2621 = vlaneseq
          %v2622 = vshrl.u32 %v2621, 7
          %v2623 = vsub.s32 0, %v2622
          %v2624 = vrot.slane %v2584, %v2623
          %v2625 = vlaneseq
          %v2626 = vshrl.u32 %v2625, 7
          %v2627 = vsub.s32 1, %v2626
          %v2628 = vrot.slane %v2584, %v2627
          %v2629 = vlaneseq
          %v2630 = vshrl.u32 %v2629, 7
          %v2631 = vsub.s32 2, %v2630
          %v2632 = vrot.slane %v2584, %v2631
          %v2633 = vlaneseq
          %v2634 = vshrl.u32 %v2633, 7
          %v2635 = vsub.s32 3, %v2634
          %v2636 = vrot.slane %v2584, %v2635
          %v2637 = vlaneseq
          %v2638 = vshrl.u32 %v2637, 7
          %v2639 = vsub.s32 4, %v2638
          %v2640 = vrot.slane %v2584, %v2639
          %v2641 = vlaneseq
          %v2642 = vshrl.u32 %v2641, 7
          %v2643 = vsub.s32 5, %v2642
          %v2644 = vrot.slane %v2584, %v2643
          %v2645 = vlaneseq
          %v2646 = vshrl.u32 %v2645, 7
          %v2647 = vsub.s32 6, %v2646
          %v2648 = vrot.slane %v2584, %v2647
          %v2649 = vlaneseq
          %v2650 = vshrl.u32 %v2649, 7
          %v2651 = vsub.s32 7, %v2650
          %v2652 = vrot.slane %v2584, %v2651
          %v2653 = vlaneseq
          %v2654 = vshrl.u32 %v2653, 7
          %v2655 = vsub.s32 0, %v2654
          %v2656 = vrot.slane %v2585, %v2655
          %v2657 = vlaneseq
          %v2658 = vshrl.u32 %v2657, 7
          %v2659 = vsub.s32 1, %v2658
          %v2660 = vrot.slane %v2585, %v2659
          %2679 = vmatprep.subr.mxu0 %v1990
          %2680 = vmatpush1.msra.mxu0 %v1989
          %2681 = vmatprep.subr.mxu0 %v1972
          %2682 = vmatpush1.msra.mxu0 %v1971
          %2683 = vmatprep.subr.mxu0 %v1954
          %2684 = vmatpush1.msra.mxu0 %v1953
          %2685 = vmatprep.subr.mxu0 %v1936
          %2686 = vmatpush1.msra.mxu0 %v1935
          %2687 = vmatprep.subr.mxu0 %v1918
          %2688 = vmatpush1.msra.mxu0 %v1917
          %2689 = vmatprep.subr.mxu0 %v1900
          %2690 = vmatpush1.msra.mxu0 %v1899
          %2691 = vmatprep.subr.mxu0 %v1882
          %2692 = vmatpush1.msra.mxu0 %v1881
          %2693 = vmatprep.subr.mxu0 %v1864
          %2694 = vmatpush1.msra.mxu0 %v1863
          %2695 = vmatprep.subr.mxu0 %v1846
          %2696 = vmatpush1.msra.mxu0 %v1845
          %2697 = vmatprep.subr.mxu0 %v1828
          %2698 = vmatpush1.msra.mxu0 %v1827
          %2699 = vmatprep.subr.mxu0 %v1810
          %2700 = vmatpush1.msra.mxu0 %v1809
          %2701 = vmatprep.subr.mxu0 %v1792
          %2702 = vmatpush1.msra.mxu0 %v1791
          %2703 = vmatprep.subr.mxu0 %v1774
          %2704 = vmatpush1.msra.mxu0 %v1773
          %2705 = vmatprep.subr.mxu0 %v1756
          %2706 = vmatpush1.msra.mxu0 %v1755
          %2707 = vmatprep.subr.mxu0 %v1738
          %2708 = vmatpush1.msra.mxu0 %v1737
          %2709 = vmatprep.subr.mxu0 %v1720
          %2710 = vmatpush1.msra.mxu0 %v1719
          %2711 = vmatprep.subr.mxu0 %v2278
          %2712 = vmatpush2.msra.mxu0 %v2277
          %2713 = vmatprep.subr.mxu0 %v2260
          %2714 = vmatpush2.msra.mxu0 %v2259
          %2715 = vmatprep.subr.mxu0 %v2242
          %2716 = vmatpush2.msra.mxu0 %v2241
          %2717 = vmatprep.subr.mxu0 %v2224
          %2718 = vmatpush2.msra.mxu0 %v2223
          %2719 = vmatprep.subr.mxu0 %v2206
          %2720 = vmatpush2.msra.mxu0 %v2205
          %2721 = vmatprep.subr.mxu0 %v2188
          %2722 = vmatpush2.msra.mxu0 %v2187
          %2723 = vmatprep.subr.mxu0 %v2170
          %2724 = vmatpush2.msra.mxu0 %v2169
          %2725 = vmatprep.subr.mxu0 %v2152
          %2726 = vmatpush2.msra.mxu0 %v2151
          %2727 = vmatprep.subr.mxu0 %v2134
          %2728 = vmatpush2.msra.mxu0 %v2133
          %2729 = vmatprep.subr.mxu0 %v2116
          %2730 = vmatpush2.msra.mxu0 %v2115
          %2731 = vmatprep.subr.mxu0 %v2098
          %2732 = vmatpush2.msra.mxu0 %v2097
          %2733 = vmatprep.subr.mxu0 %v2080
          %2734 = vmatpush2.msra.mxu0 %v2079
          %2735 = vmatprep.subr.mxu0 %v2062
          %2736 = vmatpush2.msra.mxu0 %v2061
          %2737 = vmatprep.subr.mxu0 %v2044
          %2738 = vmatpush2.msra.mxu0 %v2043
          %2739 = vmatprep.subr.mxu0 %v2026
          %2740 = vmatpush2.msra.mxu0 %v2025
          %2741 = vmatprep.subr.mxu0 %v2008
          %2742 = vmatpush2.msra.mxu0 %v2007
          %2743 = vmatprep.mubr.f32.mxu0 %v1717
          %2744 = vmatmul.mubr.f32.gmra.mxu0 %v1716
          %v2745 = vpop.f32.mrf.mxu0
          %v2746 = vadd.f32 %v2592, %v2745
          %v2747 = vpop.f32.mrf.mxu0
          %v2748 = vadd.f32 %v2596, %v2747
          %2749 = vdwg.mxu0
          %2750 = vmatprep.subr.mxu0 %v2566
          %2751 = vmatpush1.msra.mxu0 %v2565
          %2752 = vmatprep.subr.mxu0 %v2548
          %2753 = vmatpush1.msra.mxu0 %v2547
          %2754 = vmatprep.subr.mxu0 %v2530
          %2755 = vmatpush1.msra.mxu0 %v2529
          %2756 = vmatprep.subr.mxu0 %v2512
          %2757 = vmatpush1.msra.mxu0 %v2511
          %2758 = vmatprep.subr.mxu0 %v2494
          %2759 = vmatpush1.msra.mxu0 %v2493
          %2760 = vmatprep.subr.mxu0 %v2476
          %2761 = vmatpush1.msra.mxu0 %v2475
          %2762 = vmatprep.subr.mxu0 %v2458
          %2763 = vmatpush1.msra.mxu0 %v2457
          %2764 = vmatprep.subr.mxu0 %v2440
          %2765 = vmatpush1.msra.mxu0 %v2439
          %2766 = vmatprep.subr.mxu0 %v2422
          %2767 = vmatpush1.msra.mxu0 %v2421
          %2768 = vmatprep.subr.mxu0 %v2404
          %2769 = vmatpush1.msra.mxu0 %v2403
          %2770 = vmatprep.subr.mxu0 %v2386
          %2771 = vmatpush1.msra.mxu0 %v2385
          %2772 = vmatprep.subr.mxu0 %v2368
          %2773 = vmatpush1.msra.mxu0 %v2367
          %2774 = vmatprep.subr.mxu0 %v2350
          %2775 = vmatpush1.msra.mxu0 %v2349
          %2776 = vmatprep.subr.mxu0 %v2332
          %2777 = vmatpush1.msra.mxu0 %v2331
          %2778 = vmatprep.subr.mxu0 %v2314
          %2779 = vmatpush1.msra.mxu0 %v2313
          %2780 = vmatprep.subr.mxu0 %v2296
          %2781 = vmatpush1.msra.mxu0 %v2295
          %2782 = vmatprep.subr.mxu0 0.0
          %2783 = vmatpush2.msra.mxu0 0.0
          %2784 = vmatprep.subr.mxu0 0.0
          %2785 = vmatpush2.msra.mxu0 0.0
          %2786 = vmatprep.subr.mxu0 0.0
          %2787 = vmatpush2.msra.mxu0 0.0
          %2788 = vmatprep.subr.mxu0 0.0
          %2789 = vmatpush2.msra.mxu0 0.0
          %2790 = vmatprep.subr.mxu0 0.0
          %2791 = vmatpush2.msra.mxu0 0.0
          %2792 = vmatprep.subr.mxu0 0.0
          %2793 = vmatpush2.msra.mxu0 0.0
          %2794 = vmatprep.subr.mxu0 0.0
          %2795 = vmatpush2.msra.mxu0 0.0
          %2796 = vmatprep.subr.mxu0 0.0
          %2797 = vmatpush2.msra.mxu0 0.0
          %2798 = vmatprep.subr.mxu0 0.0
          %2799 = vmatpush2.msra.mxu0 0.0
          %2800 = vmatprep.subr.mxu0 0.0
          %2801 = vmatpush2.msra.mxu0 0.0
          %2802 = vmatprep.subr.mxu0 0.0
          %2803 = vmatpush2.msra.mxu0 0.0
          %2804 = vmatprep.subr.mxu0 0.0
          %2805 = vmatpush2.msra.mxu0 0.0
          %2806 = vmatprep.subr.mxu0 0.0
          %2807 = vmatpush2.msra.mxu0 0.0
          %2808 = vmatprep.subr.mxu0 0.0
          %2809 = vmatpush2.msra.mxu0 0.0
          %2810 = vmatprep.subr.mxu0 0.0
          %2811 = vmatpush2.msra.mxu0 0.0
          %2812 = vmatprep.subr.mxu0 0.0
          %2813 = vmatpush2.msra.mxu0 0.0
          %2814 = vmatprep.mubr.f32.mxu0 0.0
          %2815 = vmatmul.mubr.f32.gmra.mxu0 %v1718
          %v2816 = vpop.f32.mrf.mxu0
          %v2817 = vadd.f32 %v2746, %v2816
          %v2818 = vpop.f32.mrf.mxu0
          %v2819 = vadd.f32 %v2748, %v2818
          %2820 = vdwg.mxu0
          %2821 = vmatprep.subr.mxu0 %v1992
          %2822 = vmatpush1.msra.mxu0 %v1991
          %2823 = vmatprep.subr.mxu0 %v1974
          %2824 = vmatpush1.msra.mxu0 %v1973
          %2825 = vmatprep.subr.mxu0 %v1956
          %2826 = vmatpush1.msra.mxu0 %v1955
          %2827 = vmatprep.subr.mxu0 %v1938
          %2828 = vmatpush1.msra.mxu0 %v1937
          %2829 = vmatprep.subr.mxu0 %v1920
          %2830 = vmatpush1.msra.mxu0 %v1919
          %2831 = vmatprep.subr.mxu0 %v1902
          %2832 = vmatpush1.msra.mxu0 %v1901
          %2833 = vmatprep.subr.mxu0 %v1884
          %2834 = vmatpush1.msra.mxu0 %v1883
          %2835 = vmatprep.subr.mxu0 %v1866
          %2836 = vmatpush1.msra.mxu0 %v1865
          %2837 = vmatprep.subr.mxu0 %v1848
          %2838 = vmatpush1.msra.mxu0 %v1847
          %2839 = vmatprep.subr.mxu0 %v1830
          %2840 = vmatpush1.msra.mxu0 %v1829
          %2841 = vmatprep.subr.mxu0 %v1812
          %2842 = vmatpush1.msra.mxu0 %v1811
          %2843 = vmatprep.subr.mxu0 %v1794
          %2844 = vmatpush1.msra.mxu0 %v1793
          %2845 = vmatprep.subr.mxu0 %v1776
          %2846 = vmatpush1.msra.mxu0 %v1775
          %2847 = vmatprep.subr.mxu0 %v1758
          %2848 = vmatpush1.msra.mxu0 %v1757
          %2849 = vmatprep.subr.mxu0 %v1740
          %2850 = vmatpush1.msra.mxu0 %v1739
          %2851 = vmatprep.subr.mxu0 %v1722
          %2852 = vmatpush1.msra.mxu0 %v1721
          %2853 = vmatprep.subr.mxu0 %v2280
          %2854 = vmatpush2.msra.mxu0 %v2279
          %2855 = vmatprep.subr.mxu0 %v2262
          %2856 = vmatpush2.msra.mxu0 %v2261
          %2857 = vmatprep.subr.mxu0 %v2244
          %2858 = vmatpush2.msra.mxu0 %v2243
          %2859 = vmatprep.subr.mxu0 %v2226
          %2860 = vmatpush2.msra.mxu0 %v2225
          %2861 = vmatprep.subr.mxu0 %v2208
          %2862 = vmatpush2.msra.mxu0 %v2207
          %2863 = vmatprep.subr.mxu0 %v2190
          %2864 = vmatpush2.msra.mxu0 %v2189
          %2865 = vmatprep.subr.mxu0 %v2172
          %2866 = vmatpush2.msra.mxu0 %v2171
          %2867 = vmatprep.subr.mxu0 %v2154
          %2868 = vmatpush2.msra.mxu0 %v2153
          %2869 = vmatprep.subr.mxu0 %v2136
          %2870 = vmatpush2.msra.mxu0 %v2135
          %2871 = vmatprep.subr.mxu0 %v2118
          %2872 = vmatpush2.msra.mxu0 %v2117
          %2873 = vmatprep.subr.mxu0 %v2100
          %2874 = vmatpush2.msra.mxu0 %v2099
          %2875 = vmatprep.subr.mxu0 %v2082
          %2876 = vmatpush2.msra.mxu0 %v2081
          %2877 = vmatprep.subr.mxu0 %v2064
          %2878 = vmatpush2.msra.mxu0 %v2063
          %2879 = vmatprep.subr.mxu0 %v2046
          %2880 = vmatpush2.msra.mxu0 %v2045
          %2881 = vmatprep.subr.mxu0 %v2028
          %2882 = vmatpush2.msra.mxu0 %v2027
          %2883 = vmatprep.subr.mxu0 %v2010
          %2884 = vmatpush2.msra.mxu0 %v2009
          %2885 = vmatprep.mubr.f32.mxu0 %v1717
          %2886 = vmatmul.mubr.f32.gmra.mxu0 %v1716
          %v2887 = vpop.f32.mrf.mxu0
          %v2888 = vadd.f32 %v2600, %v2887
          %v2889 = vpop.f32.mrf.mxu0
          %v2890 = vadd.f32 %v2604, %v2889
          %2891 = vdwg.mxu0
          %2892 = vmatprep.subr.mxu0 %v2568
          %2893 = vmatpush1.msra.mxu0 %v2567
          %2894 = vmatprep.subr.mxu0 %v2550
          %2895 = vmatpush1.msra.mxu0 %v2549
          %2896 = vmatprep.subr.mxu0 %v2532
          %2897 = vmatpush1.msra.mxu0 %v2531
          %2898 = vmatprep.subr.mxu0 %v2514
          %2899 = vmatpush1.msra.mxu0 %v2513
          %2900 = vmatprep.subr.mxu0 %v2496
          %2901 = vmatpush1.msra.mxu0 %v2495
          %2902 = vmatprep.subr.mxu0 %v2478
          %2903 = vmatpush1.msra.mxu0 %v2477
          %2904 = vmatprep.subr.mxu0 %v2460
          %2905 = vmatpush1.msra.mxu0 %v2459
          %2906 = vmatprep.subr.mxu0 %v2442
          %2907 = vmatpush1.msra.mxu0 %v2441
          %2908 = vmatprep.subr.mxu0 %v2424
          %2909 = vmatpush1.msra.mxu0 %v2423
          %2910 = vmatprep.subr.mxu0 %v2406
          %2911 = vmatpush1.msra.mxu0 %v2405
          %2912 = vmatprep.subr.mxu0 %v2388
          %2913 = vmatpush1.msra.mxu0 %v2387
          %2914 = vmatprep.subr.mxu0 %v2370
          %2915 = vmatpush1.msra.mxu0 %v2369
          %2916 = vmatprep.subr.mxu0 %v2352
          %2917 = vmatpush1.msra.mxu0 %v2351
          %2918 = vmatprep.subr.mxu0 %v2334
          %2919 = vmatpush1.msra.mxu0 %v2333
          %2920 = vmatprep.subr.mxu0 %v2316
          %2921 = vmatpush1.msra.mxu0 %v2315
          %2922 = vmatprep.subr.mxu0 %v2298
          %2923 = vmatpush1.msra.mxu0 %v2297
          %2924 = vmatprep.subr.mxu0 0.0
          %2925 = vmatpush2.msra.mxu0 0.0
          %2926 = vmatprep.subr.mxu0 0.0
          %2927 = vmatpush2.msra.mxu0 0.0
          %2928 = vmatprep.subr.mxu0 0.0
          %2929 = vmatpush2.msra.mxu0 0.0
          %2930 = vmatprep.subr.mxu0 0.0
          %2931 = vmatpush2.msra.mxu0 0.0
          %2932 = vmatprep.subr.mxu0 0.0
          %2933 = vmatpush2.msra.mxu0 0.0
          %2934 = vmatprep.subr.mxu0 0.0
          %2935 = vmatpush2.msra.mxu0 0.0
          %2936 = vmatprep.subr.mxu0 0.0
          %2937 = vmatpush2.msra.mxu0 0.0
          %2938 = vmatprep.subr.mxu0 0.0
          %2939 = vmatpush2.msra.mxu0 0.0
          %2940 = vmatprep.subr.mxu0 0.0
          %2941 = vmatpush2.msra.mxu0 0.0
          %2942 = vmatprep.subr.mxu0 0.0
          %2943 = vmatpush2.msra.mxu0 0.0
          %2944 = vmatprep.subr.mxu0 0.0
          %2945 = vmatpush2.msra.mxu0 0.0
          %2946 = vmatprep.subr.mxu0 0.0
          %2947 = vmatpush2.msra.mxu0 0.0
          %2948 = vmatprep.subr.mxu0 0.0
          %2949 = vmatpush2.msra.mxu0 0.0
          %2950 = vmatprep.subr.mxu0 0.0
          %2951 = vmatpush2.msra.mxu0 0.0
          %2952 = vmatprep.subr.mxu0 0.0
          %2953 = vmatpush2.msra.mxu0 0.0
          %2954 = vmatprep.subr.mxu0 0.0
          %2955 = vmatpush2.msra.mxu0 0.0
          %2956 = vmatprep.mubr.f32.mxu0 0.0
          %2957 = vmatmul.mubr.f32.gmra.mxu0 %v1718
          %v2958 = vpop.f32.mrf.mxu0
          %v2959 = vadd.f32 %v2888, %v2958
          %v2960 = vpop.f32.mrf.mxu0
          %v2961 = vadd.f32 %v2890, %v2960
          %2962 = vdwg.mxu0
          %2963 = vmatprep.subr.mxu0 %v1994
          %2964 = vmatpush1.msra.mxu0 %v1993
          %2965 = vmatprep.subr.mxu0 %v1976
          %2966 = vmatpush1.msra.mxu0 %v1975
          %2967 = vmatprep.subr.mxu0 %v1958
          %2968 = vmatpush1.msra.mxu0 %v1957
          %2969 = vmatprep.subr.mxu0 %v1940
          %2970 = vmatpush1.msra.mxu0 %v1939
          %2971 = vmatprep.subr.mxu0 %v1922
          %2972 = vmatpush1.msra.mxu0 %v1921
          %2973 = vmatprep.subr.mxu0 %v1904
          %2974 = vmatpush1.msra.mxu0 %v1903
          %2975 = vmatprep.subr.mxu0 %v1886
          %2976 = vmatpush1.msra.mxu0 %v1885
          %2977 = vmatprep.subr.mxu0 %v1868
          %2978 = vmatpush1.msra.mxu0 %v1867
          %2979 = vmatprep.subr.mxu0 %v1850
          %2980 = vmatpush1.msra.mxu0 %v1849
          %2981 = vmatprep.subr.mxu0 %v1832
          %2982 = vmatpush1.msra.mxu0 %v1831
          %2983 = vmatprep.subr.mxu0 %v1814
          %2984 = vmatpush1.msra.mxu0 %v1813
          %2985 = vmatprep.subr.mxu0 %v1796
          %2986 = vmatpush1.msra.mxu0 %v1795
          %2987 = vmatprep.subr.mxu0 %v1778
          %2988 = vmatpush1.msra.mxu0 %v1777
          %2989 = vmatprep.subr.mxu0 %v1760
          %2990 = vmatpush1.msra.mxu0 %v1759
          %2991 = vmatprep.subr.mxu0 %v1742
          %2992 = vmatpush1.msra.mxu0 %v1741
          %2993 = vmatprep.subr.mxu0 %v1724
          %2994 = vmatpush1.msra.mxu0 %v1723
          %2995 = vmatprep.subr.mxu0 %v2282
          %2996 = vmatpush2.msra.mxu0 %v2281
          %2997 = vmatprep.subr.mxu0 %v2264
          %2998 = vmatpush2.msra.mxu0 %v2263
          %2999 = vmatprep.subr.mxu0 %v2246
          %3000 = vmatpush2.msra.mxu0 %v2245
          %3001 = vmatprep.subr.mxu0 %v2228
          %3002 = vmatpush2.msra.mxu0 %v2227
          %3003 = vmatprep.subr.mxu0 %v2210
          %3004 = vmatpush2.msra.mxu0 %v2209
          %3005 = vmatprep.subr.mxu0 %v2192
          %3006 = vmatpush2.msra.mxu0 %v2191
          %3007 = vmatprep.subr.mxu0 %v2174
          %3008 = vmatpush2.msra.mxu0 %v2173
          %3009 = vmatprep.subr.mxu0 %v2156
          %3010 = vmatpush2.msra.mxu0 %v2155
          %3011 = vmatprep.subr.mxu0 %v2138
          %3012 = vmatpush2.msra.mxu0 %v2137
          %3013 = vmatprep.subr.mxu0 %v2120
          %3014 = vmatpush2.msra.mxu0 %v2119
          %3015 = vmatprep.subr.mxu0 %v2102
          %3016 = vmatpush2.msra.mxu0 %v2101
          %3017 = vmatprep.subr.mxu0 %v2084
          %3018 = vmatpush2.msra.mxu0 %v2083
          %3019 = vmatprep.subr.mxu0 %v2066
          %3020 = vmatpush2.msra.mxu0 %v2065
          %3021 = vmatprep.subr.mxu0 %v2048
          %3022 = vmatpush2.msra.mxu0 %v2047
          %3023 = vmatprep.subr.mxu0 %v2030
          %3024 = vmatpush2.msra.mxu0 %v2029
          %3025 = vmatprep.subr.mxu0 %v2012
          %3026 = vmatpush2.msra.mxu0 %v2011
          %3027 = vmatprep.mubr.f32.mxu0 %v1717
          %3028 = vmatmul.mubr.f32.gmra.mxu0 %v1716
          %v3029 = vpop.f32.mrf.mxu0
          %v3030 = vadd.f32 %v2608, %v3029
          %v3031 = vpop.f32.mrf.mxu0
          %v3032 = vadd.f32 %v2612, %v3031
          %3033 = vdwg.mxu0
          %3034 = vmatprep.subr.mxu0 %v2570
          %3035 = vmatpush1.msra.mxu0 %v2569
          %3036 = vmatprep.subr.mxu0 %v2552
          %3037 = vmatpush1.msra.mxu0 %v2551
          %3038 = vmatprep.subr.mxu0 %v2534
          %3039 = vmatpush1.msra.mxu0 %v2533
          %3040 = vmatprep.subr.mxu0 %v2516
          %3041 = vmatpush1.msra.mxu0 %v2515
          %3042 = vmatprep.subr.mxu0 %v2498
          %3043 = vmatpush1.msra.mxu0 %v2497
          %3044 = vmatprep.subr.mxu0 %v2480
          %3045 = vmatpush1.msra.mxu0 %v2479
          %3046 = vmatprep.subr.mxu0 %v2462
          %3047 = vmatpush1.msra.mxu0 %v2461
          %3048 = vmatprep.subr.mxu0 %v2444
          %3049 = vmatpush1.msra.mxu0 %v2443
          %3050 = vmatprep.subr.mxu0 %v2426
          %3051 = vmatpush1.msra.mxu0 %v2425
          %3052 = vmatprep.subr.mxu0 %v2408
          %3053 = vmatpush1.msra.mxu0 %v2407
          %3054 = vmatprep.subr.mxu0 %v2390
          %3055 = vmatpush1.msra.mxu0 %v2389
          %3056 = vmatprep.subr.mxu0 %v2372
          %3057 = vmatpush1.msra.mxu0 %v2371
          %3058 = vmatprep.subr.mxu0 %v2354
          %3059 = vmatpush1.msra.mxu0 %v2353
          %3060 = vmatprep.subr.mxu0 %v2336
          %3061 = vmatpush1.msra.mxu0 %v2335
          %3062 = vmatprep.subr.mxu0 %v2318
          %3063 = vmatpush1.msra.mxu0 %v2317
          %3064 = vmatprep.subr.mxu0 %v2300
          %3065 = vmatpush1.msra.mxu0 %v2299
          %3066 = vmatprep.subr.mxu0 0.0
          %3067 = vmatpush2.msra.mxu0 0.0
          %3068 = vmatprep.subr.mxu0 0.0
          %3069 = vmatpush2.msra.mxu0 0.0
          %3070 = vmatprep.subr.mxu0 0.0
          %3071 = vmatpush2.msra.mxu0 0.0
          %3072 = vmatprep.subr.mxu0 0.0
          %3073 = vmatpush2.msra.mxu0 0.0
          %3074 = vmatprep.subr.mxu0 0.0
          %3075 = vmatpush2.msra.mxu0 0.0
          %3076 = vmatprep.subr.mxu0 0.0
          %3077 = vmatpush2.msra.mxu0 0.0
          %3078 = vmatprep.subr.mxu0 0.0
          %3079 = vmatpush2.msra.mxu0 0.0
          %3080 = vmatprep.subr.mxu0 0.0
          %3081 = vmatpush2.msra.mxu0 0.0
          %3082 = vmatprep.subr.mxu0 0.0
          %3083 = vmatpush2.msra.mxu0 0.0
          %3084 = vmatprep.subr.mxu0 0.0
          %3085 = vmatpush2.msra.mxu0 0.0
          %3086 = vmatprep.subr.mxu0 0.0
          %3087 = vmatpush2.msra.mxu0 0.0
          %3088 = vmatprep.subr.mxu0 0.0
          %3089 = vmatpush2.msra.mxu0 0.0
          %3090 = vmatprep.subr.mxu0 0.0
          %3091 = vmatpush2.msra.mxu0 0.0
          %3092 = vmatprep.subr.mxu0 0.0
          %3093 = vmatpush2.msra.mxu0 0.0
          %3094 = vmatprep.subr.mxu0 0.0
          %3095 = vmatpush2.msra.mxu0 0.0
          %3096 = vmatprep.subr.mxu0 0.0
          %3097 = vmatpush2.msra.mxu0 0.0
          %3098 = vmatprep.mubr.f32.mxu0 0.0
          %3099 = vmatmul.mubr.f32.gmra.mxu0 %v1718
          %v3100 = vpop.f32.mrf.mxu0
          %v3101 = vadd.f32 %v3030, %v3100
          %v3102 = vpop.f32.mrf.mxu0
          %v3103 = vadd.f32 %v3032, %v3102
          %3104 = vdwg.mxu0
          %3105 = vmatprep.subr.mxu0 %v1996
          %3106 = vmatpush1.msra.mxu0 %v1995
          %3107 = vmatprep.subr.mxu0 %v1978
          %3108 = vmatpush1.msra.mxu0 %v1977
          %3109 = vmatprep.subr.mxu0 %v1960
          %3110 = vmatpush1.msra.mxu0 %v1959
          %3111 = vmatprep.subr.mxu0 %v1942
          %3112 = vmatpush1.msra.mxu0 %v1941
          %3113 = vmatprep.subr.mxu0 %v1924
          %3114 = vmatpush1.msra.mxu0 %v1923
          %3115 = vmatprep.subr.mxu0 %v1906
          %3116 = vmatpush1.msra.mxu0 %v1905
          %3117 = vmatprep.subr.mxu0 %v1888
          %3118 = vmatpush1.msra.mxu0 %v1887
          %3119 = vmatprep.subr.mxu0 %v1870
          %3120 = vmatpush1.msra.mxu0 %v1869
          %3121 = vmatprep.subr.mxu0 %v1852
          %3122 = vmatpush1.msra.mxu0 %v1851
          %3123 = vmatprep.subr.mxu0 %v1834
          %3124 = vmatpush1.msra.mxu0 %v1833
          %3125 = vmatprep.subr.mxu0 %v1816
          %3126 = vmatpush1.msra.mxu0 %v1815
          %3127 = vmatprep.subr.mxu0 %v1798
          %3128 = vmatpush1.msra.mxu0 %v1797
          %3129 = vmatprep.subr.mxu0 %v1780
          %3130 = vmatpush1.msra.mxu0 %v1779
          %3131 = vmatprep.subr.mxu0 %v1762
          %3132 = vmatpush1.msra.mxu0 %v1761
          %3133 = vmatprep.subr.mxu0 %v1744
          %3134 = vmatpush1.msra.mxu0 %v1743
          %3135 = vmatprep.subr.mxu0 %v1726
          %3136 = vmatpush1.msra.mxu0 %v1725
          %3137 = vmatprep.subr.mxu0 %v2284
          %3138 = vmatpush2.msra.mxu0 %v2283
          %3139 = vmatprep.subr.mxu0 %v2266
          %3140 = vmatpush2.msra.mxu0 %v2265
          %3141 = vmatprep.subr.mxu0 %v2248
          %3142 = vmatpush2.msra.mxu0 %v2247
          %3143 = vmatprep.subr.mxu0 %v2230
          %3144 = vmatpush2.msra.mxu0 %v2229
          %3145 = vmatprep.subr.mxu0 %v2212
          %3146 = vmatpush2.msra.mxu0 %v2211
          %3147 = vmatprep.subr.mxu0 %v2194
          %3148 = vmatpush2.msra.mxu0 %v2193
          %3149 = vmatprep.subr.mxu0 %v2176
          %3150 = vmatpush2.msra.mxu0 %v2175
          %3151 = vmatprep.subr.mxu0 %v2158
          %3152 = vmatpush2.msra.mxu0 %v2157
          %3153 = vmatprep.subr.mxu0 %v2140
          %3154 = vmatpush2.msra.mxu0 %v2139
          %3155 = vmatprep.subr.mxu0 %v2122
          %3156 = vmatpush2.msra.mxu0 %v2121
          %3157 = vmatprep.subr.mxu0 %v2104
          %3158 = vmatpush2.msra.mxu0 %v2103
          %3159 = vmatprep.subr.mxu0 %v2086
          %3160 = vmatpush2.msra.mxu0 %v2085
          %3161 = vmatprep.subr.mxu0 %v2068
          %3162 = vmatpush2.msra.mxu0 %v2067
          %3163 = vmatprep.subr.mxu0 %v2050
          %3164 = vmatpush2.msra.mxu0 %v2049
          %3165 = vmatprep.subr.mxu0 %v2032
          %3166 = vmatpush2.msra.mxu0 %v2031
          %3167 = vmatprep.subr.mxu0 %v2014
          %3168 = vmatpush2.msra.mxu0 %v2013
          %3169 = vmatprep.mubr.f32.mxu0 %v1717
          %3170 = vmatmul.mubr.f32.gmra.mxu0 %v1716
          %v3171 = vpop.f32.mrf.mxu0
          %v3172 = vadd.f32 %v2616, %v3171
          %v3173 = vpop.f32.mrf.mxu0
          %v3174 = vadd.f32 %v2620, %v3173
          %3175 = vdwg.mxu0
          %3176 = vmatprep.subr.mxu0 %v2572
          %3177 = vmatpush1.msra.mxu0 %v2571
          %3178 = vmatprep.subr.mxu0 %v2554
          %3179 = vmatpush1.msra.mxu0 %v2553
          %3180 = vmatprep.subr.mxu0 %v2536
          %3181 = vmatpush1.msra.mxu0 %v2535
          %3182 = vmatprep.subr.mxu0 %v2518
          %3183 = vmatpush1.msra.mxu0 %v2517
          %3184 = vmatprep.subr.mxu0 %v2500
          %3185 = vmatpush1.msra.mxu0 %v2499
          %3186 = vmatprep.subr.mxu0 %v2482
          %3187 = vmatpush1.msra.mxu0 %v2481
          %3188 = vmatprep.subr.mxu0 %v2464
          %3189 = vmatpush1.msra.mxu0 %v2463
          %3190 = vmatprep.subr.mxu0 %v2446
          %3191 = vmatpush1.msra.mxu0 %v2445
          %3192 = vmatprep.subr.mxu0 %v2428
          %3193 = vmatpush1.msra.mxu0 %v2427
          %3194 = vmatprep.subr.mxu0 %v2410
          %3195 = vmatpush1.msra.mxu0 %v2409
          %3196 = vmatprep.subr.mxu0 %v2392
          %3197 = vmatpush1.msra.mxu0 %v2391
          %3198 = vmatprep.subr.mxu0 %v2374
          %3199 = vmatpush1.msra.mxu0 %v2373
          %3200 = vmatprep.subr.mxu0 %v2356
          %3201 = vmatpush1.msra.mxu0 %v2355
          %3202 = vmatprep.subr.mxu0 %v2338
          %3203 = vmatpush1.msra.mxu0 %v2337
          %3204 = vmatprep.subr.mxu0 %v2320
          %3205 = vmatpush1.msra.mxu0 %v2319
          %3206 = vmatprep.subr.mxu0 %v2302
          %3207 = vmatpush1.msra.mxu0 %v2301
          %3208 = vmatprep.subr.mxu0 0.0
          %3209 = vmatpush2.msra.mxu0 0.0
          %3210 = vmatprep.subr.mxu0 0.0
          %3211 = vmatpush2.msra.mxu0 0.0
          %3212 = vmatprep.subr.mxu0 0.0
          %3213 = vmatpush2.msra.mxu0 0.0
          %3214 = vmatprep.subr.mxu0 0.0
          %3215 = vmatpush2.msra.mxu0 0.0
          %3216 = vmatprep.subr.mxu0 0.0
          %3217 = vmatpush2.msra.mxu0 0.0
          %3218 = vmatprep.subr.mxu0 0.0
          %3219 = vmatpush2.msra.mxu0 0.0
          %3220 = vmatprep.subr.mxu0 0.0
          %3221 = vmatpush2.msra.mxu0 0.0
          %3222 = vmatprep.subr.mxu0 0.0
          %3223 = vmatpush2.msra.mxu0 0.0
          %3224 = vmatprep.subr.mxu0 0.0
          %3225 = vmatpush2.msra.mxu0 0.0
          %3226 = vmatprep.subr.mxu0 0.0
          %3227 = vmatpush2.msra.mxu0 0.0
          %3228 = vmatprep.subr.mxu0 0.0
          %3229 = vmatpush2.msra.mxu0 0.0
          %3230 = vmatprep.subr.mxu0 0.0
          %3231 = vmatpush2.msra.mxu0 0.0
          %3232 = vmatprep.subr.mxu0 0.0
          %3233 = vmatpush2.msra.mxu0 0.0
          %3234 = vmatprep.subr.mxu0 0.0
          %3235 = vmatpush2.msra.mxu0 0.0
          %3236 = vmatprep.subr.mxu0 0.0
          %3237 = vmatpush2.msra.mxu0 0.0
          %3238 = vmatprep.subr.mxu0 0.0
          %3239 = vmatpush2.msra.mxu0 0.0
          %3240 = vmatprep.mubr.f32.mxu0 0.0
          %3241 = vmatmul.mubr.f32.gmra.mxu0 %v1718
          %v3242 = vpop.f32.mrf.mxu0
          %v3243 = vadd.f32 %v3172, %v3242
          %v3244 = vpop.f32.mrf.mxu0
          %v3245 = vadd.f32 %v3174, %v3244
          %3246 = vdwg.mxu0
          %3247 = vmatprep.subr.mxu0 %v1998
          %3248 = vmatpush1.msra.mxu0 %v1997
          %3249 = vmatprep.subr.mxu0 %v1980
          %3250 = vmatpush1.msra.mxu0 %v1979
          %3251 = vmatprep.subr.mxu0 %v1962
          %3252 = vmatpush1.msra.mxu0 %v1961
          %3253 = vmatprep.subr.mxu0 %v1944
          %3254 = vmatpush1.msra.mxu0 %v1943
          %3255 = vmatprep.subr.mxu0 %v1926
          %3256 = vmatpush1.msra.mxu0 %v1925
          %3257 = vmatprep.subr.mxu0 %v1908
          %3258 = vmatpush1.msra.mxu0 %v1907
          %3259 = vmatprep.subr.mxu0 %v1890
          %3260 = vmatpush1.msra.mxu0 %v1889
          %3261 = vmatprep.subr.mxu0 %v1872
          %3262 = vmatpush1.msra.mxu0 %v1871
          %3263 = vmatprep.subr.mxu0 %v1854
          %3264 = vmatpush1.msra.mxu0 %v1853
          %3265 = vmatprep.subr.mxu0 %v1836
          %3266 = vmatpush1.msra.mxu0 %v1835
          %3267 = vmatprep.subr.mxu0 %v1818
          %3268 = vmatpush1.msra.mxu0 %v1817
          %3269 = vmatprep.subr.mxu0 %v1800
          %3270 = vmatpush1.msra.mxu0 %v1799
          %3271 = vmatprep.subr.mxu0 %v1782
          %3272 = vmatpush1.msra.mxu0 %v1781
          %3273 = vmatprep.subr.mxu0 %v1764
          %3274 = vmatpush1.msra.mxu0 %v1763
          %3275 = vmatprep.subr.mxu0 %v1746
          %3276 = vmatpush1.msra.mxu0 %v1745
          %3277 = vmatprep.subr.mxu0 %v1728
          %3278 = vmatpush1.msra.mxu0 %v1727
          %3279 = vmatprep.subr.mxu0 %v2286
          %3280 = vmatpush2.msra.mxu0 %v2285
          %3281 = vmatprep.subr.mxu0 %v2268
          %3282 = vmatpush2.msra.mxu0 %v2267
          %3283 = vmatprep.subr.mxu0 %v2250
          %3284 = vmatpush2.msra.mxu0 %v2249
          %3285 = vmatprep.subr.mxu0 %v2232
          %3286 = vmatpush2.msra.mxu0 %v2231
          %3287 = vmatprep.subr.mxu0 %v2214
          %3288 = vmatpush2.msra.mxu0 %v2213
          %3289 = vmatprep.subr.mxu0 %v2196
          %3290 = vmatpush2.msra.mxu0 %v2195
          %3291 = vmatprep.subr.mxu0 %v2178
          %3292 = vmatpush2.msra.mxu0 %v2177
          %3293 = vmatprep.subr.mxu0 %v2160
          %3294 = vmatpush2.msra.mxu0 %v2159
          %3295 = vmatprep.subr.mxu0 %v2142
          %3296 = vmatpush2.msra.mxu0 %v2141
          %3297 = vmatprep.subr.mxu0 %v2124
          %3298 = vmatpush2.msra.mxu0 %v2123
          %3299 = vmatprep.subr.mxu0 %v2106
          %3300 = vmatpush2.msra.mxu0 %v2105
          %3301 = vmatprep.subr.mxu0 %v2088
          %3302 = vmatpush2.msra.mxu0 %v2087
          %3303 = vmatprep.subr.mxu0 %v2070
          %3304 = vmatpush2.msra.mxu0 %v2069
          %3305 = vmatprep.subr.mxu0 %v2052
          %3306 = vmatpush2.msra.mxu0 %v2051
          %3307 = vmatprep.subr.mxu0 %v2034
          %3308 = vmatpush2.msra.mxu0 %v2033
          %3309 = vmatprep.subr.mxu0 %v2016
          %3310 = vmatpush2.msra.mxu0 %v2015
          %3311 = vmatprep.mubr.f32.mxu0 %v1717
          %3312 = vmatmul.mubr.f32.gmra.mxu0 %v1716
          %v3313 = vpop.f32.mrf.mxu0
          %v3314 = vadd.f32 %v2624, %v3313
          %v3315 = vpop.f32.mrf.mxu0
          %v3316 = vadd.f32 %v2628, %v3315
          %3317 = vdwg.mxu0
          %3318 = vmatprep.subr.mxu0 %v2574
          %3319 = vmatpush1.msra.mxu0 %v2573
          %3320 = vmatprep.subr.mxu0 %v2556
          %3321 = vmatpush1.msra.mxu0 %v2555
          %3322 = vmatprep.subr.mxu0 %v2538
          %3323 = vmatpush1.msra.mxu0 %v2537
          %3324 = vmatprep.subr.mxu0 %v2520
          %3325 = vmatpush1.msra.mxu0 %v2519
          %3326 = vmatprep.subr.mxu0 %v2502
          %3327 = vmatpush1.msra.mxu0 %v2501
          %3328 = vmatprep.subr.mxu0 %v2484
          %3329 = vmatpush1.msra.mxu0 %v2483
          %3330 = vmatprep.subr.mxu0 %v2466
          %3331 = vmatpush1.msra.mxu0 %v2465
          %3332 = vmatprep.subr.mxu0 %v2448
          %3333 = vmatpush1.msra.mxu0 %v2447
          %3334 = vmatprep.subr.mxu0 %v2430
          %3335 = vmatpush1.msra.mxu0 %v2429
          %3336 = vmatprep.subr.mxu0 %v2412
          %3337 = vmatpush1.msra.mxu0 %v2411
          %3338 = vmatprep.subr.mxu0 %v2394
          %3339 = vmatpush1.msra.mxu0 %v2393
          %3340 = vmatprep.subr.mxu0 %v2376
          %3341 = vmatpush1.msra.mxu0 %v2375
          %3342 = vmatprep.subr.mxu0 %v2358
          %3343 = vmatpush1.msra.mxu0 %v2357
          %3344 = vmatprep.subr.mxu0 %v2340
          %3345 = vmatpush1.msra.mxu0 %v2339
          %3346 = vmatprep.subr.mxu0 %v2322
          %3347 = vmatpush1.msra.mxu0 %v2321
          %3348 = vmatprep.subr.mxu0 %v2304
          %3349 = vmatpush1.msra.mxu0 %v2303
          %3350 = vmatprep.subr.mxu0 0.0
          %3351 = vmatpush2.msra.mxu0 0.0
          %3352 = vmatprep.subr.mxu0 0.0
          %3353 = vmatpush2.msra.mxu0 0.0
          %3354 = vmatprep.subr.mxu0 0.0
          %3355 = vmatpush2.msra.mxu0 0.0
          %3356 = vmatprep.subr.mxu0 0.0
          %3357 = vmatpush2.msra.mxu0 0.0
          %3358 = vmatprep.subr.mxu0 0.0
          %3359 = vmatpush2.msra.mxu0 0.0
          %3360 = vmatprep.subr.mxu0 0.0
          %3361 = vmatpush2.msra.mxu0 0.0
          %3362 = vmatprep.subr.mxu0 0.0
          %3363 = vmatpush2.msra.mxu0 0.0
          %3364 = vmatprep.subr.mxu0 0.0
          %3365 = vmatpush2.msra.mxu0 0.0
          %3366 = vmatprep.subr.mxu0 0.0
          %3367 = vmatpush2.msra.mxu0 0.0
          %3368 = vmatprep.subr.mxu0 0.0
          %3369 = vmatpush2.msra.mxu0 0.0
          %3370 = vmatprep.subr.mxu0 0.0
          %3371 = vmatpush2.msra.mxu0 0.0
          %3372 = vmatprep.subr.mxu0 0.0
          %3373 = vmatpush2.msra.mxu0 0.0
          %3374 = vmatprep.subr.mxu0 0.0
          %3375 = vmatpush2.msra.mxu0 0.0
          %3376 = vmatprep.subr.mxu0 0.0
          %3377 = vmatpush2.msra.mxu0 0.0
          %3378 = vmatprep.subr.mxu0 0.0
          %3379 = vmatpush2.msra.mxu0 0.0
          %3380 = vmatprep.subr.mxu0 0.0
          %3381 = vmatpush2.msra.mxu0 0.0
          %3382 = vmatprep.mubr.f32.mxu0 0.0
          %3383 = vmatmul.mubr.f32.gmra.mxu0 %v1718
          %v3384 = vpop.f32.mrf.mxu0
          %v3385 = vadd.f32 %v3314, %v3384
          %v3386 = vpop.f32.mrf.mxu0
          %v3387 = vadd.f32 %v3316, %v3386
          %3388 = vdwg.mxu0
          %3389 = vmatprep.subr.mxu0 %v2000
          %3390 = vmatpush1.msra.mxu0 %v1999
          %3391 = vmatprep.subr.mxu0 %v1982
          %3392 = vmatpush1.msra.mxu0 %v1981
          %3393 = vmatprep.subr.mxu0 %v1964
          %3394 = vmatpush1.msra.mxu0 %v1963
          %3395 = vmatprep.subr.mxu0 %v1946
          %3396 = vmatpush1.msra.mxu0 %v1945
          %3397 = vmatprep.subr.mxu0 %v1928
          %3398 = vmatpush1.msra.mxu0 %v1927
          %3399 = vmatprep.subr.mxu0 %v1910
          %3400 = vmatpush1.msra.mxu0 %v1909
          %3401 = vmatprep.subr.mxu0 %v1892
          %3402 = vmatpush1.msra.mxu0 %v1891
          %3403 = vmatprep.subr.mxu0 %v1874
          %3404 = vmatpush1.msra.mxu0 %v1873
          %3405 = vmatprep.subr.mxu0 %v1856
          %3406 = vmatpush1.msra.mxu0 %v1855
          %3407 = vmatprep.subr.mxu0 %v1838
          %3408 = vmatpush1.msra.mxu0 %v1837
          %3409 = vmatprep.subr.mxu0 %v1820
          %3410 = vmatpush1.msra.mxu0 %v1819
          %3411 = vmatprep.subr.mxu0 %v1802
          %3412 = vmatpush1.msra.mxu0 %v1801
          %3413 = vmatprep.subr.mxu0 %v1784
          %3414 = vmatpush1.msra.mxu0 %v1783
          %3415 = vmatprep.subr.mxu0 %v1766
          %3416 = vmatpush1.msra.mxu0 %v1765
          %3417 = vmatprep.subr.mxu0 %v1748
          %3418 = vmatpush1.msra.mxu0 %v1747
          %3419 = vmatprep.subr.mxu0 %v1730
          %3420 = vmatpush1.msra.mxu0 %v1729
          %3421 = vmatprep.subr.mxu0 %v2288
          %3422 = vmatpush2.msra.mxu0 %v2287
          %3423 = vmatprep.subr.mxu0 %v2270
          %3424 = vmatpush2.msra.mxu0 %v2269
          %3425 = vmatprep.subr.mxu0 %v2252
          %3426 = vmatpush2.msra.mxu0 %v2251
          %3427 = vmatprep.subr.mxu0 %v2234
          %3428 = vmatpush2.msra.mxu0 %v2233
          %3429 = vmatprep.subr.mxu0 %v2216
          %3430 = vmatpush2.msra.mxu0 %v2215
          %3431 = vmatprep.subr.mxu0 %v2198
          %3432 = vmatpush2.msra.mxu0 %v2197
          %3433 = vmatprep.subr.mxu0 %v2180
          %3434 = vmatpush2.msra.mxu0 %v2179
          %3435 = vmatprep.subr.mxu0 %v2162
          %3436 = vmatpush2.msra.mxu0 %v2161
          %3437 = vmatprep.subr.mxu0 %v2144
          %3438 = vmatpush2.msra.mxu0 %v2143
          %3439 = vmatprep.subr.mxu0 %v2126
          %3440 = vmatpush2.msra.mxu0 %v2125
          %3441 = vmatprep.subr.mxu0 %v2108
          %3442 = vmatpush2.msra.mxu0 %v2107
          %3443 = vmatprep.subr.mxu0 %v2090
          %3444 = vmatpush2.msra.mxu0 %v2089
          %3445 = vmatprep.subr.mxu0 %v2072
          %3446 = vmatpush2.msra.mxu0 %v2071
          %3447 = vmatprep.subr.mxu0 %v2054
          %3448 = vmatpush2.msra.mxu0 %v2053
          %3449 = vmatprep.subr.mxu0 %v2036
          %3450 = vmatpush2.msra.mxu0 %v2035
          %3451 = vmatprep.subr.mxu0 %v2018
          %3452 = vmatpush2.msra.mxu0 %v2017
          %3453 = vmatprep.mubr.f32.mxu0 %v1717
          %3454 = vmatmul.mubr.f32.gmra.mxu0 %v1716
          %v3455 = vpop.f32.mrf.mxu0
          %v3456 = vadd.f32 %v2632, %v3455
          %v3457 = vpop.f32.mrf.mxu0
          %v3458 = vadd.f32 %v2636, %v3457
          %3459 = vdwg.mxu0
          %3460 = vmatprep.subr.mxu0 %v2576
          %3461 = vmatpush1.msra.mxu0 %v2575
          %3462 = vmatprep.subr.mxu0 %v2558
          %3463 = vmatpush1.msra.mxu0 %v2557
          %3464 = vmatprep.subr.mxu0 %v2540
          %3465 = vmatpush1.msra.mxu0 %v2539
          %3466 = vmatprep.subr.mxu0 %v2522
          %3467 = vmatpush1.msra.mxu0 %v2521
          %3468 = vmatprep.subr.mxu0 %v2504
          %3469 = vmatpush1.msra.mxu0 %v2503
          %3470 = vmatprep.subr.mxu0 %v2486
          %3471 = vmatpush1.msra.mxu0 %v2485
          %3472 = vmatprep.subr.mxu0 %v2468
          %3473 = vmatpush1.msra.mxu0 %v2467
          %3474 = vmatprep.subr.mxu0 %v2450
          %3475 = vmatpush1.msra.mxu0 %v2449
          %3476 = vmatprep.subr.mxu0 %v2432
          %3477 = vmatpush1.msra.mxu0 %v2431
          %3478 = vmatprep.subr.mxu0 %v2414
          %3479 = vmatpush1.msra.mxu0 %v2413
          %3480 = vmatprep.subr.mxu0 %v2396
          %3481 = vmatpush1.msra.mxu0 %v2395
          %3482 = vmatprep.subr.mxu0 %v2378
          %3483 = vmatpush1.msra.mxu0 %v2377
          %3484 = vmatprep.subr.mxu0 %v2360
          %3485 = vmatpush1.msra.mxu0 %v2359
          %3486 = vmatprep.subr.mxu0 %v2342
          %3487 = vmatpush1.msra.mxu0 %v2341
          %3488 = vmatprep.subr.mxu0 %v2324
          %3489 = vmatpush1.msra.mxu0 %v2323
          %3490 = vmatprep.subr.mxu0 %v2306
          %3491 = vmatpush1.msra.mxu0 %v2305
          %3492 = vmatprep.subr.mxu0 0.0
          %3493 = vmatpush2.msra.mxu0 0.0
          %3494 = vmatprep.subr.mxu0 0.0
          %3495 = vmatpush2.msra.mxu0 0.0
          %3496 = vmatprep.subr.mxu0 0.0
          %3497 = vmatpush2.msra.mxu0 0.0
          %3498 = vmatprep.subr.mxu0 0.0
          %3499 = vmatpush2.msra.mxu0 0.0
          %3500 = vmatprep.subr.mxu0 0.0
          %3501 = vmatpush2.msra.mxu0 0.0
          %3502 = vmatprep.subr.mxu0 0.0
          %3503 = vmatpush2.msra.mxu0 0.0
          %3504 = vmatprep.subr.mxu0 0.0
          %3505 = vmatpush2.msra.mxu0 0.0
          %3506 = vmatprep.subr.mxu0 0.0
          %3507 = vmatpush2.msra.mxu0 0.0
          %3508 = vmatprep.subr.mxu0 0.0
          %3509 = vmatpush2.msra.mxu0 0.0
          %3510 = vmatprep.subr.mxu0 0.0
          %3511 = vmatpush2.msra.mxu0 0.0
          %3512 = vmatprep.subr.mxu0 0.0
          %3513 = vmatpush2.msra.mxu0 0.0
          %3514 = vmatprep.subr.mxu0 0.0
          %3515 = vmatpush2.msra.mxu0 0.0
          %3516 = vmatprep.subr.mxu0 0.0
          %3517 = vmatpush2.msra.mxu0 0.0
          %3518 = vmatprep.subr.mxu0 0.0
          %3519 = vmatpush2.msra.mxu0 0.0
          %3520 = vmatprep.subr.mxu0 0.0
          %3521 = vmatpush2.msra.mxu0 0.0
          %3522 = vmatprep.subr.mxu0 0.0
          %3523 = vmatpush2.msra.mxu0 0.0
          %3524 = vmatprep.mubr.f32.mxu0 0.0
          %3525 = vmatmul.mubr.f32.gmra.mxu0 %v1718
          %v3526 = vpop.f32.mrf.mxu0
          %v3527 = vadd.f32 %v3456, %v3526
          %v3528 = vpop.f32.mrf.mxu0
          %v3529 = vadd.f32 %v3458, %v3528
          %3530 = vdwg.mxu0
          %3531 = vmatprep.subr.mxu0 %v2002
          %3532 = vmatpush1.msra.mxu0 %v2001
          %3533 = vmatprep.subr.mxu0 %v1984
          %3534 = vmatpush1.msra.mxu0 %v1983
          %3535 = vmatprep.subr.mxu0 %v1966
          %3536 = vmatpush1.msra.mxu0 %v1965
          %3537 = vmatprep.subr.mxu0 %v1948
          %3538 = vmatpush1.msra.mxu0 %v1947
          %3539 = vmatprep.subr.mxu0 %v1930
          %3540 = vmatpush1.msra.mxu0 %v1929
          %3541 = vmatprep.subr.mxu0 %v1912
          %3542 = vmatpush1.msra.mxu0 %v1911
          %3543 = vmatprep.subr.mxu0 %v1894
          %3544 = vmatpush1.msra.mxu0 %v1893
          %3545 = vmatprep.subr.mxu0 %v1876
          %3546 = vmatpush1.msra.mxu0 %v1875
          %3547 = vmatprep.subr.mxu0 %v1858
          %3548 = vmatpush1.msra.mxu0 %v1857
          %3549 = vmatprep.subr.mxu0 %v1840
          %3550 = vmatpush1.msra.mxu0 %v1839
          %3551 = vmatprep.subr.mxu0 %v1822
          %3552 = vmatpush1.msra.mxu0 %v1821
          %3553 = vmatprep.subr.mxu0 %v1804
          %3554 = vmatpush1.msra.mxu0 %v1803
          %3555 = vmatprep.subr.mxu0 %v1786
          %3556 = vmatpush1.msra.mxu0 %v1785
          %3557 = vmatprep.subr.mxu0 %v1768
          %3558 = vmatpush1.msra.mxu0 %v1767
          %3559 = vmatprep.subr.mxu0 %v1750
          %3560 = vmatpush1.msra.mxu0 %v1749
          %3561 = vmatprep.subr.mxu0 %v1732
          %3562 = vmatpush1.msra.mxu0 %v1731
          %3563 = vmatprep.subr.mxu0 %v2290
          %3564 = vmatpush2.msra.mxu0 %v2289
          %3565 = vmatprep.subr.mxu0 %v2272
          %3566 = vmatpush2.msra.mxu0 %v2271
          %3567 = vmatprep.subr.mxu0 %v2254
          %3568 = vmatpush2.msra.mxu0 %v2253
          %3569 = vmatprep.subr.mxu0 %v2236
          %3570 = vmatpush2.msra.mxu0 %v2235
          %3571 = vmatprep.subr.mxu0 %v2218
          %3572 = vmatpush2.msra.mxu0 %v2217
          %3573 = vmatprep.subr.mxu0 %v2200
          %3574 = vmatpush2.msra.mxu0 %v2199
          %3575 = vmatprep.subr.mxu0 %v2182
          %3576 = vmatpush2.msra.mxu0 %v2181
          %3577 = vmatprep.subr.mxu0 %v2164
          %3578 = vmatpush2.msra.mxu0 %v2163
          %3579 = vmatprep.subr.mxu0 %v2146
          %3580 = vmatpush2.msra.mxu0 %v2145
          %3581 = vmatprep.subr.mxu0 %v2128
          %3582 = vmatpush2.msra.mxu0 %v2127
          %3583 = vmatprep.subr.mxu0 %v2110
          %3584 = vmatpush2.msra.mxu0 %v2109
          %3585 = vmatprep.subr.mxu0 %v2092
          %3586 = vmatpush2.msra.mxu0 %v2091
          %3587 = vmatprep.subr.mxu0 %v2074
          %3588 = vmatpush2.msra.mxu0 %v2073
          %3589 = vmatprep.subr.mxu0 %v2056
          %3590 = vmatpush2.msra.mxu0 %v2055
          %3591 = vmatprep.subr.mxu0 %v2038
          %3592 = vmatpush2.msra.mxu0 %v2037
          %3593 = vmatprep.subr.mxu0 %v2020
          %3594 = vmatpush2.msra.mxu0 %v2019
          %3595 = vmatprep.mubr.f32.mxu0 %v1717
          %3596 = vmatmul.mubr.f32.gmra.mxu0 %v1716
          %v3597 = vpop.f32.mrf.mxu0
          %v3598 = vadd.f32 %v2640, %v3597
          %v3599 = vpop.f32.mrf.mxu0
          %v3600 = vadd.f32 %v2644, %v3599
          %3601 = vdwg.mxu0
          %3602 = vmatprep.subr.mxu0 %v2578
          %3603 = vmatpush1.msra.mxu0 %v2577
          %3604 = vmatprep.subr.mxu0 %v2560
          %3605 = vmatpush1.msra.mxu0 %v2559
          %3606 = vmatprep.subr.mxu0 %v2542
          %3607 = vmatpush1.msra.mxu0 %v2541
          %3608 = vmatprep.subr.mxu0 %v2524
          %3609 = vmatpush1.msra.mxu0 %v2523
          %3610 = vmatprep.subr.mxu0 %v2506
          %3611 = vmatpush1.msra.mxu0 %v2505
          %3612 = vmatprep.subr.mxu0 %v2488
          %3613 = vmatpush1.msra.mxu0 %v2487
          %3614 = vmatprep.subr.mxu0 %v2470
          %3615 = vmatpush1.msra.mxu0 %v2469
          %3616 = vmatprep.subr.mxu0 %v2452
          %3617 = vmatpush1.msra.mxu0 %v2451
          %3618 = vmatprep.subr.mxu0 %v2434
          %3619 = vmatpush1.msra.mxu0 %v2433
          %3620 = vmatprep.subr.mxu0 %v2416
          %3621 = vmatpush1.msra.mxu0 %v2415
          %3622 = vmatprep.subr.mxu0 %v2398
          %3623 = vmatpush1.msra.mxu0 %v2397
          %3624 = vmatprep.subr.mxu0 %v2380
          %3625 = vmatpush1.msra.mxu0 %v2379
          %3626 = vmatprep.subr.mxu0 %v2362
          %3627 = vmatpush1.msra.mxu0 %v2361
          %3628 = vmatprep.subr.mxu0 %v2344
          %3629 = vmatpush1.msra.mxu0 %v2343
          %3630 = vmatprep.subr.mxu0 %v2326
          %3631 = vmatpush1.msra.mxu0 %v2325
          %3632 = vmatprep.subr.mxu0 %v2308
          %3633 = vmatpush1.msra.mxu0 %v2307
          %3634 = vmatprep.subr.mxu0 0.0
          %3635 = vmatpush2.msra.mxu0 0.0
          %3636 = vmatprep.subr.mxu0 0.0
          %3637 = vmatpush2.msra.mxu0 0.0
          %3638 = vmatprep.subr.mxu0 0.0
          %3639 = vmatpush2.msra.mxu0 0.0
          %3640 = vmatprep.subr.mxu0 0.0
          %3641 = vmatpush2.msra.mxu0 0.0
          %3642 = vmatprep.subr.mxu0 0.0
          %3643 = vmatpush2.msra.mxu0 0.0
          %3644 = vmatprep.subr.mxu0 0.0
          %3645 = vmatpush2.msra.mxu0 0.0
          %3646 = vmatprep.subr.mxu0 0.0
          %3647 = vmatpush2.msra.mxu0 0.0
          %3648 = vmatprep.subr.mxu0 0.0
          %3649 = vmatpush2.msra.mxu0 0.0
          %3650 = vmatprep.subr.mxu0 0.0
          %3651 = vmatpush2.msra.mxu0 0.0
          %3652 = vmatprep.subr.mxu0 0.0
          %3653 = vmatpush2.msra.mxu0 0.0
          %3654 = vmatprep.subr.mxu0 0.0
          %3655 = vmatpush2.msra.mxu0 0.0
          %3656 = vmatprep.subr.mxu0 0.0
          %3657 = vmatpush2.msra.mxu0 0.0
          %3658 = vmatprep.subr.mxu0 0.0
          %3659 = vmatpush2.msra.mxu0 0.0
          %3660 = vmatprep.subr.mxu0 0.0
          %3661 = vmatpush2.msra.mxu0 0.0
          %3662 = vmatprep.subr.mxu0 0.0
          %3663 = vmatpush2.msra.mxu0 0.0
          %3664 = vmatprep.subr.mxu0 0.0
          %3665 = vmatpush2.msra.mxu0 0.0
          %3666 = vmatprep.mubr.f32.mxu0 0.0
          %3667 = vmatmul.mubr.f32.gmra.mxu0 %v1718
          %v3668 = vpop.f32.mrf.mxu0
          %v3669 = vadd.f32 %v3598, %v3668
          %v3670 = vpop.f32.mrf.mxu0
          %v3671 = vadd.f32 %v3600, %v3670
          %3672 = vdwg.mxu0
          %3673 = vmatprep.subr.mxu0 %v2004
          %3674 = vmatpush1.msra.mxu0 %v2003
          %3675 = vmatprep.subr.mxu0 %v1986
          %3676 = vmatpush1.msra.mxu0 %v1985
          %3677 = vmatprep.subr.mxu0 %v1968
          %3678 = vmatpush1.msra.mxu0 %v1967
          %3679 = vmatprep.subr.mxu0 %v1950
          %3680 = vmatpush1.msra.mxu0 %v1949
          %3681 = vmatprep.subr.mxu0 %v1932
          %3682 = vmatpush1.msra.mxu0 %v1931
          %3683 = vmatprep.subr.mxu0 %v1914
          %3684 = vmatpush1.msra.mxu0 %v1913
          %3685 = vmatprep.subr.mxu0 %v1896
          %3686 = vmatpush1.msra.mxu0 %v1895
          %3687 = vmatprep.subr.mxu0 %v1878
          %3688 = vmatpush1.msra.mxu0 %v1877
          %3689 = vmatprep.subr.mxu0 %v1860
          %3690 = vmatpush1.msra.mxu0 %v1859
          %3691 = vmatprep.subr.mxu0 %v1842
          %3692 = vmatpush1.msra.mxu0 %v1841
          %3693 = vmatprep.subr.mxu0 %v1824
          %3694 = vmatpush1.msra.mxu0 %v1823
          %3695 = vmatprep.subr.mxu0 %v1806
          %3696 = vmatpush1.msra.mxu0 %v1805
          %3697 = vmatprep.subr.mxu0 %v1788
          %3698 = vmatpush1.msra.mxu0 %v1787
          %3699 = vmatprep.subr.mxu0 %v1770
          %3700 = vmatpush1.msra.mxu0 %v1769
          %3701 = vmatprep.subr.mxu0 %v1752
          %3702 = vmatpush1.msra.mxu0 %v1751
          %3703 = vmatprep.subr.mxu0 %v1734
          %3704 = vmatpush1.msra.mxu0 %v1733
          %3705 = vmatprep.subr.mxu0 %v2292
          %3706 = vmatpush2.msra.mxu0 %v2291
          %3707 = vmatprep.subr.mxu0 %v2274
          %3708 = vmatpush2.msra.mxu0 %v2273
          %3709 = vmatprep.subr.mxu0 %v2256
          %3710 = vmatpush2.msra.mxu0 %v2255
          %3711 = vmatprep.subr.mxu0 %v2238
          %3712 = vmatpush2.msra.mxu0 %v2237
          %3713 = vmatprep.subr.mxu0 %v2220
          %3714 = vmatpush2.msra.mxu0 %v2219
          %3715 = vmatprep.subr.mxu0 %v2202
          %3716 = vmatpush2.msra.mxu0 %v2201
          %3717 = vmatprep.subr.mxu0 %v2184
          %3718 = vmatpush2.msra.mxu0 %v2183
          %3719 = vmatprep.subr.mxu0 %v2166
          %3720 = vmatpush2.msra.mxu0 %v2165
          %3721 = vmatprep.subr.mxu0 %v2148
          %3722 = vmatpush2.msra.mxu0 %v2147
          %3723 = vmatprep.subr.mxu0 %v2130
          %3724 = vmatpush2.msra.mxu0 %v2129
          %3725 = vmatprep.subr.mxu0 %v2112
          %3726 = vmatpush2.msra.mxu0 %v2111
          %3727 = vmatprep.subr.mxu0 %v2094
          %3728 = vmatpush2.msra.mxu0 %v2093
          %3729 = vmatprep.subr.mxu0 %v2076
          %3730 = vmatpush2.msra.mxu0 %v2075
          %3731 = vmatprep.subr.mxu0 %v2058
          %3732 = vmatpush2.msra.mxu0 %v2057
          %3733 = vmatprep.subr.mxu0 %v2040
          %3734 = vmatpush2.msra.mxu0 %v2039
          %3735 = vmatprep.subr.mxu0 %v2022
          %3736 = vmatpush2.msra.mxu0 %v2021
          %3737 = vmatprep.mubr.f32.mxu0 %v1717
          %3738 = vmatmul.mubr.f32.gmra.mxu0 %v1716
          %v3739 = vpop.f32.mrf.mxu0
          %v3740 = vadd.f32 %v2648, %v3739
          %v3741 = vpop.f32.mrf.mxu0
          %v3742 = vadd.f32 %v2652, %v3741
          %3743 = vdwg.mxu0
          %3744 = vmatprep.subr.mxu0 %v2580
          %3745 = vmatpush1.msra.mxu0 %v2579
          %3746 = vmatprep.subr.mxu0 %v2562
          %3747 = vmatpush1.msra.mxu0 %v2561
          %3748 = vmatprep.subr.mxu0 %v2544
          %3749 = vmatpush1.msra.mxu0 %v2543
          %3750 = vmatprep.subr.mxu0 %v2526
          %3751 = vmatpush1.msra.mxu0 %v2525
          %3752 = vmatprep.subr.mxu0 %v2508
          %3753 = vmatpush1.msra.mxu0 %v2507
          %3754 = vmatprep.subr.mxu0 %v2490
          %3755 = vmatpush1.msra.mxu0 %v2489
          %3756 = vmatprep.subr.mxu0 %v2472
          %3757 = vmatpush1.msra.mxu0 %v2471
          %3758 = vmatprep.subr.mxu0 %v2454
          %3759 = vmatpush1.msra.mxu0 %v2453
          %3760 = vmatprep.subr.mxu0 %v2436
          %3761 = vmatpush1.msra.mxu0 %v2435
          %3762 = vmatprep.subr.mxu0 %v2418
          %3763 = vmatpush1.msra.mxu0 %v2417
          %3764 = vmatprep.subr.mxu0 %v2400
          %3765 = vmatpush1.msra.mxu0 %v2399
          %3766 = vmatprep.subr.mxu0 %v2382
          %3767 = vmatpush1.msra.mxu0 %v2381
          %3768 = vmatprep.subr.mxu0 %v2364
          %3769 = vmatpush1.msra.mxu0 %v2363
          %3770 = vmatprep.subr.mxu0 %v2346
          %3771 = vmatpush1.msra.mxu0 %v2345
          %3772 = vmatprep.subr.mxu0 %v2328
          %3773 = vmatpush1.msra.mxu0 %v2327
          %3774 = vmatprep.subr.mxu0 %v2310
          %3775 = vmatpush1.msra.mxu0 %v2309
          %3776 = vmatprep.subr.mxu0 0.0
          %3777 = vmatpush2.msra.mxu0 0.0
          %3778 = vmatprep.subr.mxu0 0.0
          %3779 = vmatpush2.msra.mxu0 0.0
          %3780 = vmatprep.subr.mxu0 0.0
          %3781 = vmatpush2.msra.mxu0 0.0
          %3782 = vmatprep.subr.mxu0 0.0
          %3783 = vmatpush2.msra.mxu0 0.0
          %3784 = vmatprep.subr.mxu0 0.0
          %3785 = vmatpush2.msra.mxu0 0.0
          %3786 = vmatprep.subr.mxu0 0.0
          %3787 = vmatpush2.msra.mxu0 0.0
          %3788 = vmatprep.subr.mxu0 0.0
          %3789 = vmatpush2.msra.mxu0 0.0
          %3790 = vmatprep.subr.mxu0 0.0
          %3791 = vmatpush2.msra.mxu0 0.0
          %3792 = vmatprep.subr.mxu0 0.0
          %3793 = vmatpush2.msra.mxu0 0.0
          %3794 = vmatprep.subr.mxu0 0.0
          %3795 = vmatpush2.msra.mxu0 0.0
          %3796 = vmatprep.subr.mxu0 0.0
          %3797 = vmatpush2.msra.mxu0 0.0
          %3798 = vmatprep.subr.mxu0 0.0
          %3799 = vmatpush2.msra.mxu0 0.0
          %3800 = vmatprep.subr.mxu0 0.0
          %3801 = vmatpush2.msra.mxu0 0.0
          %3802 = vmatprep.subr.mxu0 0.0
          %3803 = vmatpush2.msra.mxu0 0.0
          %3804 = vmatprep.subr.mxu0 0.0
          %3805 = vmatpush2.msra.mxu0 0.0
          %3806 = vmatprep.subr.mxu0 0.0
          %3807 = vmatpush2.msra.mxu0 0.0
          %3808 = vmatprep.mubr.f32.mxu0 0.0
          %3809 = vmatmul.mubr.f32.gmra.mxu0 %v1718
          %v3810 = vpop.f32.mrf.mxu0
          %v3811 = vadd.f32 %v3740, %v3810
          %v3812 = vpop.f32.mrf.mxu0
          %v3813 = vadd.f32 %v3742, %v3812
          %3814 = vdwg.mxu0
          %3815 = vmatprep.subr.mxu0 %v2006
          %3816 = vmatpush1.msra.mxu0 %v2005
          %3817 = vmatprep.subr.mxu0 %v1988
          %3818 = vmatpush1.msra.mxu0 %v1987
          %3819 = vmatprep.subr.mxu0 %v1970
          %3820 = vmatpush1.msra.mxu0 %v1969
          %3821 = vmatprep.subr.mxu0 %v1952
          %3822 = vmatpush1.msra.mxu0 %v1951
          %3823 = vmatprep.subr.mxu0 %v1934
          %3824 = vmatpush1.msra.mxu0 %v1933
          %3825 = vmatprep.subr.mxu0 %v1916
          %3826 = vmatpush1.msra.mxu0 %v1915
          %3827 = vmatprep.subr.mxu0 %v1898
          %3828 = vmatpush1.msra.mxu0 %v1897
          %3829 = vmatprep.subr.mxu0 %v1880
          %3830 = vmatpush1.msra.mxu0 %v1879
          %3831 = vmatprep.subr.mxu0 %v1862
          %3832 = vmatpush1.msra.mxu0 %v1861
          %3833 = vmatprep.subr.mxu0 %v1844
          %3834 = vmatpush1.msra.mxu0 %v1843
          %3835 = vmatprep.subr.mxu0 %v1826
          %3836 = vmatpush1.msra.mxu0 %v1825
          %3837 = vmatprep.subr.mxu0 %v1808
          %3838 = vmatpush1.msra.mxu0 %v1807
          %3839 = vmatprep.subr.mxu0 %v1790
          %3840 = vmatpush1.msra.mxu0 %v1789
          %3841 = vmatprep.subr.mxu0 %v1772
          %3842 = vmatpush1.msra.mxu0 %v1771
          %3843 = vmatprep.subr.mxu0 %v1754
          %3844 = vmatpush1.msra.mxu0 %v1753
          %3845 = vmatprep.subr.mxu0 %v1736
          %3846 = vmatpush1.msra.mxu0 %v1735
          %3847 = vmatprep.subr.mxu0 %v2294
          %3848 = vmatpush2.msra.mxu0 %v2293
          %3849 = vmatprep.subr.mxu0 %v2276
          %3850 = vmatpush2.msra.mxu0 %v2275
          %3851 = vmatprep.subr.mxu0 %v2258
          %3852 = vmatpush2.msra.mxu0 %v2257
          %3853 = vmatprep.subr.mxu0 %v2240
          %3854 = vmatpush2.msra.mxu0 %v2239
          %3855 = vmatprep.subr.mxu0 %v2222
          %3856 = vmatpush2.msra.mxu0 %v2221
          %3857 = vmatprep.subr.mxu0 %v2204
          %3858 = vmatpush2.msra.mxu0 %v2203
          %3859 = vmatprep.subr.mxu0 %v2186
          %3860 = vmatpush2.msra.mxu0 %v2185
          %3861 = vmatprep.subr.mxu0 %v2168
          %3862 = vmatpush2.msra.mxu0 %v2167
          %3863 = vmatprep.subr.mxu0 %v2150
          %3864 = vmatpush2.msra.mxu0 %v2149
          %3865 = vmatprep.subr.mxu0 %v2132
          %3866 = vmatpush2.msra.mxu0 %v2131
          %3867 = vmatprep.subr.mxu0 %v2114
          %3868 = vmatpush2.msra.mxu0 %v2113
          %3869 = vmatprep.subr.mxu0 %v2096
          %3870 = vmatpush2.msra.mxu0 %v2095
          %3871 = vmatprep.subr.mxu0 %v2078
          %3872 = vmatpush2.msra.mxu0 %v2077
          %3873 = vmatprep.subr.mxu0 %v2060
          %3874 = vmatpush2.msra.mxu0 %v2059
          %3875 = vmatprep.subr.mxu0 %v2042
          %3876 = vmatpush2.msra.mxu0 %v2041
          %3877 = vmatprep.subr.mxu0 %v2024
          %3878 = vmatpush2.msra.mxu0 %v2023
          %3879 = vmatprep.mubr.f32.mxu0 %v1717
          %3880 = vmatmul.mubr.f32.gmra.mxu0 %v1716
          %v3881 = vpop.f32.mrf.mxu0
          %v3882 = vadd.f32 %v2656, %v3881
          %v3883 = vpop.f32.mrf.mxu0
          %v3884 = vadd.f32 %v2660, %v3883
          %3885 = vdwg.mxu0
          %3886 = vmatprep.subr.mxu0 %v2582
          %3887 = vmatpush1.msra.mxu0 %v2581
          %3888 = vmatprep.subr.mxu0 %v2564
          %3889 = vmatpush1.msra.mxu0 %v2563
          %3890 = vmatprep.subr.mxu0 %v2546
          %3891 = vmatpush1.msra.mxu0 %v2545
          %3892 = vmatprep.subr.mxu0 %v2528
          %3893 = vmatpush1.msra.mxu0 %v2527
          %3894 = vmatprep.subr.mxu0 %v2510
          %3895 = vmatpush1.msra.mxu0 %v2509
          %3896 = vmatprep.subr.mxu0 %v2492
          %3897 = vmatpush1.msra.mxu0 %v2491
          %3898 = vmatprep.subr.mxu0 %v2474
          %3899 = vmatpush1.msra.mxu0 %v2473
          %3900 = vmatprep.subr.mxu0 %v2456
          %3901 = vmatpush1.msra.mxu0 %v2455
          %3902 = vmatprep.subr.mxu0 %v2438
          %3903 = vmatpush1.msra.mxu0 %v2437
          %3904 = vmatprep.subr.mxu0 %v2420
          %3905 = vmatpush1.msra.mxu0 %v2419
          %3906 = vmatprep.subr.mxu0 %v2402
          %3907 = vmatpush1.msra.mxu0 %v2401
          %3908 = vmatprep.subr.mxu0 %v2384
          %3909 = vmatpush1.msra.mxu0 %v2383
          %3910 = vmatprep.subr.mxu0 %v2366
          %3911 = vmatpush1.msra.mxu0 %v2365
          %3912 = vmatprep.subr.mxu0 %v2348
          %3913 = vmatpush1.msra.mxu0 %v2347
          %3914 = vmatprep.subr.mxu0 %v2330
          %3915 = vmatpush1.msra.mxu0 %v2329
          %3916 = vmatprep.subr.mxu0 %v2312
          %3917 = vmatpush1.msra.mxu0 %v2311
          %3918 = vmatprep.subr.mxu0 0.0
          %3919 = vmatpush2.msra.mxu0 0.0
          %3920 = vmatprep.subr.mxu0 0.0
          %3921 = vmatpush2.msra.mxu0 0.0
          %3922 = vmatprep.subr.mxu0 0.0
          %3923 = vmatpush2.msra.mxu0 0.0
          %3924 = vmatprep.subr.mxu0 0.0
          %3925 = vmatpush2.msra.mxu0 0.0
          %3926 = vmatprep.subr.mxu0 0.0
          %3927 = vmatpush2.msra.mxu0 0.0
          %3928 = vmatprep.subr.mxu0 0.0
          %3929 = vmatpush2.msra.mxu0 0.0
          %3930 = vmatprep.subr.mxu0 0.0
          %3931 = vmatpush2.msra.mxu0 0.0
          %3932 = vmatprep.subr.mxu0 0.0
          %3933 = vmatpush2.msra.mxu0 0.0
          %3934 = vmatprep.subr.mxu0 0.0
          %3935 = vmatpush2.msra.mxu0 0.0
          %3936 = vmatprep.subr.mxu0 0.0
          %3937 = vmatpush2.msra.mxu0 0.0
          %3938 = vmatprep.subr.mxu0 0.0
          %3939 = vmatpush2.msra.mxu0 0.0
          %3940 = vmatprep.subr.mxu0 0.0
          %3941 = vmatpush2.msra.mxu0 0.0
          %3942 = vmatprep.subr.mxu0 0.0
          %3943 = vmatpush2.msra.mxu0 0.0
          %3944 = vmatprep.subr.mxu0 0.0
          %3945 = vmatpush2.msra.mxu0 0.0
          %3946 = vmatprep.subr.mxu0 0.0
          %3947 = vmatpush2.msra.mxu0 0.0
          %3948 = vmatprep.subr.mxu0 0.0
          %3949 = vmatpush2.msra.mxu0 0.0
          %3950 = vmatprep.mubr.f32.mxu0 0.0
          %3951 = vmatmul.mubr.f32.gmra.mxu0 %v1718
          %v3952 = vpop.f32.mrf.mxu0
          %v3953 = vadd.f32 %v3882, %v3952
          %v3954 = vpop.f32.mrf.mxu0
          %v3955 = vadd.f32 %v3884, %v3954
          %3956 = vdwg.mxu0
          %v3975 = vcombine.low %v2817, %v2819
          %v3976 = vcombine.low %v2959, %v2961
          %v3977 = vcombine.low %v3101, %v3103
          %v3978 = vcombine.low %v3243, %v3245
          %v3980 = vunpack.c.l.s4 1966171168
          %v3981 = vunpack.c.0.s8 %v3980
          %v3982 = vlaneseq
          %v3983 = vshrl.u32 %v3982, 7
          %v3984 = vsub.s32 %v3981, %v3983
          %v3985 = vrot.slane %v3975, %v3984
          %v3987 = vunpack.c.l.s4 1966171168
          %v3988 = vunpack.c.0.s8 %v3987
          %v3989 = vlaneseq
          %v3990 = vshrl.u32 %v3989, 7
          %v3991 = vsub.s32 %v3988, %v3990
          %v3992 = vrot.slane %v3976, %v3991
          %v3994 = vunpack.c.l.s4 1966171168
          %v3995 = vunpack.c.0.s8 %v3994
          %v3996 = vlaneseq
          %v3997 = vshrl.u32 %v3996, 7
          %v3998 = vsub.s32 %v3995, %v3997
          %v3999 = vrot.slane %v3977, %v3998
          %v4001 = vunpack.c.l.s4 1966171168
          %v4002 = vunpack.c.0.s8 %v4001
          %v4003 = vlaneseq
          %v4004 = vshrl.u32 %v4003, 7
          %v4005 = vsub.s32 %v4002, %v4004
          %v4006 = vrot.slane %v3978, %v4005
          %v4007 = vcombine.low %v3985, %v3992
          %v4008 = vcombine.low %v3999, %v4006
          %v4010 = vunpack.c.l.s4 1966171168
          %v4011 = vunpack.c.0.s8 %v4010
          %v4012 = vlaneseq
          %v4013 = vshrl.u32 %v4012, 7
          %v4014 = vsub.s32 %v4011, %v4013
          %v4015 = vrot.slane %v4007, %v4014
          %v4017 = vunpack.c.l.s4 1966171168
          %v4018 = vunpack.c.0.s8 %v4017
          %v4019 = vlaneseq
          %v4020 = vshrl.u32 %v4019, 7
          %v4021 = vsub.s32 %v4018, %v4020
          %v4022 = vrot.slane %v4008, %v4021
          %v4023 = vcombine.low %v4015, %v4022
          %v4024 = vcombine.low %v3385, %v3387
          %v4025 = vcombine.low %v3527, %v3529
          %v4026 = vcombine.low %v3669, %v3671
          %v4027 = vcombine.low %v3811, %v3813
          %v4029 = vunpack.c.l.s4 1966171168
          %v4030 = vunpack.c.0.s8 %v4029
          %v4031 = vlaneseq
          %v4032 = vshrl.u32 %v4031, 7
          %v4033 = vsub.s32 %v4030, %v4032
          %v4034 = vrot.slane %v4024, %v4033
          %v4036 = vunpack.c.l.s4 1966171168
          %v4037 = vunpack.c.0.s8 %v4036
          %v4038 = vlaneseq
          %v4039 = vshrl.u32 %v4038, 7
          %v4040 = vsub.s32 %v4037, %v4039
          %v4041 = vrot.slane %v4025, %v4040
          %v4043 = vunpack.c.l.s4 1966171168
          %v4044 = vunpack.c.0.s8 %v4043
          %v4045 = vlaneseq
          %v4046 = vshrl.u32 %v4045, 7
          %v4047 = vsub.s32 %v4044, %v4046
          %v4048 = vrot.slane %v4026, %v4047
          %v4050 = vunpack.c.l.s4 1966171168
          %v4051 = vunpack.c.0.s8 %v4050
          %v4052 = vlaneseq
          %v4053 = vshrl.u32 %v4052, 7
          %v4054 = vsub.s32 %v4051, %v4053
          %v4055 = vrot.slane %v4027, %v4054
          %v4056 = vcombine.low %v4034, %v4041
          %v4057 = vcombine.low %v4048, %v4055
          %v4059 = vunpack.c.l.s4 1966171168
          %v4060 = vunpack.c.0.s8 %v4059
          %v4061 = vlaneseq
          %v4062 = vshrl.u32 %v4061, 7
          %v4063 = vsub.s32 %v4060, %v4062
          %v4064 = vrot.slane %v4056, %v4063
          %v4066 = vunpack.c.l.s4 1966171168
          %v4067 = vunpack.c.0.s8 %v4066
          %v4068 = vlaneseq
          %v4069 = vshrl.u32 %v4068, 7
          %v4070 = vsub.s32 %v4067, %v4069
          %v4071 = vrot.slane %v4057, %v4070
          %v4072 = vcombine.low %v4064, %v4071
          %v4073 = vcombine.low %v3953, %v3955
          %v4075 = vunpack.c.l.s4 1966171168
          %v4076 = vunpack.c.0.s8 %v4075
          %v4077 = vlaneseq
          %v4078 = vshrl.u32 %v4077, 7
          %v4079 = vsub.s32 %v4076, %v4078
          %v4080 = vrot.slane %v4073, %v4079
          %v4082 = vunpack.c.l.s4 1966171168
          %v4083 = vunpack.c.0.s8 %v4082
          %v4084 = vlaneseq
          %v4085 = vshrl.u32 %v4084, 7
          %v4086 = vsub.s32 %v4083, %v4085
          %v4087 = vrot.slane %v4080, %v4086
          %4091 = vst [vmem:[#allocation3] sm:$0xff] %v4023
          %4092 = vst [vmem:[#allocation3 + $0x8] sm:$0xff] %v4072
          %vm4093 = vcmp.lt.s32.totalorder %v1693, 256
          %vm4094 = vmand %vm1694, %vm4093
          %4095 = vst.msk [vmem:[#allocation3 + $0x10] sm:$0x3] %vm4094, %v4087
          %v4096 = vld [vmem:[#allocation2] sm:$0x7]
          %4097 = vst.msk [vmem:[%s579] sm:$0x7] %vm1696, %v4096
          %v4098 = vld [vmem:[#allocation3] sm:$0xff]
          %v4099 = vld [vmem:[#allocation3 + $0x8] sm:$0xff]
          %v4100 = vld [vmem:[#allocation3 + $0x10] sm:$0x3]
          %4101 = vst [vmem:[%s586] sm:$0xff] %v4098
          %4102 = vst [vmem:[%s586 + $0x8] sm:$0xff] %v4099
          %4103 = vst.msk [vmem:[%s586 + $0x10] sm:$0x3] %vm4094, %v4100
        $region104: #{tpu_custom_call.1} parent=59 // pred_fallthru
          _
        %v4104 = vld [vmem:[%s535] sm:$0xff]
        %v4105 = vld [vmem:[%s535 + $0x8] sm:$0xff]
        %v4106 = vld [vmem:[%s535 + $0x10] sm:$0xff]
        %v4107 = vld [vmem:[%s535 + $0x18] sm:$0xff]
        %v4108 = vld [vmem:[%s535 + $0x20] sm:$0xff]
        %v4109 = vld [vmem:[%s535 + $0x28] sm:$0xff]
        %v4110 = vld [vmem:[%s535 + $0x30] sm:$0xff]
        %v4111 = vld [vmem:[%s535 + $0x38] sm:$0xff]
        %v4112 = vld [vmem:[%s535 + $0x40] sm:$0xff]
        %v4113 = vld [vmem:[%s535 + $0x48] sm:$0xff]
        %v4114 = vld [vmem:[%s535 + $0x50] sm:$0xff]
        %v4115 = vld [vmem:[%s535 + $0x58] sm:$0xff]
        %v4116 = vld [vmem:[%s535 + $0x60] sm:$0xff]
        %v4117 = vld [vmem:[%s535 + $0x68] sm:$0xff]
        %v4118 = vld [vmem:[%s535 + $0x70] sm:$0xff]
        %v4119 = vld [vmem:[%s535 + $0x78] sm:$0xff]
        %v4120 = vld [vmem:[%s535 + $0x80] sm:$0xff]
        %v4121 = vld [vmem:[%s535 + $0x88] sm:$0xff]
        %v4122 = vld [vmem:[%s535 + $0x90] sm:$0xff]
        %v4123 = vld [vmem:[%s535 + $0x98] sm:$0xff]
        %v4124 = vld [vmem:[%s535 + $0xa0] sm:$0xff]
        %v4125 = vld [vmem:[%s535 + $0xa8] sm:$0xff]
        %v4126 = vld [vmem:[%s535 + $0xb0] sm:$0xff]
        %v4127 = vld [vmem:[%s535 + $0xb8] sm:$0xff]
        %v4128 = vld [vmem:[%s535 + $0xc0] sm:$0xff]
        %v4129 = vld [vmem:[%s535 + $0xc8] sm:$0xff]
        %v4130 = vld [vmem:[%s535 + $0xd0] sm:$0xff]
        %v4131 = vld [vmem:[%s535 + $0xd8] sm:$0xff]
        %v4132 = vld [vmem:[%s535 + $0xe0] sm:$0xff]
        %v4133 = vld [vmem:[%s535 + $0xe8] sm:$0xff]
        %v4134 = vld [vmem:[%s535 + $0xf0] sm:$0xff]
        %v4135 = vld [vmem:[%s535 + $0xf8] sm:$0xff]
        %v4136 = vld [vmem:[%s535 + $0x100] sm:$0xff]
        %v4137 = vld [vmem:[%s535 + $0x108] sm:$0xff]
        %v4138 = vld [vmem:[%s535 + $0x110] sm:$0xff]
        %v4139 = vld [vmem:[%s535 + $0x118] sm:$0xff]
        %v4140 = vld [vmem:[%s535 + $0x120] sm:$0xff]
        %v4141 = vld [vmem:[%s535 + $0x128] sm:$0xff]
        %v4142 = vld [vmem:[%s535 + $0x130] sm:$0xff]
        %v4143 = vld [vmem:[%s535 + $0x138] sm:$0xff]
        %v4144 = vld [vmem:[%s535 + $0x140] sm:$0xff]
        %v4145 = vld [vmem:[%s535 + $0x148] sm:$0xff]
        %v4146 = vld [vmem:[%s535 + $0x150] sm:$0xff]
        %v4147 = vld [vmem:[%s535 + $0x158] sm:$0xff]
        %v4148 = vld [vmem:[%s535 + $0x160] sm:$0xff]
        %v4149 = vld [vmem:[%s535 + $0x168] sm:$0xff]
        %v4150 = vld [vmem:[%s535 + $0x170] sm:$0xff]
        %v4151 = vld [vmem:[%s535 + $0x178] sm:$0xff]
        %v4152 = vld [vmem:[%s535 + $0x180] sm:$0xff]
        %v4153 = vld [vmem:[%s535 + $0x188] sm:$0xff]
        %v4154 = vld [vmem:[%s535 + $0x190] sm:$0xff]
        %v4155 = vld [vmem:[%s535 + $0x198] sm:$0xff]
        %v4156 = vld [vmem:[%s535 + $0x1a0] sm:$0xff]
        %v4157 = vld [vmem:[%s535 + $0x1a8] sm:$0xff]
        %v4158 = vld [vmem:[%s535 + $0x1b0] sm:$0xff]
        %v4159 = vld [vmem:[%s535 + $0x1b8] sm:$0xff]
        %v4160 = vld [vmem:[%s535 + $0x1c0] sm:$0xff]
        %v4161 = vld [vmem:[%s535 + $0x1c8] sm:$0xff]
        %v4162 = vld [vmem:[%s535 + $0x1d0] sm:$0xff]
        %v4163 = vld [vmem:[%s535 + $0x1d8] sm:$0xff]
        %v4164 = vld [vmem:[%s535 + $0x1e0] sm:$0xff]
        %v4165 = vld [vmem:[%s535 + $0x1e8] sm:$0xff]
        %v4166 = vld [vmem:[%s535 + $0x1f0] sm:$0xff]
        %v4167 = vld [vmem:[%s535 + $0x1f8] sm:$0xff]
        %v4168 = vld [vmem:[%s535 + $0x200] sm:$0xff]
        %v4169 = vld [vmem:[%s535 + $0x208] sm:$0xff]
        %v4170 = vld [vmem:[%s535 + $0x210] sm:$0xff]
        %v4171 = vld [vmem:[%s535 + $0x218] sm:$0xff]
        %v4172 = vld [vmem:[%s535 + $0x220] sm:$0xff]
        %v4173 = vld [vmem:[%s535 + $0x228] sm:$0xff]
        %v4174 = vld [vmem:[%s535 + $0x230] sm:$0xff]
        %v4175 = vld [vmem:[%s535 + $0x238] sm:$0xff]
        %v4176 = vld [vmem:[%s535 + $0x240] sm:$0xff]
        %v4177 = vld [vmem:[%s535 + $0x248] sm:$0xff]
        %v4178 = vld [vmem:[%s535 + $0x250] sm:$0xff]
        %v4179 = vld [vmem:[%s535 + $0x258] sm:$0xff]
        %v4180 = vld [vmem:[%s535 + $0x260] sm:$0xff]
        %v4181 = vld [vmem:[%s535 + $0x268] sm:$0xff]
        %v4182 = vld [vmem:[%s535 + $0x270] sm:$0xff]
        %v4183 = vld [vmem:[%s535 + $0x278] sm:$0xff]
        %v4184 = vld [vmem:[%s535 + $0x280] sm:$0xff]
        %v4185 = vld [vmem:[%s535 + $0x288] sm:$0xff]
        %v4186 = vld [vmem:[%s535 + $0x290] sm:$0xff]
        %v4187 = vld [vmem:[%s535 + $0x298] sm:$0xff]
        %v4188 = vld [vmem:[%s535 + $0x2a0] sm:$0xff]
        %v4189 = vld [vmem:[%s535 + $0x2a8] sm:$0xff]
        %v4190 = vld [vmem:[%s535 + $0x2b0] sm:$0xff]
        %v4191 = vld [vmem:[%s535 + $0x2b8] sm:$0xff]
        %v4192 = vld [vmem:[%s535 + $0x2c0] sm:$0xff]
        %v4193 = vld [vmem:[%s535 + $0x2c8] sm:$0xff]
        %v4194 = vld [vmem:[%s535 + $0x2d0] sm:$0xff]
        %v4195 = vld [vmem:[%s535 + $0x2d8] sm:$0xff]
        %v4196 = vld [vmem:[%s535 + $0x2e0] sm:$0xff]
        %v4197 = vld [vmem:[%s535 + $0x2e8] sm:$0xff]
        %v4198 = vld [vmem:[%s535 + $0x2f0] sm:$0xff]
        %v4199 = vld [vmem:[%s535 + $0x2f8] sm:$0xff]
        %v4200 = vadd.f32 %v4104, %v4105
        %v4201 = vadd.f32 %v4200, %v4106
        %4202 = vadd.xlane.f32.xlu0 %v4201
        %v4203 = vpop.xlane.xlu0 %4202
        %v4204 = vadd.f32 %v4107, %v4108
        %v4205 = vadd.f32 %v4204, %v4109
        %4206 = vadd.xlane.f32.xlu0 %v4205
        %v4207 = vpop.xlane.xlu0 %4206
        %v4208 = vadd.f32 %v4110, %v4111
        %v4209 = vadd.f32 %v4208, %v4112
        %4210 = vadd.xlane.f32.xlu0 %v4209
        %v4211 = vpop.xlane.xlu0 %4210
        %v4212 = vadd.f32 %v4113, %v4114
        %v4213 = vadd.f32 %v4212, %v4115
        %4214 = vadd.xlane.f32.xlu0 %v4213
        %v4215 = vpop.xlane.xlu0 %4214
        %v4216 = vadd.f32 %v4116, %v4117
        %v4217 = vadd.f32 %v4216, %v4118
        %4218 = vadd.xlane.f32.xlu0 %v4217
        %v4219 = vpop.xlane.xlu0 %4218
        %v4220 = vadd.f32 %v4119, %v4120
        %v4221 = vadd.f32 %v4220, %v4121
        %4222 = vadd.xlane.f32.xlu0 %v4221
        %v4223 = vpop.xlane.xlu0 %4222
        %v4224 = vadd.f32 %v4122, %v4123
        %v4225 = vadd.f32 %v4224, %v4124
        %4226 = vadd.xlane.f32.xlu0 %v4225
        %v4227 = vpop.xlane.xlu0 %4226
        %v4228 = vadd.f32 %v4125, %v4126
        %v4229 = vadd.f32 %v4228, %v4127
        %4230 = vadd.xlane.f32.xlu0 %v4229
        %v4231 = vpop.xlane.xlu0 %4230
        %v4232 = vadd.f32 %v4128, %v4129
        %v4233 = vadd.f32 %v4232, %v4130
        %4234 = vadd.xlane.f32.xlu0 %v4233
        %v4235 = vpop.xlane.xlu0 %4234
        %v4236 = vadd.f32 %v4131, %v4132
        %v4237 = vadd.f32 %v4236, %v4133
        %4238 = vadd.xlane.f32.xlu0 %v4237
        %v4239 = vpop.xlane.xlu0 %4238
        %v4240 = vadd.f32 %v4134, %v4135
        %v4241 = vadd.f32 %v4240, %v4136
        %4242 = vadd.xlane.f32.xlu0 %v4241
        %v4243 = vpop.xlane.xlu0 %4242
        %v4244 = vadd.f32 %v4137, %v4138
        %v4245 = vadd.f32 %v4244, %v4139
        %4246 = vadd.xlane.f32.xlu0 %v4245
        %v4247 = vpop.xlane.xlu0 %4246
        %v4248 = vadd.f32 %v4140, %v4141
        %v4249 = vadd.f32 %v4248, %v4142
        %4250 = vadd.xlane.f32.xlu0 %v4249
        %v4251 = vpop.xlane.xlu0 %4250
        %v4252 = vadd.f32 %v4143, %v4144
        %v4253 = vadd.f32 %v4252, %v4145
        %4254 = vadd.xlane.f32.xlu0 %v4253
        %v4255 = vpop.xlane.xlu0 %4254
        %v4256 = vadd.f32 %v4146, %v4147
        %v4257 = vadd.f32 %v4256, %v4148
        %4258 = vadd.xlane.f32.xlu0 %v4257
        %v4259 = vpop.xlane.xlu0 %4258
        %v4260 = vadd.f32 %v4149, %v4150
        %v4261 = vadd.f32 %v4260, %v4151
        %4262 = vadd.xlane.f32.xlu0 %v4261
        %v4263 = vpop.xlane.xlu0 %4262
        %v4264 = vadd.f32 %v4152, %v4153
        %v4265 = vadd.f32 %v4264, %v4154
        %4266 = vadd.xlane.f32.xlu0 %v4265
        %v4267 = vpop.xlane.xlu0 %4266
        %v4268 = vadd.f32 %v4155, %v4156
        %v4269 = vadd.f32 %v4268, %v4157
        %4270 = vadd.xlane.f32.xlu0 %v4269
        %v4271 = vpop.xlane.xlu0 %4270
        %v4272 = vadd.f32 %v4158, %v4159
        %v4273 = vadd.f32 %v4272, %v4160
        %4274 = vadd.xlane.f32.xlu0 %v4273
        %v4275 = vpop.xlane.xlu0 %4274
        %v4276 = vadd.f32 %v4161, %v4162
        %v4277 = vadd.f32 %v4276, %v4163
        %4278 = vadd.xlane.f32.xlu0 %v4277
        %v4279 = vpop.xlane.xlu0 %4278
        %v4280 = vadd.f32 %v4164, %v4165
        %v4281 = vadd.f32 %v4280, %v4166
        %4282 = vadd.xlane.f32.xlu0 %v4281
        %v4283 = vpop.xlane.xlu0 %4282
        %v4284 = vadd.f32 %v4167, %v4168
        %v4285 = vadd.f32 %v4284, %v4169
        %4286 = vadd.xlane.f32.xlu0 %v4285
        %v4287 = vpop.xlane.xlu0 %4286
        %v4288 = vadd.f32 %v4170, %v4171
        %v4289 = vadd.f32 %v4288, %v4172
        %4290 = vadd.xlane.f32.xlu0 %v4289
        %v4291 = vpop.xlane.xlu0 %4290
        %v4292 = vadd.f32 %v4173, %v4174
        %v4293 = vadd.f32 %v4292, %v4175
        %4294 = vadd.xlane.f32.xlu0 %v4293
        %v4295 = vpop.xlane.xlu0 %4294
        %v4296 = vadd.f32 %v4176, %v4177
        %v4297 = vadd.f32 %v4296, %v4178
        %4298 = vadd.xlane.f32.xlu0 %v4297
        %v4299 = vpop.xlane.xlu0 %4298
        %v4300 = vadd.f32 %v4179, %v4180
        %v4301 = vadd.f32 %v4300, %v4181
        %4302 = vadd.xlane.f32.xlu0 %v4301
        %v4303 = vpop.xlane.xlu0 %4302
        %v4304 = vadd.f32 %v4182, %v4183
        %v4305 = vadd.f32 %v4304, %v4184
        %4306 = vadd.xlane.f32.xlu0 %v4305
        %v4307 = vpop.xlane.xlu0 %4306
        %v4308 = vadd.f32 %v4185, %v4186
        %v4309 = vadd.f32 %v4308, %v4187
        %4310 = vadd.xlane.f32.xlu0 %v4309
        %v4311 = vpop.xlane.xlu0 %4310
        %v4312 = vadd.f32 %v4188, %v4189
        %v4313 = vadd.f32 %v4312, %v4190
        %4314 = vadd.xlane.f32.xlu0 %v4313
        %v4315 = vpop.xlane.xlu0 %4314
        %v4316 = vadd.f32 %v4191, %v4192
        %v4317 = vadd.f32 %v4316, %v4193
        %4318 = vadd.xlane.f32.xlu0 %v4317
        %v4319 = vpop.xlane.xlu0 %4318
        %v4320 = vadd.f32 %v4194, %v4195
        %v4321 = vadd.f32 %v4320, %v4196
        %4322 = vadd.xlane.f32.xlu0 %v4321
        %v4323 = vpop.xlane.xlu0 %4322
        %v4324 = vadd.f32 %v4197, %v4198
        %v4325 = vadd.f32 %v4324, %v4199
        %4326 = vadd.xlane.f32.xlu0 %v4325
        %v4327 = vpop.xlane.xlu0 %4326
        %v4328 = vrcp.pop 384.0
        %v4329 = vmul.f32 %v4203, %v4328
        %v4330 = vmul.f32 %v4207, %v4328
        %v4331 = vmul.f32 %v4211, %v4328
        %v4332 = vmul.f32 %v4215, %v4328
        %v4333 = vmul.f32 %v4219, %v4328
        %v4334 = vmul.f32 %v4223, %v4328
        %v4335 = vmul.f32 %v4227, %v4328
        %v4336 = vmul.f32 %v4231, %v4328
        %v4337 = vmul.f32 %v4235, %v4328
        %v4338 = vmul.f32 %v4239, %v4328
        %v4339 = vmul.f32 %v4243, %v4328
        %v4340 = vmul.f32 %v4247, %v4328
        %v4341 = vmul.f32 %v4251, %v4328
        %v4342 = vmul.f32 %v4255, %v4328
        %v4343 = vmul.f32 %v4259, %v4328
        %v4344 = vmul.f32 %v4263, %v4328
        %v4345 = vmul.f32 %v4267, %v4328
        %v4346 = vmul.f32 %v4271, %v4328
        %v4347 = vmul.f32 %v4275, %v4328
        %v4348 = vmul.f32 %v4279, %v4328
        %v4349 = vmul.f32 %v4283, %v4328
        %v4350 = vmul.f32 %v4287, %v4328
        %v4351 = vmul.f32 %v4291, %v4328
        %v4352 = vmul.f32 %v4295, %v4328
        %v4353 = vmul.f32 %v4299, %v4328
        %v4354 = vmul.f32 %v4303, %v4328
        %v4355 = vmul.f32 %v4307, %v4328
        %v4356 = vmul.f32 %v4311, %v4328
        %v4357 = vmul.f32 %v4315, %v4328
        %v4358 = vmul.f32 %v4319, %v4328
        %v4359 = vmul.f32 %v4323, %v4328
        %v4360 = vmul.f32 %v4327, %v4328
        %v4361 = vsub.f32 %v4104, %v4329
        %v4362 = vsub.f32 %v4105, %v4329
        %v4363 = vsub.f32 %v4106, %v4329
        %v4364 = vsub.f32 %v4107, %v4330
        %v4365 = vsub.f32 %v4108, %v4330
        %v4366 = vsub.f32 %v4109, %v4330
        %v4367 = vsub.f32 %v4110, %v4331
        %v4368 = vsub.f32 %v4111, %v4331
        %v4369 = vsub.f32 %v4112, %v4331
        %v4370 = vsub.f32 %v4113, %v4332
        %v4371 = vsub.f32 %v4114, %v4332
        %v4372 = vsub.f32 %v4115, %v4332
        %v4373 = vsub.f32 %v4116, %v4333
        %v4374 = vsub.f32 %v4117, %v4333
        %v4375 = vsub.f32 %v4118, %v4333
        %v4376 = vsub.f32 %v4119, %v4334
        %v4377 = vsub.f32 %v4120, %v4334
        %v4378 = vsub.f32 %v4121, %v4334
        %v4379 = vsub.f32 %v4122, %v4335
        %v4380 = vsub.f32 %v4123, %v4335
        %v4381 = vsub.f32 %v4124, %v4335
        %v4382 = vsub.f32 %v4125, %v4336
        %v4383 = vsub.f32 %v4126, %v4336
        %v4384 = vsub.f32 %v4127, %v4336
        %v4385 = vsub.f32 %v4128, %v4337
        %v4386 = vsub.f32 %v4129, %v4337
        %v4387 = vsub.f32 %v4130, %v4337
        %v4388 = vsub.f32 %v4131, %v4338
        %v4389 = vsub.f32 %v4132, %v4338
        %v4390 = vsub.f32 %v4133, %v4338
        %v4391 = vsub.f32 %v4134, %v4339
        %v4392 = vsub.f32 %v4135, %v4339
        %v4393 = vsub.f32 %v4136, %v4339
        %v4394 = vsub.f32 %v4137, %v4340
        %v4395 = vsub.f32 %v4138, %v4340
        %v4396 = vsub.f32 %v4139, %v4340
        %v4397 = vsub.f32 %v4140, %v4341
        %v4398 = vsub.f32 %v4141, %v4341
        %v4399 = vsub.f32 %v4142, %v4341
        %v4400 = vsub.f32 %v4143, %v4342
        %v4401 = vsub.f32 %v4144, %v4342
        %v4402 = vsub.f32 %v4145, %v4342
        %v4403 = vsub.f32 %v4146, %v4343
        %v4404 = vsub.f32 %v4147, %v4343
        %v4405 = vsub.f32 %v4148, %v4343
        %v4406 = vsub.f32 %v4149, %v4344
        %v4407 = vsub.f32 %v4150, %v4344
        %v4408 = vsub.f32 %v4151, %v4344
        %v4409 = vsub.f32 %v4152, %v4345
        %v4410 = vsub.f32 %v4153, %v4345
        %v4411 = vsub.f32 %v4154, %v4345
        %v4412 = vsub.f32 %v4155, %v4346
        %v4413 = vsub.f32 %v4156, %v4346
        %v4414 = vsub.f32 %v4157, %v4346
        %v4415 = vsub.f32 %v4158, %v4347
        %v4416 = vsub.f32 %v4159, %v4347
        %v4417 = vsub.f32 %v4160, %v4347
        %v4418 = vsub.f32 %v4161, %v4348
        %v4419 = vsub.f32 %v4162, %v4348
        %v4420 = vsub.f32 %v4163, %v4348
        %v4421 = vsub.f32 %v4164, %v4349
        %v4422 = vsub.f32 %v4165, %v4349
        %v4423 = vsub.f32 %v4166, %v4349
        %v4424 = vsub.f32 %v4167, %v4350
        %v4425 = vsub.f32 %v4168, %v4350
        %v4426 = vsub.f32 %v4169, %v4350
        %v4427 = vsub.f32 %v4170, %v4351
        %v4428 = vsub.f32 %v4171, %v4351
        %v4429 = vsub.f32 %v4172, %v4351
        %v4430 = vsub.f32 %v4173, %v4352
        %v4431 = vsub.f32 %v4174, %v4352
        %v4432 = vsub.f32 %v4175, %v4352
        %v4433 = vsub.f32 %v4176, %v4353
        %v4434 = vsub.f32 %v4177, %v4353
        %v4435 = vsub.f32 %v4178, %v4353
        %v4436 = vsub.f32 %v4179, %v4354
        %v4437 = vsub.f32 %v4180, %v4354
        %v4438 = vsub.f32 %v4181, %v4354
        %v4439 = vsub.f32 %v4182, %v4355
        %v4440 = vsub.f32 %v4183, %v4355
        %v4441 = vsub.f32 %v4184, %v4355
        %v4442 = vsub.f32 %v4185, %v4356
        %v4443 = vsub.f32 %v4186, %v4356
        %v4444 = vsub.f32 %v4187, %v4356
        %v4445 = vsub.f32 %v4188, %v4357
        %v4446 = vsub.f32 %v4189, %v4357
        %v4447 = vsub.f32 %v4190, %v4357
        %v4448 = vsub.f32 %v4191, %v4358
        %v4449 = vsub.f32 %v4192, %v4358
        %v4450 = vsub.f32 %v4193, %v4358
        %v4451 = vsub.f32 %v4194, %v4359
        %v4452 = vsub.f32 %v4195, %v4359
        %v4453 = vsub.f32 %v4196, %v4359
        %v4454 = vsub.f32 %v4197, %v4360
        %v4455 = vsub.f32 %v4198, %v4360
        %v4456 = vsub.f32 %v4199, %v4360
        %v4457 = vmul.f32 %v4361, %v4361
        %v4458 = vmul.f32 %v4362, %v4362
        %v4459 = vmul.f32 %v4363, %v4363
        %v4460 = vmul.f32 %v4364, %v4364
        %v4461 = vmul.f32 %v4365, %v4365
        %v4462 = vmul.f32 %v4366, %v4366
        %v4463 = vmul.f32 %v4367, %v4367
        %v4464 = vmul.f32 %v4368, %v4368
        %v4465 = vmul.f32 %v4369, %v4369
        %v4466 = vmul.f32 %v4370, %v4370
        %v4467 = vmul.f32 %v4371, %v4371
        %v4468 = vmul.f32 %v4372, %v4372
        %v4469 = vmul.f32 %v4373, %v4373
        %v4470 = vmul.f32 %v4374, %v4374
        %v4471 = vmul.f32 %v4375, %v4375
        %v4472 = vmul.f32 %v4376, %v4376
        %v4473 = vmul.f32 %v4377, %v4377
        %v4474 = vmul.f32 %v4378, %v4378
        %v4475 = vmul.f32 %v4379, %v4379
        %v4476 = vmul.f32 %v4380, %v4380
        %v4477 = vmul.f32 %v4381, %v4381
        %v4478 = vmul.f32 %v4382, %v4382
        %v4479 = vmul.f32 %v4383, %v4383
        %v4480 = vmul.f32 %v4384, %v4384
        %v4481 = vmul.f32 %v4385, %v4385
        %v4482 = vmul.f32 %v4386, %v4386
        %v4483 = vmul.f32 %v4387, %v4387
        %v4484 = vmul.f32 %v4388, %v4388
        %v4485 = vmul.f32 %v4389, %v4389
        %v4486 = vmul.f32 %v4390, %v4390
        %v4487 = vmul.f32 %v4391, %v4391
        %v4488 = vmul.f32 %v4392, %v4392
        %v4489 = vmul.f32 %v4393, %v4393
        %v4490 = vmul.f32 %v4394, %v4394
        %v4491 = vmul.f32 %v4395, %v4395
        %v4492 = vmul.f32 %v4396, %v4396
        %v4493 = vmul.f32 %v4397, %v4397
        %v4494 = vmul.f32 %v4398, %v4398
        %v4495 = vmul.f32 %v4399, %v4399
        %v4496 = vmul.f32 %v4400, %v4400
        %v4497 = vmul.f32 %v4401, %v4401
        %v4498 = vmul.f32 %v4402, %v4402
        %v4499 = vmul.f32 %v4403, %v4403
        %v4500 = vmul.f32 %v4404, %v4404
        %v4501 = vmul.f32 %v4405, %v4405
        %v4502 = vmul.f32 %v4406, %v4406
        %v4503 = vmul.f32 %v4407, %v4407
        %v4504 = vmul.f32 %v4408, %v4408
        %v4505 = vmul.f32 %v4409, %v4409
        %v4506 = vmul.f32 %v4410, %v4410
        %v4507 = vmul.f32 %v4411, %v4411
        %v4508 = vmul.f32 %v4412, %v4412
        %v4509 = vmul.f32 %v4413, %v4413
        %v4510 = vmul.f32 %v4414, %v4414
        %v4511 = vmul.f32 %v4415, %v4415
        %v4512 = vmul.f32 %v4416, %v4416
        %v4513 = vmul.f32 %v4417, %v4417
        %v4514 = vmul.f32 %v4418, %v4418
        %v4515 = vmul.f32 %v4419, %v4419
        %v4516 = vmul.f32 %v4420, %v4420
        %v4517 = vmul.f32 %v4421, %v4421
        %v4518 = vmul.f32 %v4422, %v4422
        %v4519 = vmul.f32 %v4423, %v4423
        %v4520 = vmul.f32 %v4424, %v4424
        %v4521 = vmul.f32 %v4425, %v4425
        %v4522 = vmul.f32 %v4426, %v4426
        %v4523 = vmul.f32 %v4427, %v4427
        %v4524 = vmul.f32 %v4428, %v4428
        %v4525 = vmul.f32 %v4429, %v4429
        %v4526 = vmul.f32 %v4430, %v4430
        %v4527 = vmul.f32 %v4431, %v4431
        %v4528 = vmul.f32 %v4432, %v4432
        %v4529 = vmul.f32 %v4433, %v4433
        %v4530 = vmul.f32 %v4434, %v4434
        %v4531 = vmul.f32 %v4435, %v4435
        %v4532 = vmul.f32 %v4436, %v4436
        %v4533 = vmul.f32 %v4437, %v4437
        %v4534 = vmul.f32 %v4438, %v4438
        %v4535 = vmul.f32 %v4439, %v4439
        %v4536 = vmul.f32 %v4440, %v4440
        %v4537 = vmul.f32 %v4441, %v4441
        %v4538 = vmul.f32 %v4442, %v4442
        %v4539 = vmul.f32 %v4443, %v4443
        %v4540 = vmul.f32 %v4444, %v4444
        %v4541 = vmul.f32 %v4445, %v4445
        %v4542 = vmul.f32 %v4446, %v4446
        %v4543 = vmul.f32 %v4447, %v4447
        %v4544 = vmul.f32 %v4448, %v4448
        %v4545 = vmul.f32 %v4449, %v4449
        %v4546 = vmul.f32 %v4450, %v4450
        %v4547 = vmul.f32 %v4451, %v4451
        %v4548 = vmul.f32 %v4452, %v4452
        %v4549 = vmul.f32 %v4453, %v4453
        %v4550 = vmul.f32 %v4454, %v4454
        %v4551 = vmul.f32 %v4455, %v4455
        %v4552 = vmul.f32 %v4456, %v4456
        %v4553 = vadd.f32 %v4457, %v4458
        %v4554 = vadd.f32 %v4553, %v4459
        %4555 = vadd.xlane.f32.xlu0 %v4554
        %v4556 = vpop.xlane.xlu0 %4555
        %v4557 = vadd.f32 %v4460, %v4461
        %v4558 = vadd.f32 %v4557, %v4462
        %4559 = vadd.xlane.f32.xlu0 %v4558
        %v4560 = vpop.xlane.xlu0 %4559
        %v4561 = vadd.f32 %v4463, %v4464
        %v4562 = vadd.f32 %v4561, %v4465
        %4563 = vadd.xlane.f32.xlu0 %v4562
        %v4564 = vpop.xlane.xlu0 %4563
        %v4565 = vadd.f32 %v4466, %v4467
        %v4566 = vadd.f32 %v4565, %v4468
        %4567 = vadd.xlane.f32.xlu0 %v4566
        %v4568 = vpop.xlane.xlu0 %4567
        %v4569 = vadd.f32 %v4469, %v4470
        %v4570 = vadd.f32 %v4569, %v4471
        %4571 = vadd.xlane.f32.xlu0 %v4570
        %v4572 = vpop.xlane.xlu0 %4571
        %v4573 = vadd.f32 %v4472, %v4473
        %v4574 = vadd.f32 %v4573, %v4474
        %4575 = vadd.xlane.f32.xlu0 %v4574
        %v4576 = vpop.xlane.xlu0 %4575
        %v4577 = vadd.f32 %v4475, %v4476
        %v4578 = vadd.f32 %v4577, %v4477
        %4579 = vadd.xlane.f32.xlu0 %v4578
        %v4580 = vpop.xlane.xlu0 %4579
        %v4581 = vadd.f32 %v4478, %v4479
        %v4582 = vadd.f32 %v4581, %v4480
        %4583 = vadd.xlane.f32.xlu0 %v4582
        %v4584 = vpop.xlane.xlu0 %4583
        %v4585 = vadd.f32 %v4481, %v4482
        %v4586 = vadd.f32 %v4585, %v4483
        %4587 = vadd.xlane.f32.xlu0 %v4586
        %v4588 = vpop.xlane.xlu0 %4587
        %v4589 = vadd.f32 %v4484, %v4485
        %v4590 = vadd.f32 %v4589, %v4486
        %4591 = vadd.xlane.f32.xlu0 %v4590
        %v4592 = vpop.xlane.xlu0 %4591
        %v4593 = vadd.f32 %v4487, %v4488
        %v4594 = vadd.f32 %v4593, %v4489
        %4595 = vadd.xlane.f32.xlu0 %v4594
        %v4596 = vpop.xlane.xlu0 %4595
        %v4597 = vadd.f32 %v4490, %v4491
        %v4598 = vadd.f32 %v4597, %v4492
        %4599 = vadd.xlane.f32.xlu0 %v4598
        %v4600 = vpop.xlane.xlu0 %4599
        %v4601 = vadd.f32 %v4493, %v4494
        %v4602 = vadd.f32 %v4601, %v4495
        %4603 = vadd.xlane.f32.xlu0 %v4602
        %v4604 = vpop.xlane.xlu0 %4603
        %v4605 = vadd.f32 %v4496, %v4497
        %v4606 = vadd.f32 %v4605, %v4498
        %4607 = vadd.xlane.f32.xlu0 %v4606
        %v4608 = vpop.xlane.xlu0 %4607
        %v4609 = vadd.f32 %v4499, %v4500
        %v4610 = vadd.f32 %v4609, %v4501
        %4611 = vadd.xlane.f32.xlu0 %v4610
        %v4612 = vpop.xlane.xlu0 %4611
        %v4613 = vadd.f32 %v4502, %v4503
        %v4614 = vadd.f32 %v4613, %v4504
        %4615 = vadd.xlane.f32.xlu0 %v4614
        %v4616 = vpop.xlane.xlu0 %4615
        %v4617 = vadd.f32 %v4505, %v4506
        %v4618 = vadd.f32 %v4617, %v4507
        %4619 = vadd.xlane.f32.xlu0 %v4618
        %v4620 = vpop.xlane.xlu0 %4619
        %v4621 = vadd.f32 %v4508, %v4509
        %v4622 = vadd.f32 %v4621, %v4510
        %4623 = vadd.xlane.f32.xlu0 %v4622
        %v4624 = vpop.xlane.xlu0 %4623
        %v4625 = vadd.f32 %v4511, %v4512
        %v4626 = vadd.f32 %v4625, %v4513
        %4627 = vadd.xlane.f32.xlu0 %v4626
        %v4628 = vpop.xlane.xlu0 %4627
        %v4629 = vadd.f32 %v4514, %v4515
        %v4630 = vadd.f32 %v4629, %v4516
        %4631 = vadd.xlane.f32.xlu0 %v4630
        %v4632 = vpop.xlane.xlu0 %4631
        %v4633 = vadd.f32 %v4517, %v4518
        %v4634 = vadd.f32 %v4633, %v4519
        %4635 = vadd.xlane.f32.xlu0 %v4634
        %v4636 = vpop.xlane.xlu0 %4635
        %v4637 = vadd.f32 %v4520, %v4521
        %v4638 = vadd.f32 %v4637, %v4522
        %4639 = vadd.xlane.f32.xlu0 %v4638
        %v4640 = vpop.xlane.xlu0 %4639
        %v4641 = vadd.f32 %v4523, %v4524
        %v4642 = vadd.f32 %v4641, %v4525
        %4643 = vadd.xlane.f32.xlu0 %v4642
        %v4644 = vpop.xlane.xlu0 %4643
        %v4645 = vadd.f32 %v4526, %v4527
        %v4646 = vadd.f32 %v4645, %v4528
        %4647 = vadd.xlane.f32.xlu0 %v4646
        %v4648 = vpop.xlane.xlu0 %4647
        %v4649 = vadd.f32 %v4529, %v4530
        %v4650 = vadd.f32 %v4649, %v4531
        %4651 = vadd.xlane.f32.xlu0 %v4650
        %v4652 = vpop.xlane.xlu0 %4651
        %v4653 = vadd.f32 %v4532, %v4533
        %v4654 = vadd.f32 %v4653, %v4534
        %4655 = vadd.xlane.f32.xlu0 %v4654
        %v4656 = vpop.xlane.xlu0 %4655
        %v4657 = vadd.f32 %v4535, %v4536
        %v4658 = vadd.f32 %v4657, %v4537
        %4659 = vadd.xlane.f32.xlu0 %v4658
        %v4660 = vpop.xlane.xlu0 %4659
        %v4661 = vadd.f32 %v4538, %v4539
        %v4662 = vadd.f32 %v4661, %v4540
        %4663 = vadd.xlane.f32.xlu0 %v4662
        %v4664 = vpop.xlane.xlu0 %4663
        %v4665 = vadd.f32 %v4541, %v4542
        %v4666 = vadd.f32 %v4665, %v4543
        %4667 = vadd.xlane.f32.xlu0 %v4666
        %v4668 = vpop.xlane.xlu0 %4667
        %v4669 = vadd.f32 %v4544, %v4545
        %v4670 = vadd.f32 %v4669, %v4546
        %4671 = vadd.xlane.f32.xlu0 %v4670
        %v4672 = vpop.xlane.xlu0 %4671
        %v4673 = vadd.f32 %v4547, %v4548
        %v4674 = vadd.f32 %v4673, %v4549
        %4675 = vadd.xlane.f32.xlu0 %v4674
        %v4676 = vpop.xlane.xlu0 %4675
        %v4677 = vadd.f32 %v4550, %v4551
        %v4678 = vadd.f32 %v4677, %v4552
        %4679 = vadd.xlane.f32.xlu0 %v4678
        %v4680 = vpop.xlane.xlu0 %4679
        %v4681 = vmul.f32 %v4556, %v4328
        %v4682 = vmul.f32 %v4560, %v4328
        %v4683 = vmul.f32 %v4564, %v4328
        %v4684 = vmul.f32 %v4568, %v4328
        %v4685 = vmul.f32 %v4572, %v4328
        %v4686 = vmul.f32 %v4576, %v4328
        %v4687 = vmul.f32 %v4580, %v4328
        %v4688 = vmul.f32 %v4584, %v4328
        %v4689 = vmul.f32 %v4588, %v4328
        %v4690 = vmul.f32 %v4592, %v4328
        %v4691 = vmul.f32 %v4596, %v4328
        %v4692 = vmul.f32 %v4600, %v4328
        %v4693 = vmul.f32 %v4604, %v4328
        %v4694 = vmul.f32 %v4608, %v4328
        %v4695 = vmul.f32 %v4612, %v4328
        %v4696 = vmul.f32 %v4616, %v4328
        %v4697 = vmul.f32 %v4620, %v4328
        %v4698 = vmul.f32 %v4624, %v4328
        %v4699 = vmul.f32 %v4628, %v4328
        %v4700 = vmul.f32 %v4632, %v4328
        %v4701 = vmul.f32 %v4636, %v4328
        %v4702 = vmul.f32 %v4640, %v4328
        %v4703 = vmul.f32 %v4644, %v4328
        %v4704 = vmul.f32 %v4648, %v4328
        %v4705 = vmul.f32 %v4652, %v4328
        %v4706 = vmul.f32 %v4656, %v4328
        %v4707 = vmul.f32 %v4660, %v4328
        %v4708 = vmul.f32 %v4664, %v4328
        %v4709 = vmul.f32 %v4668, %v4328
        %v4710 = vmul.f32 %v4672, %v4328
        %v4711 = vmul.f32 %v4676, %v4328
        %v4712 = vmul.f32 %v4680, %v4328
        %v4713 = vadd.f32 %v4681, 1e-06
        %v4714 = vadd.f32 %v4682, 1e-06
        %v4715 = vadd.f32 %v4683, 1e-06
        %v4716 = vadd.f32 %v4684, 1e-06
        %v4717 = vadd.f32 %v4685, 1e-06
        %v4718 = vadd.f32 %v4686, 1e-06
        %v4719 = vadd.f32 %v4687, 1e-06
        %v4720 = vadd.f32 %v4688, 1e-06
        %v4721 = vadd.f32 %v4689, 1e-06
        %v4722 = vadd.f32 %v4690, 1e-06
        %v4723 = vadd.f32 %v4691, 1e-06
        %v4724 = vadd.f32 %v4692, 1e-06
        %v4725 = vadd.f32 %v4693, 1e-06
        %v4726 = vadd.f32 %v4694, 1e-06
        %v4727 = vadd.f32 %v4695, 1e-06
        %v4728 = vadd.f32 %v4696, 1e-06
        %v4729 = vadd.f32 %v4697, 1e-06
        %v4730 = vadd.f32 %v4698, 1e-06
        %v4731 = vadd.f32 %v4699, 1e-06
        %v4732 = vadd.f32 %v4700, 1e-06
        %v4733 = vadd.f32 %v4701, 1e-06
        %v4734 = vadd.f32 %v4702, 1e-06
        %v4735 = vadd.f32 %v4703, 1e-06
        %v4736 = vadd.f32 %v4704, 1e-06
        %v4737 = vadd.f32 %v4705, 1e-06
        %v4738 = vadd.f32 %v4706, 1e-06
        %v4739 = vadd.f32 %v4707, 1e-06
        %v4740 = vadd.f32 %v4708, 1e-06
        %v4741 = vadd.f32 %v4709, 1e-06
        %v4742 = vadd.f32 %v4710, 1e-06
        %v4743 = vadd.f32 %v4711, 1e-06
        %v4744 = vadd.f32 %v4712, 1e-06
        %v4745 = vrsqrt.pop %v4713
        %v4746 = vrsqrt.pop %v4714
        %v4747 = vrsqrt.pop %v4715
        %v4748 = vrsqrt.pop %v4716
        %v4749 = vrsqrt.pop %v4717
        %v4750 = vrsqrt.pop %v4718
        %v4751 = vrsqrt.pop %v4719
        %v4752 = vrsqrt.pop %v4720
        %v4753 = vrsqrt.pop %v4721
        %v4754 = vrsqrt.pop %v4722
        %v4755 = vrsqrt.pop %v4723
        %v4756 = vrsqrt.pop %v4724
        %v4757 = vrsqrt.pop %v4725
        %v4758 = vrsqrt.pop %v4726
        %v4759 = vrsqrt.pop %v4727
        %v4760 = vrsqrt.pop %v4728
        %v4761 = vrsqrt.pop %v4729
        %v4762 = vrsqrt.pop %v4730
        %v4763 = vrsqrt.pop %v4731
        %v4764 = vrsqrt.pop %v4732
        %v4765 = vrsqrt.pop %v4733
        %v4766 = vrsqrt.pop %v4734
        %v4767 = vrsqrt.pop %v4735
        %v4768 = vrsqrt.pop %v4736
        %v4769 = vrsqrt.pop %v4737
        %v4770 = vrsqrt.pop %v4738
        %v4771 = vrsqrt.pop %v4739
        %v4772 = vrsqrt.pop %v4740
        %v4773 = vrsqrt.pop %v4741
        %v4774 = vrsqrt.pop %v4742
        %v4775 = vrsqrt.pop %v4743
        %v4776 = vrsqrt.pop %v4744
        %v4777 = vmul.f32 %v4361, %v4745
        %v4778 = vmul.f32 %v4362, %v4745
        %v4779 = vmul.f32 %v4363, %v4745
        %v4780 = vmul.f32 %v4364, %v4746
        %v4781 = vmul.f32 %v4365, %v4746
        %v4782 = vmul.f32 %v4366, %v4746
        %v4783 = vmul.f32 %v4367, %v4747
        %v4784 = vmul.f32 %v4368, %v4747
        %v4785 = vmul.f32 %v4369, %v4747
        %v4786 = vmul.f32 %v4370, %v4748
        %v4787 = vmul.f32 %v4371, %v4748
        %v4788 = vmul.f32 %v4372, %v4748
        %v4789 = vmul.f32 %v4373, %v4749
        %v4790 = vmul.f32 %v4374, %v4749
        %v4791 = vmul.f32 %v4375, %v4749
        %v4792 = vmul.f32 %v4376, %v4750
        %v4793 = vmul.f32 %v4377, %v4750
        %v4794 = vmul.f32 %v4378, %v4750
        %v4795 = vmul.f32 %v4379, %v4751
        %v4796 = vmul.f32 %v4380, %v4751
        %v4797 = vmul.f32 %v4381, %v4751
        %v4798 = vmul.f32 %v4382, %v4752
        %v4799 = vmul.f32 %v4383, %v4752
        %v4800 = vmul.f32 %v4384, %v4752
        %v4801 = vmul.f32 %v4385, %v4753
        %v4802 = vmul.f32 %v4386, %v4753
        %v4803 = vmul.f32 %v4387, %v4753
        %v4804 = vmul.f32 %v4388, %v4754
        %v4805 = vmul.f32 %v4389, %v4754
        %v4806 = vmul.f32 %v4390, %v4754
        %v4807 = vmul.f32 %v4391, %v4755
        %v4808 = vmul.f32 %v4392, %v4755
        %v4809 = vmul.f32 %v4393, %v4755
        %v4810 = vmul.f32 %v4394, %v4756
        %v4811 = vmul.f32 %v4395, %v4756
        %v4812 = vmul.f32 %v4396, %v4756
        %v4813 = vmul.f32 %v4397, %v4757
        %v4814 = vmul.f32 %v4398, %v4757
        %v4815 = vmul.f32 %v4399, %v4757
        %v4816 = vmul.f32 %v4400, %v4758
        %v4817 = vmul.f32 %v4401, %v4758
        %v4818 = vmul.f32 %v4402, %v4758
        %v4819 = vmul.f32 %v4403, %v4759
        %v4820 = vmul.f32 %v4404, %v4759
        %v4821 = vmul.f32 %v4405, %v4759
        %v4822 = vmul.f32 %v4406, %v4760
        %v4823 = vmul.f32 %v4407, %v4760
        %v4824 = vmul.f32 %v4408, %v4760
        %v4825 = vmul.f32 %v4409, %v4761
        %v4826 = vmul.f32 %v4410, %v4761
        %v4827 = vmul.f32 %v4411, %v4761
        %v4828 = vmul.f32 %v4412, %v4762
        %v4829 = vmul.f32 %v4413, %v4762
        %v4830 = vmul.f32 %v4414, %v4762
        %v4831 = vmul.f32 %v4415, %v4763
        %v4832 = vmul.f32 %v4416, %v4763
        %v4833 = vmul.f32 %v4417, %v4763
        %v4834 = vmul.f32 %v4418, %v4764
        %v4835 = vmul.f32 %v4419, %v4764
        %v4836 = vmul.f32 %v4420, %v4764
        %v4837 = vmul.f32 %v4421, %v4765
        %v4838 = vmul.f32 %v4422, %v4765
        %v4839 = vmul.f32 %v4423, %v4765
        %v4840 = vmul.f32 %v4424, %v4766
        %v4841 = vmul.f32 %v4425, %v4766
        %v4842 = vmul.f32 %v4426, %v4766
        %v4843 = vmul.f32 %v4427, %v4767
        %v4844 = vmul.f32 %v4428, %v4767
        %v4845 = vmul.f32 %v4429, %v4767
        %v4846 = vmul.f32 %v4430, %v4768
        %v4847 = vmul.f32 %v4431, %v4768
        %v4848 = vmul.f32 %v4432, %v4768
        %v4849 = vmul.f32 %v4433, %v4769
        %v4850 = vmul.f32 %v4434, %v4769
        %v4851 = vmul.f32 %v4435, %v4769
        %v4852 = vmul.f32 %v4436, %v4770
        %v4853 = vmul.f32 %v4437, %v4770
        %v4854 = vmul.f32 %v4438, %v4770
        %v4855 = vmul.f32 %v4439, %v4771
        %v4856 = vmul.f32 %v4440, %v4771
        %v4857 = vmul.f32 %v4441, %v4771
        %v4858 = vmul.f32 %v4442, %v4772
        %v4859 = vmul.f32 %v4443, %v4772
        %v4860 = vmul.f32 %v4444, %v4772
        %v4861 = vmul.f32 %v4445, %v4773
        %v4862 = vmul.f32 %v4446, %v4773
        %v4863 = vmul.f32 %v4447, %v4773
        %v4864 = vmul.f32 %v4448, %v4774
        %v4865 = vmul.f32 %v4449, %v4774
        %v4866 = vmul.f32 %v4450, %v4774
        %v4867 = vmul.f32 %v4451, %v4775
        %v4868 = vmul.f32 %v4452, %v4775
        %v4869 = vmul.f32 %v4453, %v4775
        %v4870 = vmul.f32 %v4454, %v4776
        %v4871 = vmul.f32 %v4455, %v4776
        %v4872 = vmul.f32 %v4456, %v4776
        %v4873 = vld [vmem:[#allocation3] sm:$0x7]
        %v4874 = vld [vmem:[#allocation3 + $0x3] sm:$0x7]
        %v4875 = vadd.f32 %v4874, 1.0
        %v4877 = vlaneseq
        %v4878 = vshrl.u32 %v4877, 7
        %v4879 = vsub.s32 0, %v4878
        %v4880 = vrot.slane %v4875, %v4879
        %v4881 = vlaneseq
        %v4882 = vshrl.u32 %v4881, 7
        %v4883 = vsub.s32 1, %v4882
        %v4884 = vrot.slane %v4875, %v4883
        %v4885 = vlaneseq
        %v4886 = vshrl.u32 %v4885, 7
        %v4887 = vsub.s32 2, %v4886
        %v4888 = vrot.slane %v4875, %v4887
        %v4892 = vmul.f32 %v4777, %v4880
        %v4893 = vmul.f32 %v4778, %v4884
        %v4894 = vmul.f32 %v4779, %v4888
        %v4895 = vmul.f32 %v4780, %v4880
        %v4896 = vmul.f32 %v4781, %v4884
        %v4897 = vmul.f32 %v4782, %v4888
        %v4898 = vmul.f32 %v4783, %v4880
        %v4899 = vmul.f32 %v4784, %v4884
        %v4900 = vmul.f32 %v4785, %v4888
        %v4901 = vmul.f32 %v4786, %v4880
        %v4902 = vmul.f32 %v4787, %v4884
        %v4903 = vmul.f32 %v4788, %v4888
        %v4904 = vmul.f32 %v4789, %v4880
        %v4905 = vmul.f32 %v4790, %v4884
        %v4906 = vmul.f32 %v4791, %v4888
        %v4907 = vmul.f32 %v4792, %v4880
        %v4908 = vmul.f32 %v4793, %v4884
        %v4909 = vmul.f32 %v4794, %v4888
        %v4910 = vmul.f32 %v4795, %v4880
        %v4911 = vmul.f32 %v4796, %v4884
        %v4912 = vmul.f32 %v4797, %v4888
        %v4913 = vmul.f32 %v4798, %v4880
        %v4914 = vmul.f32 %v4799, %v4884
        %v4915 = vmul.f32 %v4800, %v4888
        %v4916 = vmul.f32 %v4801, %v4880
        %v4917 = vmul.f32 %v4802, %v4884
        %v4918 = vmul.f32 %v4803, %v4888
        %v4919 = vmul.f32 %v4804, %v4880
        %v4920 = vmul.f32 %v4805, %v4884
        %v4921 = vmul.f32 %v4806, %v4888
        %v4922 = vmul.f32 %v4807, %v4880
        %v4923 = vmul.f32 %v4808, %v4884
        %v4924 = vmul.f32 %v4809, %v4888
        %v4925 = vmul.f32 %v4810, %v4880
        %v4926 = vmul.f32 %v4811, %v4884
        %v4927 = vmul.f32 %v4812, %v4888
        %v4928 = vmul.f32 %v4813, %v4880
        %v4929 = vmul.f32 %v4814, %v4884
        %v4930 = vmul.f32 %v4815, %v4888
        %v4931 = vmul.f32 %v4816, %v4880
        %v4932 = vmul.f32 %v4817, %v4884
        %v4933 = vmul.f32 %v4818, %v4888
        %v4934 = vmul.f32 %v4819, %v4880
        %v4935 = vmul.f32 %v4820, %v4884
        %v4936 = vmul.f32 %v4821, %v4888
        %v4937 = vmul.f32 %v4822, %v4880
        %v4938 = vmul.f32 %v4823, %v4884
        %v4939 = vmul.f32 %v4824, %v4888
        %v4940 = vmul.f32 %v4825, %v4880
        %v4941 = vmul.f32 %v4826, %v4884
        %v4942 = vmul.f32 %v4827, %v4888
        %v4943 = vmul.f32 %v4828, %v4880
        %v4944 = vmul.f32 %v4829, %v4884
        %v4945 = vmul.f32 %v4830, %v4888
        %v4946 = vmul.f32 %v4831, %v4880
        %v4947 = vmul.f32 %v4832, %v4884
        %v4948 = vmul.f32 %v4833, %v4888
        %v4949 = vmul.f32 %v4834, %v4880
        %v4950 = vmul.f32 %v4835, %v4884
        %v4951 = vmul.f32 %v4836, %v4888
        %v4952 = vmul.f32 %v4837, %v4880
        %v4953 = vmul.f32 %v4838, %v4884
        %v4954 = vmul.f32 %v4839, %v4888
        %v4955 = vmul.f32 %v4840, %v4880
        %v4956 = vmul.f32 %v4841, %v4884
        %v4957 = vmul.f32 %v4842, %v4888
        %v4958 = vmul.f32 %v4843, %v4880
        %v4959 = vmul.f32 %v4844, %v4884
        %v4960 = vmul.f32 %v4845, %v4888
        %v4961 = vmul.f32 %v4846, %v4880
        %v4962 = vmul.f32 %v4847, %v4884
        %v4963 = vmul.f32 %v4848, %v4888
        %v4964 = vmul.f32 %v4849, %v4880
        %v4965 = vmul.f32 %v4850, %v4884
        %v4966 = vmul.f32 %v4851, %v4888
        %v4967 = vmul.f32 %v4852, %v4880
        %v4968 = vmul.f32 %v4853, %v4884
        %v4969 = vmul.f32 %v4854, %v4888
        %v4970 = vmul.f32 %v4855, %v4880
        %v4971 = vmul.f32 %v4856, %v4884
        %v4972 = vmul.f32 %v4857, %v4888
        %v4973 = vmul.f32 %v4858, %v4880
        %v4974 = vmul.f32 %v4859, %v4884
        %v4975 = vmul.f32 %v4860, %v4888
        %v4976 = vmul.f32 %v4861, %v4880
        %v4977 = vmul.f32 %v4862, %v4884
        %v4978 = vmul.f32 %v4863, %v4888
        %v4979 = vmul.f32 %v4864, %v4880
        %v4980 = vmul.f32 %v4865, %v4884
        %v4981 = vmul.f32 %v4866, %v4888
        %v4982 = vmul.f32 %v4867, %v4880
        %v4983 = vmul.f32 %v4868, %v4884
        %v4984 = vmul.f32 %v4869, %v4888
        %v4985 = vmul.f32 %v4870, %v4880
        %v4986 = vmul.f32 %v4871, %v4884
        %v4987 = vmul.f32 %v4872, %v4888
        %v4989 = vlaneseq
        %v4990 = vshrl.u32 %v4989, 7
        %v4991 = vsub.s32 0, %v4990
        %v4992 = vrot.slane %v4873, %v4991
        %v4993 = vlaneseq
        %v4994 = vshrl.u32 %v4993, 7
        %v4995 = vsub.s32 1, %v4994
        %v4996 = vrot.slane %v4873, %v4995
        %v4997 = vlaneseq
        %v4998 = vshrl.u32 %v4997, 7
        %v4999 = vsub.s32 2, %v4998
        %v5000 = vrot.slane %v4873, %v4999
        %v5004 = vadd.f32 %v4892, %v4992
        %v5005 = vadd.f32 %v4893, %v4996
        %v5006 = vadd.f32 %v4894, %v5000
        %v5007 = vadd.f32 %v4895, %v4992
        %v5008 = vadd.f32 %v4896, %v4996
        %v5009 = vadd.f32 %v4897, %v5000
        %v5010 = vadd.f32 %v4898, %v4992
        %v5011 = vadd.f32 %v4899, %v4996
        %v5012 = vadd.f32 %v4900, %v5000
        %v5013 = vadd.f32 %v4901, %v4992
        %v5014 = vadd.f32 %v4902, %v4996
        %v5015 = vadd.f32 %v4903, %v5000
        %v5016 = vadd.f32 %v4904, %v4992
        %v5017 = vadd.f32 %v4905, %v4996
        %v5018 = vadd.f32 %v4906, %v5000
        %v5019 = vadd.f32 %v4907, %v4992
        %v5020 = vadd.f32 %v4908, %v4996
        %v5021 = vadd.f32 %v4909, %v5000
        %v5022 = vadd.f32 %v4910, %v4992
        %v5023 = vadd.f32 %v4911, %v4996
        %v5024 = vadd.f32 %v4912, %v5000
        %v5025 = vadd.f32 %v4913, %v4992
        %v5026 = vadd.f32 %v4914, %v4996
        %v5027 = vadd.f32 %v4915, %v5000
        %v5028 = vadd.f32 %v4916, %v4992
        %v5029 = vadd.f32 %v4917, %v4996
        %v5030 = vadd.f32 %v4918, %v5000
        %v5031 = vadd.f32 %v4919, %v4992
        %v5032 = vadd.f32 %v4920, %v4996
        %v5033 = vadd.f32 %v4921, %v5000
        %v5034 = vadd.f32 %v4922, %v4992
        %v5035 = vadd.f32 %v4923, %v4996
        %v5036 = vadd.f32 %v4924, %v5000
        %v5037 = vadd.f32 %v4925, %v4992
        %v5038 = vadd.f32 %v4926, %v4996
        %v5039 = vadd.f32 %v4927, %v5000
        %v5040 = vadd.f32 %v4928, %v4992
        %v5041 = vadd.f32 %v4929, %v4996
        %v5042 = vadd.f32 %v4930, %v5000
        %v5043 = vadd.f32 %v4931, %v4992
        %v5044 = vadd.f32 %v4932, %v4996
        %v5045 = vadd.f32 %v4933, %v5000
        %v5046 = vadd.f32 %v4934, %v4992
        %v5047 = vadd.f32 %v4935, %v4996
        %v5048 = vadd.f32 %v4936, %v5000
        %v5049 = vadd.f32 %v4937, %v4992
        %v5050 = vadd.f32 %v4938, %v4996
        %v5051 = vadd.f32 %v4939, %v5000
        %v5052 = vadd.f32 %v4940, %v4992
        %v5053 = vadd.f32 %v4941, %v4996
        %v5054 = vadd.f32 %v4942, %v5000
        %v5055 = vadd.f32 %v4943, %v4992
        %v5056 = vadd.f32 %v4944, %v4996
        %v5057 = vadd.f32 %v4945, %v5000
        %v5058 = vadd.f32 %v4946, %v4992
        %v5059 = vadd.f32 %v4947, %v4996
        %v5060 = vadd.f32 %v4948, %v5000
        %v5061 = vadd.f32 %v4949, %v4992
        %v5062 = vadd.f32 %v4950, %v4996
        %v5063 = vadd.f32 %v4951, %v5000
        %v5064 = vadd.f32 %v4952, %v4992
        %v5065 = vadd.f32 %v4953, %v4996
        %v5066 = vadd.f32 %v4954, %v5000
        %v5067 = vadd.f32 %v4955, %v4992
        %v5068 = vadd.f32 %v4956, %v4996
        %v5069 = vadd.f32 %v4957, %v5000
        %v5070 = vadd.f32 %v4958, %v4992
        %v5071 = vadd.f32 %v4959, %v4996
        %v5072 = vadd.f32 %v4960, %v5000
        %v5073 = vadd.f32 %v4961, %v4992
        %v5074 = vadd.f32 %v4962, %v4996
        %v5075 = vadd.f32 %v4963, %v5000
        %v5076 = vadd.f32 %v4964, %v4992
        %v5077 = vadd.f32 %v4965, %v4996
        %v5078 = vadd.f32 %v4966, %v5000
        %v5079 = vadd.f32 %v4967, %v4992
        %v5080 = vadd.f32 %v4968, %v4996
        %v5081 = vadd.f32 %v4969, %v5000
        %v5082 = vadd.f32 %v4970, %v4992
        %v5083 = vadd.f32 %v4971, %v4996
        %v5084 = vadd.f32 %v4972, %v5000
        %v5085 = vadd.f32 %v4973, %v4992
        %v5086 = vadd.f32 %v4974, %v4996
        %v5087 = vadd.f32 %v4975, %v5000
        %v5088 = vadd.f32 %v4976, %v4992
        %v5089 = vadd.f32 %v4977, %v4996
        %v5090 = vadd.f32 %v4978, %v5000
        %v5091 = vadd.f32 %v4979, %v4992
        %v5092 = vadd.f32 %v4980, %v4996
        %v5093 = vadd.f32 %v4981, %v5000
        %v5094 = vadd.f32 %v4982, %v4992
        %v5095 = vadd.f32 %v4983, %v4996
        %v5096 = vadd.f32 %v4984, %v5000
        %v5097 = vadd.f32 %v4985, %v4992
        %v5098 = vadd.f32 %v4986, %v4996
        %v5099 = vadd.f32 %v4987, %v5000
        %5100 = vst [vmem:[%s572] sm:$0xff] %v5004
        %5101 = vst [vmem:[%s572 + $0x8] sm:$0xff] %v5005
        %5102 = vst [vmem:[%s572 + $0x10] sm:$0xff] %v5006
        %5103 = vst [vmem:[%s572 + $0x18] sm:$0xff] %v5007
        %5104 = vst [vmem:[%s572 + $0x20] sm:$0xff] %v5008
        %5105 = vst [vmem:[%s572 + $0x28] sm:$0xff] %v5009
        %5106 = vst [vmem:[%s572 + $0x30] sm:$0xff] %v5010
        %5107 = vst [vmem:[%s572 + $0x38] sm:$0xff] %v5011
        %5108 = vst [vmem:[%s572 + $0x40] sm:$0xff] %v5012
        %5109 = vst [vmem:[%s572 + $0x48] sm:$0xff] %v5013
        %5110 = vst [vmem:[%s572 + $0x50] sm:$0xff] %v5014
        %5111 = vst [vmem:[%s572 + $0x58] sm:$0xff] %v5015
        %5112 = vst [vmem:[%s572 + $0x60] sm:$0xff] %v5016
        %5113 = vst [vmem:[%s572 + $0x68] sm:$0xff] %v5017
        %5114 = vst [vmem:[%s572 + $0x70] sm:$0xff] %v5018
        %5115 = vst [vmem:[%s572 + $0x78] sm:$0xff] %v5019
        %5116 = vst [vmem:[%s572 + $0x80] sm:$0xff] %v5020
        %5117 = vst [vmem:[%s572 + $0x88] sm:$0xff] %v5021
        %5118 = vst [vmem:[%s572 + $0x90] sm:$0xff] %v5022
        %5119 = vst [vmem:[%s572 + $0x98] sm:$0xff] %v5023
        %5120 = vst [vmem:[%s572 + $0xa0] sm:$0xff] %v5024
        %5121 = vst [vmem:[%s572 + $0xa8] sm:$0xff] %v5025
        %5122 = vst [vmem:[%s572 + $0xb0] sm:$0xff] %v5026
        %5123 = vst [vmem:[%s572 + $0xb8] sm:$0xff] %v5027
        %5124 = vst [vmem:[%s572 + $0xc0] sm:$0xff] %v5028
        %5125 = vst [vmem:[%s572 + $0xc8] sm:$0xff] %v5029
        %5126 = vst [vmem:[%s572 + $0xd0] sm:$0xff] %v5030
        %5127 = vst [vmem:[%s572 + $0xd8] sm:$0xff] %v5031
        %5128 = vst [vmem:[%s572 + $0xe0] sm:$0xff] %v5032
        %5129 = vst [vmem:[%s572 + $0xe8] sm:$0xff] %v5033
        %5130 = vst [vmem:[%s572 + $0xf0] sm:$0xff] %v5034
        %5131 = vst [vmem:[%s572 + $0xf8] sm:$0xff] %v5035
        %5132 = vst [vmem:[%s572 + $0x100] sm:$0xff] %v5036
        %5133 = vst [vmem:[%s572 + $0x108] sm:$0xff] %v5037
        %5134 = vst [vmem:[%s572 + $0x110] sm:$0xff] %v5038
        %5135 = vst [vmem:[%s572 + $0x118] sm:$0xff] %v5039
        %5136 = vst [vmem:[%s572 + $0x120] sm:$0xff] %v5040
        %5137 = vst [vmem:[%s572 + $0x128] sm:$0xff] %v5041
        %5138 = vst [vmem:[%s572 + $0x130] sm:$0xff] %v5042
        %5139 = vst [vmem:[%s572 + $0x138] sm:$0xff] %v5043
        %5140 = vst [vmem:[%s572 + $0x140] sm:$0xff] %v5044
        %5141 = vst [vmem:[%s572 + $0x148] sm:$0xff] %v5045
        %5142 = vst [vmem:[%s572 + $0x150] sm:$0xff] %v5046
        %5143 = vst [vmem:[%s572 + $0x158] sm:$0xff] %v5047
        %5144 = vst [vmem:[%s572 + $0x160] sm:$0xff] %v5048
        %5145 = vst [vmem:[%s572 + $0x168] sm:$0xff] %v5049
        %5146 = vst [vmem:[%s572 + $0x170] sm:$0xff] %v5050
        %5147 = vst [vmem:[%s572 + $0x178] sm:$0xff] %v5051
        %5148 = vst [vmem:[%s572 + $0x180] sm:$0xff] %v5052
        %5149 = vst [vmem:[%s572 + $0x188] sm:$0xff] %v5053
        %5150 = vst [vmem:[%s572 + $0x190] sm:$0xff] %v5054
        %5151 = vst [vmem:[%s572 + $0x198] sm:$0xff] %v5055
        %5152 = vst [vmem:[%s572 + $0x1a0] sm:$0xff] %v5056
        %5153 = vst [vmem:[%s572 + $0x1a8] sm:$0xff] %v5057
        %5154 = vst [vmem:[%s572 + $0x1b0] sm:$0xff] %v5058
        %5155 = vst [vmem:[%s572 + $0x1b8] sm:$0xff] %v5059
        %5156 = vst [vmem:[%s572 + $0x1c0] sm:$0xff] %v5060
        %5157 = vst [vmem:[%s572 + $0x1c8] sm:$0xff] %v5061
        %5158 = vst [vmem:[%s572 + $0x1d0] sm:$0xff] %v5062
        %5159 = vst [vmem:[%s572 + $0x1d8] sm:$0xff] %v5063
        %5160 = vst [vmem:[%s572 + $0x1e0] sm:$0xff] %v5064
        %5161 = vst [vmem:[%s572 + $0x1e8] sm:$0xff] %v5065
        %5162 = vst [vmem:[%s572 + $0x1f0] sm:$0xff] %v5066
        %5163 = vst [vmem:[%s572 + $0x1f8] sm:$0xff] %v5067
        %5164 = vst [vmem:[%s572 + $0x200] sm:$0xff] %v5068
        %5165 = vst [vmem:[%s572 + $0x208] sm:$0xff] %v5069
        %5166 = vst [vmem:[%s572 + $0x210] sm:$0xff] %v5070
        %5167 = vst [vmem:[%s572 + $0x218] sm:$0xff] %v5071
        %5168 = vst [vmem:[%s572 + $0x220] sm:$0xff] %v5072
        %5169 = vst [vmem:[%s572 + $0x228] sm:$0xff] %v5073
        %5170 = vst [vmem:[%s572 + $0x230] sm:$0xff] %v5074
        %5171 = vst [vmem:[%s572 + $0x238] sm:$0xff] %v5075
        %5172 = vst [vmem:[%s572 + $0x240] sm:$0xff] %v5076
        %5173 = vst [vmem:[%s572 + $0x248] sm:$0xff] %v5077
        %5174 = vst [vmem:[%s572 + $0x250] sm:$0xff] %v5078
        %5175 = vst [vmem:[%s572 + $0x258] sm:$0xff] %v5079
        %5176 = vst [vmem:[%s572 + $0x260] sm:$0xff] %v5080
        %5177 = vst [vmem:[%s572 + $0x268] sm:$0xff] %v5081
        %5178 = vst [vmem:[%s572 + $0x270] sm:$0xff] %v5082
        %5179 = vst [vmem:[%s572 + $0x278] sm:$0xff] %v5083
        %5180 = vst [vmem:[%s572 + $0x280] sm:$0xff] %v5084
        %5181 = vst [vmem:[%s572 + $0x288] sm:$0xff] %v5085
        %5182 = vst [vmem:[%s572 + $0x290] sm:$0xff] %v5086
        %5183 = vst [vmem:[%s572 + $0x298] sm:$0xff] %v5087
        %5184 = vst [vmem:[%s572 + $0x2a0] sm:$0xff] %v5088
        %5185 = vst [vmem:[%s572 + $0x2a8] sm:$0xff] %v5089
        %5186 = vst [vmem:[%s572 + $0x2b0] sm:$0xff] %v5090
        %5187 = vst [vmem:[%s572 + $0x2b8] sm:$0xff] %v5091
        %5188 = vst [vmem:[%s572 + $0x2c0] sm:$0xff] %v5092
        %5189 = vst [vmem:[%s572 + $0x2c8] sm:$0xff] %v5093
        %5190 = vst [vmem:[%s572 + $0x2d0] sm:$0xff] %v5094
        %5191 = vst [vmem:[%s572 + $0x2d8] sm:$0xff] %v5095
        %5192 = vst [vmem:[%s572 + $0x2e0] sm:$0xff] %v5096
        %5193 = vst [vmem:[%s572 + $0x2e8] sm:$0xff] %v5097
        %5194 = vst [vmem:[%s572 + $0x2f0] sm:$0xff] %v5098
        %5195 = vst [vmem:[%s572 + $0x2f8] sm:$0xff] %v5099
        %s5196 = sand.u32 %s275, 1
        %s5197 = scalar_lea.sflag [#allocation6], %s5196
        %s5198 = sand.u32 %s275, 1
        %s5199 = smul.addr %s5198, 768
        %s5200 = scalar_lea.vmem [#allocation21], %s5199
        %s5201 = sand.u32 %s36, 1
        %s5202 = scalar_lea.sflag [#allocation23], %s5201
        %s5203 = sand.u32 %s301, 1
        %s5204 = smul.addr %s5203, 3
        %s5205 = scalar_lea.vmem [#allocation22], %s5204
        %s5206 = sand.u32 %s36, 1
        %s5207 = scalar_lea.sflag [#allocation23], %s5206
        %s5208 = sand.u32 %s327, 1
        %s5209 = smul.addr %s5208, 18
        %s5210 = scalar_lea.vmem [#allocation24], %s5209
        // Predicated region
        $region105: #{tpu_custom_call.1} parent=59 // pred_check
          %p5211 = pneg %p285
        $region106: #{tpu_custom_call.1} parent=59 // pred_check_branch
          %5213 = sbr.rel (%p5211) target = $region108
        $region107: #{tpu_custom_call.1} parent=59 // pred_region
          %s5214 = smul.u32 32, %s41
          %s5216 = ssub.s32 12288, 12288
          %5217 = vsyncadd %s5197, %s5216
          %s5218 = smul.addr %s5214, 3
          %s5219 = smul.addr %s40, 192
          %s5220 = sadd.s32 %s5218, %s5219
          %s5221 = smul.addr %s5220, 128
          %s5222 = scalar_lea.hbm %s10, %s5221
          %s5223 = sshll.u32 %s5200, 4
          %s5224 = int_to_ptr.vmem [resolvable:$true] %s5223
          %5229 = dma.vmem_to_hbm [thread:$0]  %s5224, 12288, %s5222, %s5197, 384, 384, 24
        $region108: #{tpu_custom_call.1} parent=59 // pred_fallthru
          _
        // Predicated region
        $region109: #{tpu_custom_call.1} parent=59 // pred_check
          %p5230 = pneg %p311
        $region110: #{tpu_custom_call.1} parent=59 // pred_check_branch
          %5232 = sbr.rel (%p5230) target = $region112
        $region111: #{tpu_custom_call.1} parent=59 // pred_region
          %s5234 = ssub.s32 48, 48
          %5235 = vsyncadd %s5202, %s5234
          %s5236 = smul.addr %s40, 3
          %s5237 = smul.addr %s5236, 16
          %s5238 = scalar_lea.hbm %s11, %s5237
          %s5240 = sshll.u32 %s5205, 4
          %s5241 = int_to_ptr.vmem [resolvable:$true] %s5240
          %5243 = dma.vmem_to_hbm [thread:$0]  %s5241, 48, %s5238, %s5202
        $region112: #{tpu_custom_call.1} parent=59 // pred_fallthru
          _
        // Predicated region
        $region113: #{tpu_custom_call.1} parent=59 // pred_check
          %p5244 = pneg %p337
        $region114: #{tpu_custom_call.1} parent=59 // pred_check_branch
          %5246 = sbr.rel (%p5244) target = $region116
        $region115: #{tpu_custom_call.1} parent=59 // pred_region
          %s5248 = ssub.s32 288, 288
          %5249 = vsyncadd %s5207, %s5248
          %s5250 = smul.addr %s40, 18
          %s5251 = smul.addr %s5250, 16
          %s5252 = scalar_lea.hbm %s12, %s5251
          %s5254 = sshll.u32 %s5210, 4
          %s5255 = int_to_ptr.vmem [resolvable:$true] %s5254
          %5257 = dma.vmem_to_hbm [thread:$0]  %s5255, 288, %s5252, %s5207
        $region116: #{tpu_custom_call.1} parent=59 // pred_fallthru
          _
      $region60: #{tpu_custom_call.1} parent=5 // pred_fallthru
        _
      %p5258 = scmp.le.s32.totalorder 2, %s31
      // Predicated region
      $region117: #{tpu_custom_call.1} parent=5 // pred_check
        %p5259 = pneg %p5258
      $region118: #{tpu_custom_call.1} parent=5 // pred_check_branch
        %5261 = sbr.rel (%p5259) target = $region120
      $region119: #{tpu_custom_call.1} parent=5 // pred_region
        %s5262 = ssub.s32 %s31, 2
        // Predicated region
        $region121: #{tpu_custom_call.1} parent=119 // pred_check
          %p5263 = pneg %p291
        $region122: #{tpu_custom_call.1} parent=119 // pred_check_branch
          %5265 = sbr.rel (%p5263) target = $region124
        $region123: #{tpu_custom_call.1} parent=119 // pred_region
          %s5266 = sand.u32 %s276, 1
          %s5267 = scalar_lea.sflag [#allocation6], %s5266
          %s5268 = sand.u32 %s276, 1
          %s5269 = smul.addr %s5268, 768
          %s5270 = scalar_lea.vmem [#allocation21], %s5269
          %5271 = dma.done %s5267, 12288
        $region124: #{tpu_custom_call.1} parent=119 // pred_fallthru
          _
        // Predicated region
        $region125: #{tpu_custom_call.1} parent=119 // pred_check
          %p5272 = pneg %p317
        $region126: #{tpu_custom_call.1} parent=119 // pred_check_branch
          %5274 = sbr.rel (%p5272) target = $region128
        $region127: #{tpu_custom_call.1} parent=119 // pred_region
          %s5275 = sand.u32 %s37, 1
          %s5276 = scalar_lea.sflag [#allocation23], %s5275
          %s5277 = sand.u32 %s302, 1
          %s5278 = smul.addr %s5277, 3
          %s5279 = scalar_lea.vmem [#allocation22], %s5278
          %5280 = dma.done %s5276, 48
        $region128: #{tpu_custom_call.1} parent=119 // pred_fallthru
          _
        // Predicated region
        $region129: #{tpu_custom_call.1} parent=119 // pred_check
          %p5281 = pneg %p343
        $region130: #{tpu_custom_call.1} parent=119 // pred_check_branch
          %5283 = sbr.rel (%p5281) target = $region132
        $region131: #{tpu_custom_call.1} parent=119 // pred_region
          %s5284 = sand.u32 %s37, 1
          %s5285 = scalar_lea.sflag [#allocation23], %s5284
          %s5286 = sand.u32 %s328, 1
          %s5287 = smul.addr %s5286, 18
          %s5288 = scalar_lea.vmem [#allocation24], %s5287
          %5289 = dma.done %s5285, 288
        $region132: #{tpu_custom_call.1} parent=119 // pred_fallthru
          _
      $region120: #{tpu_custom_call.1} parent=5 // pred_fallthru
        _
    $region6: #{tpu_custom_call.1} parent=1 // loop_footer
      %s35 = sadd.s32 1, %s31
    $region7: #{tpu_custom_call.1} parent=1 // loop_footer_branch
      %30 = sbr.rel target = $region3
    $region8: #{tpu_custom_call.1} parent=1 // loop_exit
      _
    %5290 = vsyncpa [#allocation5], 1
    %s5291 = scalar_lea.sflag [#allocation5], 1
    %5292 = vsyncpa %s5291, 1
    %5293 = vsyncpa [#allocation10], 1
    %5294 = vsyncpa [#allocation13], 1
    %5295 = vsyncpa [#allocation16], 1
    %5296 = vsyncpa [#allocation19], 1
    %5297 = vsyncpa [#allocation6], 1
    %s5298 = scalar_lea.sflag [#allocation6], 1
    %5299 = vsyncpa %s5298, 1
    %5300 = vsyncpa [#allocation23], 1
    %s5301 = scalar_lea.sflag [#allocation23], 1
    %5302 = vsyncpa %s5301, 1
    %5303 = vsyncpa [#allocation7], 1
    %s5304 = scalar_lea.sflag [#allocation7], 1
    %5305 = vsyncpa %s5304, 1

</llo_original>
